<compile_context>
chip_gen: v7x
topology: tpu7x:2x2x1
jax: 0.10.0
libtpu: 0.0.40
codegen_flags: <defaults>
</compile_context>

<pallas_src>
import functools

import jax
import jax.numpy as jnp
from jax.experimental import pallas as pl
from jax.experimental.pallas import tpu as pltpu


def _residual_attention_kernel(xq_ref, xkv_ref, wq_ref, wkv_ref, wout_ref,
                               bout_ref, o_ref, q_sc, m_sc, l_sc, acc_sc, *,
                               heads, dim_head):
    hidden = heads * dim_head
    ki = pl.program_id(2)

    # ---- init per (batch, q-tile): project q once, reset online-softmax state ----
    @pl.when(ki == 0)
    def _():
        xq = xq_ref[0]                                               # (C, tq)
        q = jnp.dot(wq_ref[...], xq,
                    preferred_element_type=jnp.float32)              # (hidden, tq), scale pre-folded
        # bf16 scratch: cast once here instead of every kv step.
        q_sc[...] = q.reshape(heads, dim_head, q.shape[-1]).astype(q_sc.dtype)
        m_sc[...] = jnp.full(m_sc.shape, -jnp.inf, m_sc.dtype)
        l_sc[...] = jnp.zeros(l_sc.shape, l_sc.dtype)
        acc_sc[...] = jnp.zeros(acc_sc.shape, acc_sc.dtype)

    # ---- project k and v for this kv tile with one fused (tiny-K, f32) matmul ----
    xkv = xkv_ref[0]                                                 # (C, tk)
    kv = jnp.dot(wkv_ref[...], xkv,
                 preferred_element_type=jnp.float32)                 # (2*hidden, tk)
    tk = kv.shape[-1]
    kv_b = kv.astype(jnp.bfloat16)                                   # MXU-native operands
    k = kv_b[:hidden].reshape(heads, dim_head, tk)                   # (h, d, tk) bf16
    v = kv_b[hidden:].reshape(heads, dim_head, tk)                   # (h, d, tk) bf16

    q = q_sc[...]                                                    # (h, d, tq) bf16
    # scores: contract over d, batch over heads -> (h, tk, tq); queries stay lane-dense
    s = jax.lax.dot_general(k, q, (((1,), (1,)), ((0,), (0,))),
                            preferred_element_type=jnp.float32)

    # ---- online softmax update (m/l state kept in f32) ----
    m_prev = m_sc[...]                                               # (h, 1, tq)
    m_new = jnp.maximum(m_prev, jnp.max(s, axis=1, keepdims=True))
    alpha = jnp.exp(m_prev - m_new)
    p = jnp.exp(s - m_new)                                           # (h, tk, tq) f32
    l_sc[...] = alpha * l_sc[...] + jnp.sum(p, axis=1, keepdims=True)
    # p @ v: contract over tk, batch over heads -> (h, d, tq); bf16 operands, f32 acc
    pv = jax.lax.dot_general(v, p.astype(jnp.bfloat16),
                             (((2,), (1,)), ((0,), (0,))),
                             preferred_element_type=jnp.float32)
    acc_sc[...] = alpha * acc_sc[...] + pv
    m_sc[...] = m_new

    # ---- finalize: exact normalize, output projection, bias, fused residual add ----
    @pl.when(ki == pl.num_programs(2) - 1)
    def _():
        inv_l = 1.0 / l_sc[...]                                      # exact: once per q tile
        out = (acc_sc[...] * inv_l).reshape(hidden, acc_sc.shape[-1])   # (hidden, tq) f32
        o = jnp.dot(wout_ref[...], out,
                    preferred_element_type=jnp.float32)              # (C, tq)
        o = o + bout_ref[...] + xq_ref[0]                            # bias + residual: fn(x) + x
        o_ref[0] = o.astype(o_ref.dtype)


def _pick_tile(n, target):
    if n <= target:
        return n                     # small-N fast path: full extent, single step
    for t in (target, 512, 256, 128):
        if t <= n and t % 128 == 0 and n % t == 0:
            return t
    # TODO(synk): pad N to a multiple of 128 instead of refusing awkward sizes.
    raise ValueError(f"N={n} must be <= {target} or divisible by a 128-multiple tile")


def _vmem_capacity_bytes():
    try:
        cap = getattr(pltpu.get_tpu_info(), "vmem_capacity_bytes", None)
        if cap:
            return int(cap)
    except Exception:
        pass
    return 64 * 1024 * 1024          # conservative fallback (v7x per-core VMEM)


def residual_attention_forward(x, w_qkv, w_out, b_out, *, heads, dim_head,
                               block_q=512, block_k=512):
    """x: (B, C, H, W) NCHW; conv weights in PyTorch (out, in, 1, 1) layout."""
    b, c, h, w = x.shape
    n = h * w
    hidden = heads * dim_head
    scale = dim_head ** (-0.5)

    # Generation-aware tile clamp: on 64 MiB/TC parts (v7x) never exceed 512.
    vmem_cap = _vmem_capacity_bytes()
    if vmem_cap <= 64 * 1024 * 1024:
        block_q = min(block_q, 512)
        block_k = min(block_k, 512)

    tq = _pick_tile(n, block_q)
    tk = _pick_tile(n, block_k)
    assert n % tq == 0 and n % tk == 0
    assert tq == n or tq % 128 == 0
    assert tk == n or tk % 128 == 0

    # NCHW -> (B, C, N): pure reshape (spatial positions land on the lane axis).
    x_flat = x.reshape(b, c, n)
    wqkv_m = w_qkv.reshape(3 * hidden, c).astype(jnp.float32)
    wq_m = wqkv_m[:hidden] * scale                  # fold softmax scale into q projection
    wkv_m = wqkv_m[hidden:]                         # (2*hidden, C): k rows then v rows
    wout_m = w_out.reshape(c, hidden).astype(jnp.float32)
    bout_m = b_out.reshape(c, 1).astype(jnp.float32)

    kernel = functools.partial(_residual_attention_kernel,
                               heads=heads, dim_head=dim_head)
    grid = (b, n // tq, n // tk)

    # Cost estimate (whole call): qkv proj + scores + attn@v + out proj; exp count.
    # bytes_accessed includes the (N/tq)-fold re-read of the kv tiles.
    flops = (2 * b * n * c * 3 * hidden
             + 4 * b * heads * n * n * dim_head
             + 2 * b * n * hidden * c)
    transcendentals = b * heads * n * n
    bytes_accessed = 4 * (b * c * n                       # q-side x reads
                          + b * c * n * (n // tq)         # kv-side x re-reads
                          + b * c * n                     # output writes
                          + 3 * hidden * c + hidden * c + c)
    cost = pl.CostEstimate(flops=int(flops),
                           transcendentals=int(transcendentals),
                           bytes_accessed=int(bytes_accessed))

    # Scoped-VMEM budget from the actual tile footprint (+ headroom), capped at
    # ~70% of this generation's per-core VMEM (128 MiB v5e/v6e, 64 MiB v7x).
    f32b, bf16b = 4, 2
    tile_bytes = (
        2 * f32b * c * (tq + tk)                              # double-buffered x_q / x_kv blocks
        + 2 * f32b * c * tq                                   # double-buffered output block
        + 2 * f32b * (3 * hidden * c + hidden * c + c)        # weights + bias
        + bf16b * hidden * tq + f32b * hidden * tq            # q_sc (bf16) + acc_sc (f32)
        + 4 * f32b * heads * tq                               # m / l scratch
        + (f32b + bf16b) * 2 * hidden * tk                    # kv projection temp (+ bf16 cast)
        + (2 * f32b + bf16b) * heads * tq * tk                # s, p(f32), p(bf16) temporaries
    )
    vmem_limit = int(min(max(2 * tile_bytes, 16 * 1024 * 1024),
                         int(0.7 * vmem_cap)))

    out_flat = pl.pallas_call(
        kernel,
        out_shape=jax.ShapeDtypeStruct((b, c, n), x.dtype),
        grid_spec=pltpu.PrefetchScalarGridSpec(
            num_scalar_prefetch=0,
            grid=grid,
            in_specs=[
                pl.BlockSpec((1, c, tq), lambda bi, qi, ki: (bi, 0, qi)),   # x, query tile
                pl.BlockSpec((1, c, tk), lambda bi, qi, ki: (bi, 0, ki)),   # x, kv tile
                pl.BlockSpec((hidden, c), lambda bi, qi, ki: (0, 0)),       # Wq (pre-scaled)
                pl.BlockSpec((2 * hidden, c), lambda bi, qi, ki: (0, 0)),   # Wk|Wv
                pl.BlockSpec((c, hidden), lambda bi, qi, ki: (0, 0)),       # Wout
                pl.BlockSpec((c, 1), lambda bi, qi, ki: (0, 0)),            # bias
            ],
            out_specs=pl.BlockSpec((1, c, tq), lambda bi, qi, ki: (bi, 0, qi)),
            scratch_shapes=[
                pltpu.VMEM((heads, dim_head, tq), jnp.bfloat16),  # q (bf16 MXU operand)
                pltpu.VMEM((heads, 1, tq), jnp.float32),          # m (running max)
                pltpu.VMEM((heads, 1, tq), jnp.float32),          # l (running sum)
                pltpu.VMEM((heads, dim_head, tq), jnp.float32),   # acc
            ]),
        compiler_params=pltpu.CompilerParams(
            dimension_semantics=("parallel", "parallel", "arbitrary"),
            vmem_limit_bytes=vmem_limit),
        cost_estimate=cost,
    )(x_flat, x_flat, wq_m, wkv_m, wout_m, bout_m)

    return out_flat.reshape(b, c, h, w)


def reference_forward(x, w_qkv, w_out, b_out, heads, dim_head):
    """Pure-JAX transcription of Residual(Attention).forward for verification."""
    b, c, h, w = x.shape
    hidden = heads * dim_head
    scale = dim_head ** (-0.5)
    qkv = jnp.einsum('bchw,oc->bohw', x, w_qkv.reshape(3 * hidden, c))
    q, k, v = jnp.split(qkv, 3, axis=1)
    rearr = lambda t: t.reshape(b, heads, dim_head, h * w)   # b (h d) x y -> b h d (xy)
    q, k, v = map(rearr, (q, k, v))
    q = q * scale
    sim = jnp.einsum('bhdi,bhdj->bhij', q, k)
    attn = jax.nn.softmax(sim, axis=-1)
    out = jnp.einsum('bhij,bhdj->bhid', attn, v)
    out = jnp.transpose(out, (0, 1, 3, 2)).reshape(b, hidden, h, w)
    attn_out = (jnp.einsum('bchw,oc->bohw', out, w_out.reshape(c, hidden))
                + b_out.reshape(1, c, 1, 1))
    return attn_out + x    # Residual: fn(x) + x


if __name__ == "__main__":
    dim, heads, dim_head = 4, 4, 32
    b, h, w = 2, 16, 16
    hidden = heads * dim_head

    key = jax.random.PRNGKey(0)
    k1, k2, k3, k4 = jax.random.split(key, 4)
    x = jax.random.normal(k1, (b, dim, h, w), jnp.float32)
    # deterministic synthetic parameters (PyTorch conv layouts: (out, in, 1, 1))
    w_qkv = jax.random.normal(k2, (3 * hidden, dim, 1, 1), jnp.float32) / jnp.sqrt(dim)
    w_out = jax.random.normal(k3, (dim, hidden, 1, 1), jnp.float32) / jnp.sqrt(hidden)
    b_out = jax.random.normal(k4, (dim,), jnp.float32) * 0.01

    ref = reference_forward(x, w_qkv, w_out, b_out, heads, dim_head)

    # Tolerance reflects bf16 MXU operand precision (used explicitly in the kernel and
    # implicitly by the default-precision TPU reference einsums).
    TOL = 3e-2

    # 1) default blocks -> small-N fast path: tq = tk = N = 256, single kv step.
    out = jax.block_until_ready(
        residual_attention_forward(x, w_qkv, w_out, b_out,
                                   heads=heads, dim_head=dim_head))
    assert out.shape == (b, dim, h, w), out.shape
    err1 = float(jnp.max(jnp.abs(out - ref)))
    assert jnp.allclose(out, ref, atol=TOL, rtol=TOL), err1

    # 2) 128-wide blocks -> exercises the multi-step online-softmax path (2x2 tiles).
    out2 = jax.block_until_ready(
        residual_attention_forward(x, w_qkv, w_out, b_out, heads=heads,
                                   dim_head=dim_head, block_q=128, block_k=128))
    err2 = float(jnp.max(jnp.abs(out2 - ref)))
    assert jnp.allclose(out2, ref, atol=TOL, rtol=TOL), err2

    print("KERNEL_OK")
</pallas_src>

<mosaic_0001>
module attributes {stable_mosaic.version = 11 : i64} {
  func.func @_residual_attention_kernel(%arg0: i32, %arg1: i32, %arg2: i32, %arg3: memref<1x4x256xf32, #tpu.memory_space<vmem>>, %arg4: memref<1x4x256xf32, #tpu.memory_space<vmem>>, %arg5: memref<128x4xf32, #tpu.memory_space<vmem>>, %arg6: memref<256x4xf32, #tpu.memory_space<vmem>>, %arg7: memref<4x128xf32, #tpu.memory_space<vmem>>, %arg8: memref<4x1xf32, #tpu.memory_space<vmem>>, %arg9: memref<1x4x256xf32, #tpu.memory_space<vmem>>, %arg10: memref<4x32x256xbf16, #tpu.memory_space<vmem>>, %arg11: memref<4x1x256xf32, #tpu.memory_space<vmem>>, %arg12: memref<4x1x256xf32, #tpu.memory_space<vmem>>, %arg13: memref<4x32x256xf32, #tpu.memory_space<vmem>>) attributes {dimension_semantics = [#tpu.dimension_semantics<parallel>, #tpu.dimension_semantics<parallel>, #tpu.dimension_semantics<arbitrary>], iteration_bounds = array<i64: 2, 1, 1>, scalar_prefetch = 0 : i64, scratch_operands = 4 : i64, tpu.core_type = #tpu.core_type<tc>, window_params = [{transform_indices = @transform_0, window_bounds = array<i64: 1, 4, 256>}, {transform_indices = @transform_1, window_bounds = array<i64: 1, 4, 256>}, {pipeline_mode = #tpu.pipeline_mode<synchronous>, transform_indices = @transform_2, window_bounds = array<i64: 128, 4>}, {pipeline_mode = #tpu.pipeline_mode<synchronous>, transform_indices = @transform_3, window_bounds = array<i64: 256, 4>}, {pipeline_mode = #tpu.pipeline_mode<synchronous>, transform_indices = @transform_4, window_bounds = array<i64: 4, 128>}, {pipeline_mode = #tpu.pipeline_mode<synchronous>, transform_indices = @transform_5, window_bounds = array<i64: 4, 1>}, {transform_indices = @transform_6, window_bounds = array<i64: 1, 4, 256>}]} {
    %c0_i32 = arith.constant 0 : i32
    %0 = arith.cmpi eq, %arg2, %c0_i32 : i32
    %1 = arith.extui %0 : i1 to i32
    %c0_i32_0 = arith.constant 0 : i32
    %2 = arith.cmpi ne, %1, %c0_i32_0 : i32
    scf.if %2 {
      %c0_32 = arith.constant 0 : index
      %c0_33 = arith.constant 0 : index
      %c0_34 = arith.constant 0 : index
      %40 = vector.load %arg3[%c0_32, %c0_33, %c0_34] : memref<1x4x256xf32, #tpu.memory_space<vmem>>, vector<1x4x256xf32>
      %41 = vector.shape_cast %40 : vector<1x4x256xf32> to vector<4x256xf32>
      %c0_35 = arith.constant 0 : index
      %c0_36 = arith.constant 0 : index
      %42 = vector.load %arg5[%c0_35, %c0_36] : memref<128x4xf32, #tpu.memory_space<vmem>>, vector<128x4xf32>
      %cst_37 = arith.constant dense<0.000000e+00> : vector<128x256xf32>
      %43 = tpu.matmul %42, %41, %cst_37 {dimension_numbers = #tpu.dot_dimension_numbers<[1], [0], [0], [1], [0, 0, 1, 1], [], []>} : vector<128x4xf32>, vector<4x256xf32>, vector<128x256xf32> -> vector<128x256xf32>
      %44 = vector.shape_cast %43 : vector<128x256xf32> to vector<4x32x256xf32>
      %45 = arith.truncf %44 : vector<4x32x256xf32> to vector<4x32x256xbf16>
      %c0_38 = arith.constant 0 : index
      %c0_39 = arith.constant 0 : index
      %c0_40 = arith.constant 0 : index
      %46 = vector.load %arg10[%c0_38, %c0_39, %c0_40] : memref<4x32x256xbf16, #tpu.memory_space<vmem>>, vector<4x32x256xbf16>
      tpu.vector_store %arg10[%c0_38, %c0_39, %c0_40], %45 {strides = array<i32>} : memref<4x32x256xbf16, #tpu.memory_space<vmem>>, vector<4x32x256xbf16>,
      %cst_41 = arith.constant 0xFF800000 : f32
      %47 = vector.broadcast %cst_41 : f32 to vector<4x1x256xf32>
      %c0_42 = arith.constant 0 : index
      %c0_43 = arith.constant 0 : index
      %c0_44 = arith.constant 0 : index
      %48 = vector.load %arg11[%c0_42, %c0_43, %c0_44] : memref<4x1x256xf32, #tpu.memory_space<vmem>>, vector<4x1x256xf32>
      tpu.vector_store %arg11[%c0_42, %c0_43, %c0_44], %47 {strides = array<i32>} : memref<4x1x256xf32, #tpu.memory_space<vmem>>, vector<4x1x256xf32>,
      %cst_45 = arith.constant 0.000000e+00 : f32
      %49 = vector.broadcast %cst_45 : f32 to vector<4x1x256xf32>
      %c0_46 = arith.constant 0 : index
      %c0_47 = arith.constant 0 : index
      %c0_48 = arith.constant 0 : index
      %50 = vector.load %arg12[%c0_46, %c0_47, %c0_48] : memref<4x1x256xf32, #tpu.memory_space<vmem>>, vector<4x1x256xf32>
      tpu.vector_store %arg12[%c0_46, %c0_47, %c0_48], %49 {strides = array<i32>} : memref<4x1x256xf32, #tpu.memory_space<vmem>>, vector<4x1x256xf32>,
      %cst_49 = arith.constant 0.000000e+00 : f32
      %51 = vector.broadcast %cst_49 : f32 to vector<4x32x256xf32>
      %c0_50 = arith.constant 0 : index
      %c0_51 = arith.constant 0 : index
      %c0_52 = arith.constant 0 : index
      %52 = vector.load %arg13[%c0_50, %c0_51, %c0_52] : memref<4x32x256xf32, #tpu.memory_space<vmem>>, vector<4x32x256xf32>
      tpu.vector_store %arg13[%c0_50, %c0_51, %c0_52], %51 {strides = array<i32>} : memref<4x32x256xf32, #tpu.memory_space<vmem>>, vector<4x32x256xf32>,
    } else {
    }
    %c0 = arith.constant 0 : index
    %c0_1 = arith.constant 0 : index
    %c0_2 = arith.constant 0 : index
    %3 = vector.load %arg4[%c0, %c0_1, %c0_2] : memref<1x4x256xf32, #tpu.memory_space<vmem>>, vector<1x4x256xf32>
    %4 = vector.shape_cast %3 : vector<1x4x256xf32> to vector<4x256xf32>
    %c0_3 = arith.constant 0 : index
    %c0_4 = arith.constant 0 : index
    %5 = vector.load %arg6[%c0_3, %c0_4] : memref<256x4xf32, #tpu.memory_space<vmem>>, vector<256x4xf32>
    %cst = arith.constant dense<0.000000e+00> : vector<256x256xf32>
    %6 = tpu.matmul %5, %4, %cst {dimension_numbers = #tpu.dot_dimension_numbers<[1], [0], [0], [1], [0, 0, 1, 1], [], []>} : vector<256x4xf32>, vector<4x256xf32>, vector<256x256xf32> -> vector<256x256xf32>
    %7 = arith.truncf %6 : vector<256x256xf32> to vector<256x256xbf16>
    %8 = vector.extract_strided_slice %7 {offsets = [0, 0], sizes = [128, 256], strides = [1, 1]} : vector<256x256xbf16> to vector<128x256xbf16>
    %9 = vector.shape_cast %8 : vector<128x256xbf16> to vector<4x32x256xbf16>
    %10 = vector.extract_strided_slice %7 {offsets = [128, 0], sizes = [128, 256], strides = [1, 1]} : vector<256x256xbf16> to vector<128x256xbf16>
    %11 = vector.shape_cast %10 : vector<128x256xbf16> to vector<4x32x256xbf16>
    %c0_5 = arith.constant 0 : index
    %c0_6 = arith.constant 0 : index
    %c0_7 = arith.constant 0 : index
    %12 = vector.load %arg10[%c0_5, %c0_6, %c0_7] : memref<4x32x256xbf16, #tpu.memory_space<vmem>>, vector<4x32x256xbf16>
    %cst_8 = arith.constant dense<0.000000e+00> : vector<4x256x256xf32>
    %13 = tpu.matmul %9, %12, %cst_8 {dimension_numbers = #tpu.dot_dimension_numbers<[1], [1], [2], [2], [0, 0, 0, 2, 1, 2], [0], [0]>} : vector<4x32x256xbf16>, vector<4x32x256xbf16>, vector<4x256x256xf32> -> vector<4x256x256xf32>
    %c0_9 = arith.constant 0 : index
    %c0_10 = arith.constant 0 : index
    %c0_11 = arith.constant 0 : index
    %14 = vector.load %arg11[%c0_9, %c0_10, %c0_11] : memref<4x1x256xf32, #tpu.memory_space<vmem>>, vector<4x1x256xf32>
    %cst_12 = arith.constant dense<0xFF800000> : vector<4x256xf32>
    %15 = vector.multi_reduction <maximumf>, %13, %cst_12 [1] : vector<4x256x256xf32> to vector<4x256xf32>
    %16 = vector.shape_cast %15 : vector<4x256xf32> to vector<4x1x256xf32>
    %17 = arith.maximumf %14, %16 : vector<4x1x256xf32>
    %18 = arith.subf %14, %17 : vector<4x1x256xf32>
    %19 = math.exp %18 : vector<4x1x256xf32>
    %20 = vector.broadcast %17 : vector<4x1x256xf32> to vector<4x256x256xf32>
    %21 = arith.subf %13, %20 : vector<4x256x256xf32>
    %22 = math.exp %21 : vector<4x256x256xf32>
    %c0_13 = arith.constant 0 : index
    %c0_14 = arith.constant 0 : index
    %c0_15 = arith.constant 0 : index
    %23 = vector.load %arg12[%c0_13, %c0_14, %c0_15] : memref<4x1x256xf32, #tpu.memory_space<vmem>>, vector<4x1x256xf32>
    %24 = arith.mulf %19, %23 : vector<4x1x256xf32>
    %cst_16 = arith.constant dense<0.000000e+00> : vector<4x256xf32>
    %25 = vector.multi_reduction <add>, %22, %cst_16 [1] : vector<4x256x256xf32> to vector<4x256xf32>
    %26 = vector.shape_cast %25 : vector<4x256xf32> to vector<4x1x256xf32>
    %27 = arith.addf %24, %26 : vector<4x1x256xf32>
    %c0_17 = arith.constant 0 : index
    %c0_18 = arith.constant 0 : index
    %c0_19 = arith.constant 0 : index
    %28 = vector.load %arg12[%c0_17, %c0_18, %c0_19] : memref<4x1x256xf32, #tpu.memory_space<vmem>>, vector<4x1x256xf32>
    tpu.vector_store %arg12[%c0_17, %c0_18, %c0_19], %27 {strides = array<i32>} : memref<4x1x256xf32, #tpu.memory_space<vmem>>, vector<4x1x256xf32>,
    %29 = arith.truncf %22 : vector<4x256x256xf32> to vector<4x256x256xbf16>
    %cst_20 = arith.constant dense<0.000000e+00> : vector<4x32x256xf32>
    %30 = tpu.matmul %11, %29, %cst_20 {dimension_numbers = #tpu.dot_dimension_numbers<[2], [1], [1], [2], [0, 0, 0, 1, 1, 2], [0], [0]>} : vector<4x32x256xbf16>, vector<4x256x256xbf16>, vector<4x32x256xf32> -> vector<4x32x256xf32>
    %c0_21 = arith.constant 0 : index
    %c0_22 = arith.constant 0 : index
    %c0_23 = arith.constant 0 : index
    %31 = vector.load %arg13[%c0_21, %c0_22, %c0_23] : memref<4x32x256xf32, #tpu.memory_space<vmem>>, vector<4x32x256xf32>
    %32 = vector.broadcast %19 : vector<4x1x256xf32> to vector<4x32x256xf32>
    %33 = arith.mulf %32, %31 : vector<4x32x256xf32>
    %34 = arith.addf %33, %30 : vector<4x32x256xf32>
    %c0_24 = arith.constant 0 : index
    %c0_25 = arith.constant 0 : index
    %c0_26 = arith.constant 0 : index
    %35 = vector.load %arg13[%c0_24, %c0_25, %c0_26] : memref<4x32x256xf32, #tpu.memory_space<vmem>>, vector<4x32x256xf32>
    tpu.vector_store %arg13[%c0_24, %c0_25, %c0_26], %34 {strides = array<i32>} : memref<4x32x256xf32, #tpu.memory_space<vmem>>, vector<4x32x256xf32>,
    %c0_27 = arith.constant 0 : index
    %c0_28 = arith.constant 0 : index
    %c0_29 = arith.constant 0 : index
    %36 = vector.load %arg11[%c0_27, %c0_28, %c0_29] : memref<4x1x256xf32, #tpu.memory_space<vmem>>, vector<4x1x256xf32>
    tpu.vector_store %arg11[%c0_27, %c0_28, %c0_29], %17 {strides = array<i32>} : memref<4x1x256xf32, #tpu.memory_space<vmem>>, vector<4x1x256xf32>,
    %c0_i32_30 = arith.constant 0 : i32
    %37 = arith.cmpi eq, %arg2, %c0_i32_30 : i32
    %38 = arith.extui %37 : i1 to i32
    %c0_i32_31 = arith.constant 0 : i32
    %39 = arith.cmpi ne, %38, %c0_i32_31 : i32
    scf.if %39 {
      %c0_32 = arith.constant 0 : index
      %c0_33 = arith.constant 0 : index
      %c0_34 = arith.constant 0 : index
      %40 = vector.load %arg12[%c0_32, %c0_33, %c0_34] : memref<4x1x256xf32, #tpu.memory_space<vmem>>, vector<4x1x256xf32>
      %cst_35 = arith.constant 1.000000e+00 : f32
      %41 = vector.broadcast %cst_35 : f32 to vector<4x1x256xf32>
      %42 = arith.divf %41, %40 : vector<4x1x256xf32>
      %c0_36 = arith.constant 0 : index
      %c0_37 = arith.constant 0 : index
      %c0_38 = arith.constant 0 : index
      %43 = vector.load %arg13[%c0_36, %c0_37, %c0_38] : memref<4x32x256xf32, #tpu.memory_space<vmem>>, vector<4x32x256xf32>
      %44 = vector.broadcast %42 : vector<4x1x256xf32> to vector<4x32x256xf32>
      %45 = arith.mulf %43, %44 : vector<4x32x256xf32>
      %46 = vector.shape_cast %45 : vector<4x32x256xf32> to vector<128x256xf32>
      %c0_39 = arith.constant 0 : index
      %c0_40 = arith.constant 0 : index
      %47 = vector.load %arg7[%c0_39, %c0_40] : memref<4x128xf32, #tpu.memory_space<vmem>>, vector<4x128xf32>
      %cst_41 = arith.constant dense<0.000000e+00> : vector<4x256xf32>
      %48 = tpu.matmul %47, %46, %cst_41 {dimension_numbers = #tpu.dot_dimension_numbers<[1], [0], [0], [1], [0, 0, 1, 1], [], []>} : vector<4x128xf32>, vector<128x256xf32>, vector<4x256xf32> -> vector<4x256xf32>
      %c0_42 = arith.constant 0 : index
      %c0_43 = arith.constant 0 : index
      %49 = vector.load %arg8[%c0_42, %c0_43] : memref<4x1xf32, #tpu.memory_space<vmem>>, vector<4x1xf32>
      %50 = vector.broadcast %49 : vector<4x1xf32> to vector<4x256xf32>
      %51 = arith.addf %48, %50 : vector<4x256xf32>
      %c0_44 = arith.constant 0 : index
      %c0_45 = arith.constant 0 : index
      %c0_46 = arith.constant 0 : index
      %52 = vector.load %arg3[%c0_44, %c0_45, %c0_46] : memref<1x4x256xf32, #tpu.memory_space<vmem>>, vector<1x4x256xf32>
      %53 = vector.shape_cast %52 : vector<1x4x256xf32> to vector<4x256xf32>
      %54 = arith.addf %51, %53 : vector<4x256xf32>
      %c0_47 = arith.constant 0 : index
      %c0_48 = arith.constant 0 : index
      %c0_49 = arith.constant 0 : index
      %55 = vector.load %arg9[%c0_47, %c0_48, %c0_49] : memref<1x4x256xf32, #tpu.memory_space<vmem>>, vector<1x4x256xf32>
      %56 = vector.shape_cast %55 : vector<1x4x256xf32> to vector<4x256xf32>
      %57 = vector.shape_cast %54 : vector<4x256xf32> to vector<1x4x256xf32>
      tpu.vector_store %arg9[%c0_47, %c0_48, %c0_49], %57 {strides = array<i32>} : memref<1x4x256xf32, #tpu.memory_space<vmem>>, vector<1x4x256xf32>,
    } else {
    }
    return
  }
  func.func @transform_0(%arg0: i32, %arg1: i32, %arg2: i32) -> (i32, i32, i32) {
    %c0_i32 = arith.constant 0 : i32
    %c0_i32_0 = arith.constant 0 : i32
    return %arg0, %c0_i32, %arg1 : i32, i32, i32
  }
  func.func @transform_1(%arg0: i32, %arg1: i32, %arg2: i32) -> (i32, i32, i32) {
    %c0_i32 = arith.constant 0 : i32
    %c0_i32_0 = arith.constant 0 : i32
    return %arg0, %c0_i32, %arg2 : i32, i32, i32
  }
  func.func @transform_2(%arg0: i32, %arg1: i32, %arg2: i32) -> (i32, i32) {
    %c0_i32 = arith.constant 0 : i32
    %c0_i32_0 = arith.constant 0 : i32
    %c0_i32_1 = arith.constant 0 : i32
    return %c0_i32, %c0_i32_0 : i32, i32
  }
  func.func @transform_3(%arg0: i32, %arg1: i32, %arg2: i32) -> (i32, i32) {
    %c0_i32 = arith.constant 0 : i32
    %c0_i32_0 = arith.constant 0 : i32
    %c0_i32_1 = arith.constant 0 : i32
    return %c0_i32, %c0_i32_0 : i32, i32
  }
  func.func @transform_4(%arg0: i32, %arg1: i32, %arg2: i32) -> (i32, i32) {
    %c0_i32 = arith.constant 0 : i32
    %c0_i32_0 = arith.constant 0 : i32
    %c0_i32_1 = arith.constant 0 : i32
    return %c0_i32, %c0_i32_0 : i32, i32
  }
  func.func @transform_5(%arg0: i32, %arg1: i32, %arg2: i32) -> (i32, i32) {
    %c0_i32 = arith.constant 0 : i32
    %c0_i32_0 = arith.constant 0 : i32
    %c0_i32_1 = arith.constant 0 : i32
    return %c0_i32, %c0_i32_0 : i32, i32
  }
  func.func @transform_6(%arg0: i32, %arg1: i32, %arg2: i32) -> (i32, i32, i32) {
    %c0_i32 = arith.constant 0 : i32
    %c0_i32_0 = arith.constant 0 : i32
    return %arg0, %c0_i32, %arg1 : i32, i32, i32
  }
}

</mosaic_0001>

<llo_original>
// kernel: tpu_custom_call.1
$region0: #{tpu_custom_call.1}
  #allocation0 [shape = 'u32[]', space=smem, size = 0x4, offset = 0x4, fixed_abs, tag = 'smem constant byte address 0x4 - core index']
  #allocation1 [shape = 'u32[144,128]{1,0:T(1,128)}', space=vmem, size = 0x12000, scoped, tag = 'internal scratch']
  #allocation2 [shape = 'bf16[4,32,256]{2,1,0:T(16,128)(2,1)}', space=vmem, size = 0x10000, scoped, tag = 'scratch operand']
  #allocation3 [shape = 'f32[4,1,256]{2,1,0:T(1,128)}', space=vmem, size = 0x1000, scoped, tag = 'scratch operand']
  #allocation4 [shape = 'f32[4,1,256]{2,1,0:T(1,128)}', space=vmem, size = 0x1000, scoped, tag = 'scratch operand']
  #allocation5 [shape = 'f32[4,32,256]{2,1,0:T(8,128)}', space=vmem, size = 0x20000, scoped, tag = 'scratch operand']
  %s0 = inlined_call_operand.vmem [shape: f32[2,4,256], index: 0, kind: input, shape index: {}]
  %s1 = inlined_call_operand.vmem [shape: f32[2,4,256], index: 1, kind: input, shape index: {}]
  %s2 = inlined_call_operand.vmem [shape: f32[128,4], index: 2, kind: input, shape index: {}]
  %s3 = inlined_call_operand.vmem [shape: f32[256,4], index: 3, kind: input, shape index: {}]
  %s4 = inlined_call_operand.vmem [shape: f32[4,128], index: 4, kind: input, shape index: {}]
  %s5 = inlined_call_operand.vmem [shape: f32[4,1], index: 5, kind: input, shape index: {}]
  %s6 = inlined_call_operand.hbm [shape: f32[2,4,256], index: 6, kind: output, shape index: {}]
  %s7 = sld [smem:[#allocation0]]
  $region65: #{tpu_custom_call.1} parent=0
    _
  %s9 = ssub.s32 1, %s7
  %s10 = scalar_select 0, %s9, %s7
  $region1: #{tpu_custom_call.1} parent=0
    #allocation6 [shape = 'u8[8192]{0}', space=vmem, size = 0x2000, scoped, tag = 'output window, operand 0']
    #allocation7 [shape = 's32[2]{0}', space=sflag, size = 0x8, scoped, tag = 'scoped memory for tpu_custom_call.1']
    %11 = vsyncpa [#allocation7], 0
    %s12 = scalar_lea.sflag [#allocation7], 1
    %13 = vsyncpa %s12, 0
    loop: start=0, step=1, limit=4
    $region2: #{tpu_custom_call.1} parent=1 // loop_pre_header
      _
    $region3: #{tpu_custom_call.1} parent=1 // loop_header
      %s15 = sphi 0, %s19
      %p16 = scmp.ge.s32.totalorder %s15, 4
      %s22 = sphi 0, %s41
      %s23 = sphi 0, %s37
      %s24 = sphi 0, %s33
      %s25 = sphi 0, %s22
      %s26 = sphi 0, %s23
      %s27 = sphi 0, %s24
      %s28 = sphi 0, %s25
      %s29 = sphi 0, %s26
      %s30 = sphi 0, %s27
      %s46 = sphi 0, %s48
      %s49 = sphi 0, %s46
      %s50 = sphi 0, %s49
      %s66 = sphi 0, %s50
      %s74 = sphi 0, %s76
      %s77 = sphi 0, %s74
      %s78 = sphi 0, %s77
      %s94 = sphi 0, %s78
      %s98 = sphi 0, %s98
      %s100 = sphi 0, %s98
      %s101 = sphi 0, %s100
      %s115 = sphi 0, %s101
      %s119 = sphi 0, %s119
      %s121 = sphi 0, %s119
      %s122 = sphi 0, %s121
      %s136 = sphi 0, %s122
      %s140 = sphi 0, %s140
      %s142 = sphi 0, %s140
      %s143 = sphi 0, %s142
      %s157 = sphi 0, %s143
      %s161 = sphi 0, %s161
      %s163 = sphi 0, %s161
      %s164 = sphi 0, %s163
      %s178 = sphi 0, %s164
      %s186 = sphi 0, %s188
      %s189 = sphi 0, %s186
      %s190 = sphi 0, %s189
      %s206 = sphi 0, %s190
    $region4: #{tpu_custom_call.1} parent=1 // loop_header_branch
      %18 = sbr.rel (%p16) target = $region8
    $region5: #{tpu_custom_call.1} parent=1 // loop_body
      %s20 = ssub.s32 %s15, 1
      %s21 = ssub.s32 %s15, 2
      %s31 = sadd.s32 1, %s24
      %p32 = scmp.ge.s32.totalorder %s31, 1
      %s33 = scalar_select %p32, 0, %s31
      %s34 = sadd.s32 1, %s23
      %s35 = scalar_select %p32, %s34, %s23
      %p36 = scmp.ge.s32.totalorder %s35, 1
      %s37 = scalar_select %p36, 0, %s35
      %s38 = sadd.s32 1, %s22
      %s39 = scalar_select %p36, %s38, %s22
      %p40 = scmp.ge.s32.totalorder %s39, 2
      %s41 = scalar_select %p40, 0, %s39
      %s42 = ssub.s32 %s22, %s41
      %s43 = ssub.s32 %s23, %s37
      %s44 = sor.u32 %s42, %s43
      %p45 = scmp.eq.s32.totalorder %s44, 0
      %s47 = sadd.s32 %s46, 1
      %s48 = scalar_select %p45, %s46, %s47
      %p51 = pneg %p45
      %p52 = scmp.eq.s32.totalorder %s15, 1
      %p53 = por %p51, %p52
      %p54 = scmp.ne.s32.totalorder %s46, %s49
      %p55 = scmp.eq.s32.totalorder %s15, 0
      %p56 = por %p54, %p55
      %p57 = scmp.ne.s32.totalorder %s46, %s49
      %p58 = scmp.eq.s32.totalorder %s20, 1
      %p59 = por %p57, %p58
      %p60 = scmp.ne.s32.totalorder %s49, %s50
      %p61 = scmp.eq.s32.totalorder %s20, 0
      %p62 = por %p60, %p61
      %p63 = scmp.ne.s32.totalorder %s49, %s50
      %p64 = scmp.eq.s32.totalorder %s21, 1
      %p65 = por %p63, %p64
      %p67 = scmp.ne.s32.totalorder %s50, %s66
      %p68 = scmp.eq.s32.totalorder %s21, 0
      %p69 = por %p67, %p68
      %s70 = ssub.s32 %s22, %s41
      %s71 = ssub.s32 %s24, %s33
      %s72 = sor.u32 %s70, %s71
      %p73 = scmp.eq.s32.totalorder %s72, 0
      %s75 = sadd.s32 %s74, 1
      %s76 = scalar_select %p73, %s74, %s75
      %p79 = pneg %p73
      %p80 = scmp.eq.s32.totalorder %s15, 1
      %p81 = por %p79, %p80
      %p82 = scmp.ne.s32.totalorder %s74, %s77
      %p83 = scmp.eq.s32.totalorder %s15, 0
      %p84 = por %p82, %p83
      %p85 = scmp.ne.s32.totalorder %s74, %s77
      %p86 = scmp.eq.s32.totalorder %s20, 1
      %p87 = por %p85, %p86
      %p88 = scmp.ne.s32.totalorder %s77, %s78
      %p89 = scmp.eq.s32.totalorder %s20, 0
      %p90 = por %p88, %p89
      %p91 = scmp.ne.s32.totalorder %s77, %s78
      %p92 = scmp.eq.s32.totalorder %s21, 1
      %p93 = por %p91, %p92
      %p95 = scmp.ne.s32.totalorder %s78, %s94
      %p96 = scmp.eq.s32.totalorder %s21, 0
      %p97 = por %p95, %p96
      %s99 = sadd.s32 %s98, 1
      %p102 = scmp.eq.s32.totalorder %s15, 1
      %p103 = scmp.ne.s32.totalorder %s98, %s100
      %p104 = scmp.eq.s32.totalorder %s15, 0
      %p105 = por %p103, %p104
      %p106 = scmp.ne.s32.totalorder %s98, %s100
      %p107 = scmp.eq.s32.totalorder %s20, 1
      %p108 = por %p106, %p107
      %p109 = scmp.ne.s32.totalorder %s100, %s101
      %p110 = scmp.eq.s32.totalorder %s20, 0
      %p111 = por %p109, %p110
      %p112 = scmp.ne.s32.totalorder %s100, %s101
      %p113 = scmp.eq.s32.totalorder %s21, 1
      %p114 = por %p112, %p113
      %p116 = scmp.ne.s32.totalorder %s101, %s115
      %p117 = scmp.eq.s32.totalorder %s21, 0
      %p118 = por %p116, %p117
      %s120 = sadd.s32 %s119, 1
      %p123 = scmp.eq.s32.totalorder %s15, 1
      %p124 = scmp.ne.s32.totalorder %s119, %s121
      %p125 = scmp.eq.s32.totalorder %s15, 0
      %p126 = por %p124, %p125
      %p127 = scmp.ne.s32.totalorder %s119, %s121
      %p128 = scmp.eq.s32.totalorder %s20, 1
      %p129 = por %p127, %p128
      %p130 = scmp.ne.s32.totalorder %s121, %s122
      %p131 = scmp.eq.s32.totalorder %s20, 0
      %p132 = por %p130, %p131
      %p133 = scmp.ne.s32.totalorder %s121, %s122
      %p134 = scmp.eq.s32.totalorder %s21, 1
      %p135 = por %p133, %p134
      %p137 = scmp.ne.s32.totalorder %s122, %s136
      %p138 = scmp.eq.s32.totalorder %s21, 0
      %p139 = por %p137, %p138
      %s141 = sadd.s32 %s140, 1
      %p144 = scmp.eq.s32.totalorder %s15, 1
      %p145 = scmp.ne.s32.totalorder %s140, %s142
      %p146 = scmp.eq.s32.totalorder %s15, 0
      %p147 = por %p145, %p146
      %p148 = scmp.ne.s32.totalorder %s140, %s142
      %p149 = scmp.eq.s32.totalorder %s20, 1
      %p150 = por %p148, %p149
      %p151 = scmp.ne.s32.totalorder %s142, %s143
      %p152 = scmp.eq.s32.totalorder %s20, 0
      %p153 = por %p151, %p152
      %p154 = scmp.ne.s32.totalorder %s142, %s143
      %p155 = scmp.eq.s32.totalorder %s21, 1
      %p156 = por %p154, %p155
      %p158 = scmp.ne.s32.totalorder %s143, %s157
      %p159 = scmp.eq.s32.totalorder %s21, 0
      %p160 = por %p158, %p159
      %s162 = sadd.s32 %s161, 1
      %p165 = scmp.eq.s32.totalorder %s15, 1
      %p166 = scmp.ne.s32.totalorder %s161, %s163
      %p167 = scmp.eq.s32.totalorder %s15, 0
      %p168 = por %p166, %p167
      %p169 = scmp.ne.s32.totalorder %s161, %s163
      %p170 = scmp.eq.s32.totalorder %s20, 1
      %p171 = por %p169, %p170
      %p172 = scmp.ne.s32.totalorder %s163, %s164
      %p173 = scmp.eq.s32.totalorder %s20, 0
      %p174 = por %p172, %p173
      %p175 = scmp.ne.s32.totalorder %s163, %s164
      %p176 = scmp.eq.s32.totalorder %s21, 1
      %p177 = por %p175, %p176
      %p179 = scmp.ne.s32.totalorder %s164, %s178
      %p180 = scmp.eq.s32.totalorder %s21, 0
      %p181 = por %p179, %p180
      %s182 = ssub.s32 %s22, %s41
      %s183 = ssub.s32 %s23, %s37
      %s184 = sor.u32 %s182, %s183
      %p185 = scmp.eq.s32.totalorder %s184, 0
      %s187 = sadd.s32 %s186, 1
      %s188 = scalar_select %p185, %s186, %s187
      %p191 = pneg %p185
      %p192 = scmp.eq.s32.totalorder %s15, 1
      %p193 = por %p191, %p192
      %p194 = scmp.ne.s32.totalorder %s186, %s189
      %p195 = scmp.eq.s32.totalorder %s15, 0
      %p196 = por %p194, %p195
      %p197 = scmp.ne.s32.totalorder %s186, %s189
      %p198 = scmp.eq.s32.totalorder %s20, 1
      %p199 = por %p197, %p198
      %p200 = scmp.ne.s32.totalorder %s189, %s190
      %p201 = scmp.eq.s32.totalorder %s20, 0
      %p202 = por %p200, %p201
      %p203 = scmp.ne.s32.totalorder %s189, %s190
      %p204 = scmp.eq.s32.totalorder %s21, 1
      %p205 = por %p203, %p204
      %p207 = scmp.ne.s32.totalorder %s190, %s206
      %p208 = scmp.eq.s32.totalorder %s21, 0
      %p209 = por %p207, %p208
      %p210 = scmp.le.s32.totalorder 1, %s15
      %p211 = scmp.lt.s32.totalorder %s15, 3
      %p212 = pnand %p210, %p211
      %p213 = pneg %p212
      // Predicated region
      $region9: #{tpu_custom_call.1} parent=5 // pred_check
        _
      $region10: #{tpu_custom_call.1} parent=5 // pred_check_branch
        %215 = sbr.rel (%p212) target = $region12
      $region11: #{tpu_custom_call.1} parent=5 // pred_region
        %s216 = ssub.s32 %s15, 1
        // Predicated region
        $region13: #{tpu_custom_call.1} parent=11 // pred_check
          %p217 = pneg %p111
        $region14: #{tpu_custom_call.1} parent=11 // pred_check_branch
          %219 = sbr.rel (%p217) target = $region16
        $region15: #{tpu_custom_call.1} parent=11 // pred_region
          _
        $region16: #{tpu_custom_call.1} parent=11 // pred_fallthru
          _
        // Predicated region
        $region17: #{tpu_custom_call.1} parent=11 // pred_check
          %p220 = pneg %p132
        $region18: #{tpu_custom_call.1} parent=11 // pred_check_branch
          %222 = sbr.rel (%p220) target = $region20
        $region19: #{tpu_custom_call.1} parent=11 // pred_region
          _
        $region20: #{tpu_custom_call.1} parent=11 // pred_fallthru
          _
        // Predicated region
        $region21: #{tpu_custom_call.1} parent=11 // pred_check
          %p223 = pneg %p153
        $region22: #{tpu_custom_call.1} parent=11 // pred_check_branch
          %225 = sbr.rel (%p223) target = $region24
        $region23: #{tpu_custom_call.1} parent=11 // pred_region
          _
        $region24: #{tpu_custom_call.1} parent=11 // pred_fallthru
          _
        // Predicated region
        $region25: #{tpu_custom_call.1} parent=11 // pred_check
          %p226 = pneg %p174
        $region26: #{tpu_custom_call.1} parent=11 // pred_check_branch
          %228 = sbr.rel (%p226) target = $region28
        $region27: #{tpu_custom_call.1} parent=11 // pred_region
          _
        $region28: #{tpu_custom_call.1} parent=11 // pred_fallthru
          _
      $region12: #{tpu_custom_call.1} parent=5 // pred_fallthru
        _
      %p229 = scmp.lt.s32.totalorder %s15, 2
      // Predicated region
      $region29: #{tpu_custom_call.1} parent=5 // pred_check
        %p230 = pneg %p229
      $region30: #{tpu_custom_call.1} parent=5 // pred_check_branch
        %232 = sbr.rel (%p230) target = $region32
      $region31: #{tpu_custom_call.1} parent=5 // pred_region
        // Predicated region
        $region33: #{tpu_custom_call.1} parent=31 // pred_check
          %p233 = pneg %p56
        $region34: #{tpu_custom_call.1} parent=31 // pred_check_branch
          %235 = sbr.rel (%p233) target = $region36
        $region35: #{tpu_custom_call.1} parent=31 // pred_region
          %s236 = smul.u32 2, %s23
          %p237 = scmp.lt.s32.totalorder %s22, 1
          %s238 = scalar_select %p237, %s22, 1
          %p239 = scmp.lt.s32.totalorder %s236, 1
          %s240 = scalar_select %p239, %s236, 1
          %s241 = smul.addr %s238, 2
          %s242 = sadd.s32 %s240, %s241
          %s243 = smul.addr %s242, 4
          %s244 = scalar_lea.vmem %s0, %s243
          %s245 = smul.u32 2, %s23
        $region36: #{tpu_custom_call.1} parent=31 // pred_fallthru
          _
        // Predicated region
        $region37: #{tpu_custom_call.1} parent=31 // pred_check
          %p246 = pneg %p84
        $region38: #{tpu_custom_call.1} parent=31 // pred_check_branch
          %248 = sbr.rel (%p246) target = $region40
        $region39: #{tpu_custom_call.1} parent=31 // pred_region
          %s249 = smul.u32 2, %s24
          %p250 = scmp.lt.s32.totalorder %s22, 1
          %s251 = scalar_select %p250, %s22, 1
          %p252 = scmp.lt.s32.totalorder %s249, 1
          %s253 = scalar_select %p252, %s249, 1
          %s254 = smul.addr %s251, 2
          %s255 = sadd.s32 %s253, %s254
          %s256 = smul.addr %s255, 4
          %s257 = scalar_lea.vmem %s1, %s256
          %s258 = smul.u32 2, %s24
        $region40: #{tpu_custom_call.1} parent=31 // pred_fallthru
          _
      $region32: #{tpu_custom_call.1} parent=5 // pred_fallthru
        _
      %p259 = scmp.le.s32.totalorder 1, %s15
      %p260 = scmp.lt.s32.totalorder %s15, 3
      %p261 = pnand %p259, %p260
      %p262 = pneg %p261
      // Predicated region
      $region41: #{tpu_custom_call.1} parent=5 // pred_check
        _
      $region42: #{tpu_custom_call.1} parent=5 // pred_check_branch
        %264 = sbr.rel (%p261) target = $region44
      $region43: #{tpu_custom_call.1} parent=5 // pred_region
        %s265 = ssub.s32 %s15, 1
        %s266 = smul.u32 2, %s26
        %p267 = scmp.lt.s32.totalorder %s25, 1
        %s268 = scalar_select %p267, %s25, 1
        %p269 = scmp.lt.s32.totalorder %s266, 1
        %s270 = scalar_select %p269, %s266, 1
        %s271 = smul.addr %s268, 2
        %s272 = sadd.s32 %s270, %s271
        %s273 = smul.addr %s272, 4
        %s274 = scalar_lea.vmem %s0, %s273
        %p275 = pneg %p62
        %p276 = pneg %p59
        %s277 = smul.u32 2, %s27
        %p278 = scmp.lt.s32.totalorder %s25, 1
        %s279 = scalar_select %p278, %s25, 1
        %p280 = scmp.lt.s32.totalorder %s277, 1
        %s281 = scalar_select %p280, %s277, 1
        %s282 = smul.addr %s279, 2
        %s283 = sadd.s32 %s281, %s282
        %s284 = smul.addr %s283, 4
        %s285 = scalar_lea.vmem %s1, %s284
        %p286 = pneg %p90
        %p287 = pneg %p87
        %p288 = pneg %p111
        %p289 = pneg %p108
        %p290 = pneg %p132
        %p291 = pneg %p129
        %p292 = pneg %p153
        %p293 = pneg %p150
        %p294 = pneg %p174
        %p295 = pneg %p171
        %p296 = pneg %p202
        %p297 = pneg %p199
        %s298 = sand.u32 %s189, 1
        %s299 = scalar_lea.sflag [#allocation7], %s298
        %s300 = sand.u32 %s189, 1
        %s301 = smul.addr %s300, 8
        %s302 = scalar_lea.vmem [#allocation6], %s301
        %s303 = smul.u32 2, %s26
        %p304 = scmp.lt.s32.totalorder %s25, 1
        %s305 = scalar_select %p304, %s25, 1
        %p306 = scmp.lt.s32.totalorder %s303, 1
        %s307 = scalar_select %p306, %s303, 1
        %s308 = smul.addr %s305, 2
        %s309 = sadd.s32 %s307, %s308
        %s310 = smul.addr %s309, 4
        %s311 = scalar_lea.vmem %s0, %s310
        %s312 = smul.u32 2, %s26
        %s313 = smul.u32 2, %s27
        %p314 = scmp.lt.s32.totalorder %s25, 1
        %s315 = scalar_select %p314, %s25, 1
        %p316 = scmp.lt.s32.totalorder %s313, 1
        %s317 = scalar_select %p316, %s313, 1
        %s318 = smul.addr %s315, 2
        %s319 = sadd.s32 %s317, %s318
        %s320 = smul.addr %s319, 4
        %s321 = scalar_lea.vmem %s1, %s320
        %s322 = smul.u32 2, %s27
        %s323 = smul.u32 2, %s26
        %p325 = scmp.eq.s32.totalorder %s27, 0
        // Predicated region
        $region45: #{tpu_custom_call.1} parent=43 // pred_check
          %p326 = pneg %p325
        $region46: #{tpu_custom_call.1} parent=43 // pred_check_branch
          %328 = sbr.rel (%p326) target = $region48
        $region47: #{tpu_custom_call.1} parent=43 // pred_region
          %v329 = vld [vmem:[%s311] sm:$0xff]
          %v330 = vld [vmem:[%s2] sm:$0xff]
          %v331 = vld [vmem:[%s2 + $0x8] sm:$0xff]
          %v332 = vld [vmem:[%s2 + $0x10] sm:$0xff]
          %v333 = vld [vmem:[%s2 + $0x18] sm:$0xff]
          %v334 = vld [vmem:[%s2 + $0x20] sm:$0xff]
          %v335 = vld [vmem:[%s2 + $0x28] sm:$0xff]
          %v336 = vld [vmem:[%s2 + $0x30] sm:$0xff]
          %v337 = vld [vmem:[%s2 + $0x38] sm:$0xff]
          %v338 = vld [vmem:[%s2 + $0x40] sm:$0xff]
          %v339 = vld [vmem:[%s2 + $0x48] sm:$0xff]
          %v340 = vld [vmem:[%s2 + $0x50] sm:$0xff]
          %v341 = vld [vmem:[%s2 + $0x58] sm:$0xff]
          %v342 = vld [vmem:[%s2 + $0x60] sm:$0xff]
          %v343 = vld [vmem:[%s2 + $0x68] sm:$0xff]
          %v344 = vld [vmem:[%s2 + $0x70] sm:$0xff]
          %v345 = vld [vmem:[%s2 + $0x78] sm:$0xff]
          %v347 = vcombine.high %v329, %v329
          %vm348 = vcmask 31744
          %v350 = vsel %vm348, %v330, 0
          %v353 = vsel %vm348, %v331, 0
          %v356 = vsel %vm348, %v332, 0
          %v359 = vsel %vm348, %v333, 0
          %v362 = vsel %vm348, %v334, 0
          %v365 = vsel %vm348, %v335, 0
          %v368 = vsel %vm348, %v336, 0
          %v371 = vsel %vm348, %v337, 0
          %v374 = vsel %vm348, %v338, 0
          %v377 = vsel %vm348, %v339, 0
          %v380 = vsel %vm348, %v340, 0
          %v383 = vsel %vm348, %v341, 0
          %v386 = vsel %vm348, %v342, 0
          %v389 = vsel %vm348, %v343, 0
          %v392 = vsel %vm348, %v344, 0
          %v395 = vsel %vm348, %v345, 0
          %vm397 = vcmask 1043456
          %v398 = vsel %vm397, %v329, 0
          %v400 = vsel %vm397, %v347, 0
          %402 = vmatprep.subr.mxu0 %v400
          %403 = vmatpush1.msra.mxu0 %v398
          %404 = vmatprep.subr.mxu0 0.0
          %405 = vmatpush1.msra.mxu0 0.0
          %406 = vmatprep.subr.mxu0 0.0
          %407 = vmatpush1.msra.mxu0 0.0
          %408 = vmatprep.subr.mxu0 0.0
          %409 = vmatpush1.msra.mxu0 0.0
          %410 = vmatprep.subr.mxu0 0.0
          %411 = vmatpush1.msra.mxu0 0.0
          %412 = vmatprep.subr.mxu0 0.0
          %413 = vmatpush1.msra.mxu0 0.0
          %414 = vmatprep.subr.mxu0 0.0
          %415 = vmatpush1.msra.mxu0 0.0
          %416 = vmatprep.subr.mxu0 0.0
          %417 = vmatpush1.msra.mxu0 0.0
          %418 = vmatprep.subr.mxu0 0.0
          %419 = vmatpush1.msra.mxu0 0.0
          %420 = vmatprep.subr.mxu0 0.0
          %421 = vmatpush1.msra.mxu0 0.0
          %422 = vmatprep.subr.mxu0 0.0
          %423 = vmatpush1.msra.mxu0 0.0
          %424 = vmatprep.subr.mxu0 0.0
          %425 = vmatpush1.msra.mxu0 0.0
          %426 = vmatprep.subr.mxu0 0.0
          %427 = vmatpush1.msra.mxu0 0.0
          %428 = vmatprep.subr.mxu0 0.0
          %429 = vmatpush1.msra.mxu0 0.0
          %430 = vmatprep.subr.mxu0 0.0
          %431 = vmatpush1.msra.mxu0 0.0
          %432 = vmatprep.subr.mxu0 0.0
          %433 = vmatpush1.msra.mxu0 0.0
          %434 = vmatprep.subr.mxu0 0.0
          %435 = vmatpush1.msra.mxu0 0.0
          %436 = vmatprep.subr.mxu0 0.0
          %437 = vmatpush1.msra.mxu0 0.0
          %438 = vmatprep.subr.mxu0 0.0
          %439 = vmatpush1.msra.mxu0 0.0
          %440 = vmatprep.subr.mxu0 0.0
          %441 = vmatpush1.msra.mxu0 0.0
          %442 = vmatprep.subr.mxu0 0.0
          %443 = vmatpush1.msra.mxu0 0.0
          %444 = vmatprep.subr.mxu0 0.0
          %445 = vmatpush1.msra.mxu0 0.0
          %446 = vmatprep.subr.mxu0 0.0
          %447 = vmatpush1.msra.mxu0 0.0
          %448 = vmatprep.subr.mxu0 0.0
          %449 = vmatpush1.msra.mxu0 0.0
          %450 = vmatprep.subr.mxu0 0.0
          %451 = vmatpush1.msra.mxu0 0.0
          %452 = vmatprep.subr.mxu0 0.0
          %453 = vmatpush1.msra.mxu0 0.0
          %454 = vmatprep.subr.mxu0 0.0
          %455 = vmatpush1.msra.mxu0 0.0
          %456 = vmatprep.subr.mxu0 0.0
          %457 = vmatpush1.msra.mxu0 0.0
          %458 = vmatprep.subr.mxu0 0.0
          %459 = vmatpush1.msra.mxu0 0.0
          %460 = vmatprep.subr.mxu0 0.0
          %461 = vmatpush1.msra.mxu0 0.0
          %462 = vmatprep.subr.mxu0 0.0
          %463 = vmatpush1.msra.mxu0 0.0
          %464 = vmatprep.subr.mxu0 0.0
          %465 = vmatpush1.msra.mxu0 0.0
          %466 = vmatprep.mubr.f32.mxu0 0.0
          %467 = vmatmul.mubr.f32.gmra.mrb[0].mxu0 %v350
          %v468 = vpop.f32.mrb[0].mxu0
          %v469 = vadd.f32 0.0, %v468
          %v470 = vpop.f32.mrb[0].mxu0
          %v471 = vadd.f32 0.0, %v470
          %472 = vmatprep.mubr.f32.mxu0 0.0
          %473 = vmatmul.mubr.f32.gmra.mrb[0].mxu0 %v353
          %v474 = vpop.f32.mrb[0].mxu0
          %v475 = vadd.f32 0.0, %v474
          %v476 = vpop.f32.mrb[0].mxu0
          %v477 = vadd.f32 0.0, %v476
          %478 = vmatprep.mubr.f32.mxu0 0.0
          %479 = vmatmul.mubr.f32.gmra.mrb[0].mxu0 %v356
          %v480 = vpop.f32.mrb[0].mxu0
          %v481 = vadd.f32 0.0, %v480
          %v482 = vpop.f32.mrb[0].mxu0
          %v483 = vadd.f32 0.0, %v482
          %484 = vmatprep.mubr.f32.mxu0 0.0
          %485 = vmatmul.mubr.f32.gmra.mrb[0].mxu0 %v359
          %v486 = vpop.f32.mrb[0].mxu0
          %v487 = vadd.f32 0.0, %v486
          %v488 = vpop.f32.mrb[0].mxu0
          %v489 = vadd.f32 0.0, %v488
          %490 = vmatprep.mubr.f32.mxu0 0.0
          %491 = vmatmul.mubr.f32.gmra.mrb[0].mxu0 %v362
          %v492 = vpop.f32.mrb[0].mxu0
          %v493 = vadd.f32 0.0, %v492
          %v494 = vpop.f32.mrb[0].mxu0
          %v495 = vadd.f32 0.0, %v494
          %496 = vmatprep.mubr.f32.mxu0 0.0
          %497 = vmatmul.mubr.f32.gmra.mrb[0].mxu0 %v365
          %v498 = vpop.f32.mrb[0].mxu0
          %v499 = vadd.f32 0.0, %v498
          %v500 = vpop.f32.mrb[0].mxu0
          %v501 = vadd.f32 0.0, %v500
          %502 = vmatprep.mubr.f32.mxu0 0.0
          %503 = vmatmul.mubr.f32.gmra.mrb[0].mxu0 %v368
          %v504 = vpop.f32.mrb[0].mxu0
          %v505 = vadd.f32 0.0, %v504
          %v506 = vpop.f32.mrb[0].mxu0
          %v507 = vadd.f32 0.0, %v506
          %508 = vmatprep.mubr.f32.mxu0 0.0
          %509 = vmatmul.mubr.f32.gmra.mrb[0].mxu0 %v371
          %v510 = vpop.f32.mrb[0].mxu0
          %v511 = vadd.f32 0.0, %v510
          %v512 = vpop.f32.mrb[0].mxu0
          %v513 = vadd.f32 0.0, %v512
          %514 = vmatprep.mubr.f32.mxu0 0.0
          %515 = vmatmul.mubr.f32.gmra.mrb[0].mxu0 %v374
          %v516 = vpop.f32.mrb[0].mxu0
          %v517 = vadd.f32 0.0, %v516
          %v518 = vpop.f32.mrb[0].mxu0
          %v519 = vadd.f32 0.0, %v518
          %520 = vmatprep.mubr.f32.mxu0 0.0
          %521 = vmatmul.mubr.f32.gmra.mrb[0].mxu0 %v377
          %v522 = vpop.f32.mrb[0].mxu0
          %v523 = vadd.f32 0.0, %v522
          %v524 = vpop.f32.mrb[0].mxu0
          %v525 = vadd.f32 0.0, %v524
          %526 = vmatprep.mubr.f32.mxu0 0.0
          %527 = vmatmul.mubr.f32.gmra.mrb[0].mxu0 %v380
          %v528 = vpop.f32.mrb[0].mxu0
          %v529 = vadd.f32 0.0, %v528
          %v530 = vpop.f32.mrb[0].mxu0
          %v531 = vadd.f32 0.0, %v530
          %532 = vmatprep.mubr.f32.mxu0 0.0
          %533 = vmatmul.mubr.f32.gmra.mrb[0].mxu0 %v383
          %v534 = vpop.f32.mrb[0].mxu0
          %v535 = vadd.f32 0.0, %v534
          %v536 = vpop.f32.mrb[0].mxu0
          %v537 = vadd.f32 0.0, %v536
          %538 = vmatprep.mubr.f32.mxu0 0.0
          %539 = vmatmul.mubr.f32.gmra.mrb[0].mxu0 %v386
          %v540 = vpop.f32.mrb[0].mxu0
          %v541 = vadd.f32 0.0, %v540
          %v542 = vpop.f32.mrb[0].mxu0
          %v543 = vadd.f32 0.0, %v542
          %544 = vmatprep.mubr.f32.mxu0 0.0
          %545 = vmatmul.mubr.f32.gmra.mrb[0].mxu0 %v389
          %v546 = vpop.f32.mrb[0].mxu0
          %v547 = vadd.f32 0.0, %v546
          %v548 = vpop.f32.mrb[0].mxu0
          %v549 = vadd.f32 0.0, %v548
          %550 = vmatprep.mubr.f32.mxu0 0.0
          %551 = vmatmul.mubr.f32.gmra.mrb[0].mxu0 %v392
          %v552 = vpop.f32.mrb[0].mxu0
          %v553 = vadd.f32 0.0, %v552
          %v554 = vpop.f32.mrb[0].mxu0
          %v555 = vadd.f32 0.0, %v554
          %556 = vmatprep.mubr.f32.mxu0 0.0
          %557 = vmatmul.mubr.f32.gmra.mrb[0].mxu0 %v395
          %v558 = vpop.f32.mrb[0].mxu0
          %v559 = vadd.f32 0.0, %v558
          %v560 = vpop.f32.mrb[0].mxu0
          %v561 = vadd.f32 0.0, %v560
          %562 = vdwg.mxu0
          %v563 = vpack.c.bf16 %v475, %v469
          %v564 = vpack.c.bf16 %v477, %v471
          %v565 = vpack.c.bf16 %v487, %v481
          %v566 = vpack.c.bf16 %v489, %v483
          %v567 = vpack.c.bf16 %v499, %v493
          %v568 = vpack.c.bf16 %v501, %v495
          %v569 = vpack.c.bf16 %v511, %v505
          %v570 = vpack.c.bf16 %v513, %v507
          %v571 = vpack.c.bf16 %v523, %v517
          %v572 = vpack.c.bf16 %v525, %v519
          %v573 = vpack.c.bf16 %v535, %v529
          %v574 = vpack.c.bf16 %v537, %v531
          %v575 = vpack.c.bf16 %v547, %v541
          %v576 = vpack.c.bf16 %v549, %v543
          %v577 = vpack.c.bf16 %v559, %v553
          %v578 = vpack.c.bf16 %v561, %v555
          %579 = vst [vmem:[#allocation2] sm:$0xff] %v563
          %580 = vst [vmem:[#allocation2 + $0x8] sm:$0xff] %v564
          %581 = vst [vmem:[#allocation2 + $0x10] sm:$0xff] %v565
          %582 = vst [vmem:[#allocation2 + $0x18] sm:$0xff] %v566
          %583 = vst [vmem:[#allocation2 + $0x20] sm:$0xff] %v567
          %584 = vst [vmem:[#allocation2 + $0x28] sm:$0xff] %v568
          %585 = vst [vmem:[#allocation2 + $0x30] sm:$0xff] %v569
          %586 = vst [vmem:[#allocation2 + $0x38] sm:$0xff] %v570
          %587 = vst [vmem:[#allocation2 + $0x40] sm:$0xff] %v571
          %588 = vst [vmem:[#allocation2 + $0x48] sm:$0xff] %v572
          %589 = vst [vmem:[#allocation2 + $0x50] sm:$0xff] %v573
          %590 = vst [vmem:[#allocation2 + $0x58] sm:$0xff] %v574
          %591 = vst [vmem:[#allocation2 + $0x60] sm:$0xff] %v575
          %592 = vst [vmem:[#allocation2 + $0x68] sm:$0xff] %v576
          %593 = vst [vmem:[#allocation2 + $0x70] sm:$0xff] %v577
          %594 = vst [vmem:[#allocation2 + $0x78] sm:$0xff] %v578
          %v595 = vlaneseq
          %vm596 = vcmp.ge.s32.totalorder %v595, 0
          %vm597 = vcmp.lt.s32.totalorder %v595, 256
          %vm598 = vmand %vm596, %vm597
          %599 = vst.msk [vmem:[#allocation3] sm:$0x3] %vm598, -inf
          %600 = vst.msk [vmem:[#allocation3 + $0x2] sm:$0x3] %vm598, -inf
          %601 = vst.msk [vmem:[#allocation3 + $0x4] sm:$0x3] %vm598, -inf
          %602 = vst.msk [vmem:[#allocation3 + $0x6] sm:$0x3] %vm598, -inf
          %603 = vst.msk [vmem:[#allocation4] sm:$0x3] %vm598, 0.0
          %604 = vst.msk [vmem:[#allocation4 + $0x2] sm:$0x3] %vm598, 0.0
          %605 = vst.msk [vmem:[#allocation4 + $0x4] sm:$0x3] %vm598, 0.0
          %606 = vst.msk [vmem:[#allocation4 + $0x6] sm:$0x3] %vm598, 0.0
          %607 = vst [vmem:[#allocation5] sm:$0xff] 0.0
          %608 = vst [vmem:[#allocation5 + $0x8] sm:$0xff] 0.0
          %609 = vst [vmem:[#allocation5 + $0x10] sm:$0xff] 0.0
          %610 = vst [vmem:[#allocation5 + $0x18] sm:$0xff] 0.0
          %611 = vst [vmem:[#allocation5 + $0x20] sm:$0xff] 0.0
          %612 = vst [vmem:[#allocation5 + $0x28] sm:$0xff] 0.0
          %613 = vst [vmem:[#allocation5 + $0x30] sm:$0xff] 0.0
          %614 = vst [vmem:[#allocation5 + $0x38] sm:$0xff] 0.0
          %615 = vst [vmem:[#allocation5 + $0x40] sm:$0xff] 0.0
          %616 = vst [vmem:[#allocation5 + $0x48] sm:$0xff] 0.0
          %617 = vst [vmem:[#allocation5 + $0x50] sm:$0xff] 0.0
          %618 = vst [vmem:[#allocation5 + $0x58] sm:$0xff] 0.0
          %619 = vst [vmem:[#allocation5 + $0x60] sm:$0xff] 0.0
          %620 = vst [vmem:[#allocation5 + $0x68] sm:$0xff] 0.0
          %621 = vst [vmem:[#allocation5 + $0x70] sm:$0xff] 0.0
          %622 = vst [vmem:[#allocation5 + $0x78] sm:$0xff] 0.0
          %623 = vst [vmem:[#allocation5 + $0x80] sm:$0xff] 0.0
          %624 = vst [vmem:[#allocation5 + $0x88] sm:$0xff] 0.0
          %625 = vst [vmem:[#allocation5 + $0x90] sm:$0xff] 0.0
          %626 = vst [vmem:[#allocation5 + $0x98] sm:$0xff] 0.0
          %627 = vst [vmem:[#allocation5 + $0xa0] sm:$0xff] 0.0
          %628 = vst [vmem:[#allocation5 + $0xa8] sm:$0xff] 0.0
          %629 = vst [vmem:[#allocation5 + $0xb0] sm:$0xff] 0.0
          %630 = vst [vmem:[#allocation5 + $0xb8] sm:$0xff] 0.0
          %631 = vst [vmem:[#allocation5 + $0xc0] sm:$0xff] 0.0
          %632 = vst [vmem:[#allocation5 + $0xc8] sm:$0xff] 0.0
          %633 = vst [vmem:[#allocation5 + $0xd0] sm:$0xff] 0.0
          %634 = vst [vmem:[#allocation5 + $0xd8] sm:$0xff] 0.0
          %635 = vst [vmem:[#allocation5 + $0xe0] sm:$0xff] 0.0
          %636 = vst [vmem:[#allocation5 + $0xe8] sm:$0xff] 0.0
          %637 = vst [vmem:[#allocation5 + $0xf0] sm:$0xff] 0.0
          %638 = vst [vmem:[#allocation5 + $0xf8] sm:$0xff] 0.0
        $region48: #{tpu_custom_call.1} parent=43 // pred_fallthru
          _
        %v639 = vld [vmem:[%s321] sm:$0xff]
        %v640 = vld [vmem:[%s3] sm:$0xff]
        %v641 = vld [vmem:[%s3 + $0x8] sm:$0xff]
        %v642 = vld [vmem:[%s3 + $0x10] sm:$0xff]
        %v643 = vld [vmem:[%s3 + $0x18] sm:$0xff]
        %v644 = vld [vmem:[%s3 + $0x20] sm:$0xff]
        %v645 = vld [vmem:[%s3 + $0x28] sm:$0xff]
        %v646 = vld [vmem:[%s3 + $0x30] sm:$0xff]
        %v647 = vld [vmem:[%s3 + $0x38] sm:$0xff]
        %v648 = vld [vmem:[%s3 + $0x40] sm:$0xff]
        %v649 = vld [vmem:[%s3 + $0x48] sm:$0xff]
        %v650 = vld [vmem:[%s3 + $0x50] sm:$0xff]
        %v651 = vld [vmem:[%s3 + $0x58] sm:$0xff]
        %v652 = vld [vmem:[%s3 + $0x60] sm:$0xff]
        %v653 = vld [vmem:[%s3 + $0x68] sm:$0xff]
        %v654 = vld [vmem:[%s3 + $0x70] sm:$0xff]
        %v655 = vld [vmem:[%s3 + $0x78] sm:$0xff]
        %v656 = vld [vmem:[%s3 + $0x80] sm:$0xff]
        %v657 = vld [vmem:[%s3 + $0x88] sm:$0xff]
        %v658 = vld [vmem:[%s3 + $0x90] sm:$0xff]
        %v659 = vld [vmem:[%s3 + $0x98] sm:$0xff]
        %v660 = vld [vmem:[%s3 + $0xa0] sm:$0xff]
        %v661 = vld [vmem:[%s3 + $0xa8] sm:$0xff]
        %v662 = vld [vmem:[%s3 + $0xb0] sm:$0xff]
        %v663 = vld [vmem:[%s3 + $0xb8] sm:$0xff]
        %v664 = vld [vmem:[%s3 + $0xc0] sm:$0xff]
        %v665 = vld [vmem:[%s3 + $0xc8] sm:$0xff]
        %v666 = vld [vmem:[%s3 + $0xd0] sm:$0xff]
        %v667 = vld [vmem:[%s3 + $0xd8] sm:$0xff]
        %v668 = vld [vmem:[%s3 + $0xe0] sm:$0xff]
        %v669 = vld [vmem:[%s3 + $0xe8] sm:$0xff]
        %v670 = vld [vmem:[%s3 + $0xf0] sm:$0xff]
        %v671 = vld [vmem:[%s3 + $0xf8] sm:$0xff]
        %v673 = vcombine.high %v639, %v639
        %vm674 = vcmask 31744
        %v676 = vsel %vm674, %v640, 0
        %v679 = vsel %vm674, %v641, 0
        %v682 = vsel %vm674, %v642, 0
        %v685 = vsel %vm674, %v643, 0
        %v688 = vsel %vm674, %v644, 0
        %v691 = vsel %vm674, %v645, 0
        %v694 = vsel %vm674, %v646, 0
        %v697 = vsel %vm674, %v647, 0
        %v700 = vsel %vm674, %v648, 0
        %v703 = vsel %vm674, %v649, 0
        %v706 = vsel %vm674, %v650, 0
        %v709 = vsel %vm674, %v651, 0
        %v712 = vsel %vm674, %v652, 0
        %v715 = vsel %vm674, %v653, 0
        %v718 = vsel %vm674, %v654, 0
        %v721 = vsel %vm674, %v655, 0
        %v724 = vsel %vm674, %v656, 0
        %v727 = vsel %vm674, %v657, 0
        %v730 = vsel %vm674, %v658, 0
        %v733 = vsel %vm674, %v659, 0
        %v736 = vsel %vm674, %v660, 0
        %v739 = vsel %vm674, %v661, 0
        %v742 = vsel %vm674, %v662, 0
        %v745 = vsel %vm674, %v663, 0
        %v748 = vsel %vm674, %v664, 0
        %v751 = vsel %vm674, %v665, 0
        %v754 = vsel %vm674, %v666, 0
        %v757 = vsel %vm674, %v667, 0
        %v760 = vsel %vm674, %v668, 0
        %v763 = vsel %vm674, %v669, 0
        %v766 = vsel %vm674, %v670, 0
        %v769 = vsel %vm674, %v671, 0
        %vm771 = vcmask 1043456
        %v772 = vsel %vm771, %v639, 0
        %v774 = vsel %vm771, %v673, 0
        %776 = vmatprep.subr.mxu0 %v774
        %777 = vmatpush1.msra.mxu0 %v772
        %778 = vmatprep.subr.mxu0 0.0
        %779 = vmatpush1.msra.mxu0 0.0
        %780 = vmatprep.subr.mxu0 0.0
        %781 = vmatpush1.msra.mxu0 0.0
        %782 = vmatprep.subr.mxu0 0.0
        %783 = vmatpush1.msra.mxu0 0.0
        %784 = vmatprep.subr.mxu0 0.0
        %785 = vmatpush1.msra.mxu0 0.0
        %786 = vmatprep.subr.mxu0 0.0
        %787 = vmatpush1.msra.mxu0 0.0
        %788 = vmatprep.subr.mxu0 0.0
        %789 = vmatpush1.msra.mxu0 0.0
        %790 = vmatprep.subr.mxu0 0.0
        %791 = vmatpush1.msra.mxu0 0.0
        %792 = vmatprep.subr.mxu0 0.0
        %793 = vmatpush1.msra.mxu0 0.0
        %794 = vmatprep.subr.mxu0 0.0
        %795 = vmatpush1.msra.mxu0 0.0
        %796 = vmatprep.subr.mxu0 0.0
        %797 = vmatpush1.msra.mxu0 0.0
        %798 = vmatprep.subr.mxu0 0.0
        %799 = vmatpush1.msra.mxu0 0.0
        %800 = vmatprep.subr.mxu0 0.0
        %801 = vmatpush1.msra.mxu0 0.0
        %802 = vmatprep.subr.mxu0 0.0
        %803 = vmatpush1.msra.mxu0 0.0
        %804 = vmatprep.subr.mxu0 0.0
        %805 = vmatpush1.msra.mxu0 0.0
        %806 = vmatprep.subr.mxu0 0.0
        %807 = vmatpush1.msra.mxu0 0.0
        %808 = vmatprep.subr.mxu0 0.0
        %809 = vmatpush1.msra.mxu0 0.0
        %810 = vmatprep.subr.mxu0 0.0
        %811 = vmatpush1.msra.mxu0 0.0
        %812 = vmatprep.subr.mxu0 0.0
        %813 = vmatpush1.msra.mxu0 0.0
        %814 = vmatprep.subr.mxu0 0.0
        %815 = vmatpush1.msra.mxu0 0.0
        %816 = vmatprep.subr.mxu0 0.0
        %817 = vmatpush1.msra.mxu0 0.0
        %818 = vmatprep.subr.mxu0 0.0
        %819 = vmatpush1.msra.mxu0 0.0
        %820 = vmatprep.subr.mxu0 0.0
        %821 = vmatpush1.msra.mxu0 0.0
        %822 = vmatprep.subr.mxu0 0.0
        %823 = vmatpush1.msra.mxu0 0.0
        %824 = vmatprep.subr.mxu0 0.0
        %825 = vmatpush1.msra.mxu0 0.0
        %826 = vmatprep.subr.mxu0 0.0
        %827 = vmatpush1.msra.mxu0 0.0
        %828 = vmatprep.subr.mxu0 0.0
        %829 = vmatpush1.msra.mxu0 0.0
        %830 = vmatprep.subr.mxu0 0.0
        %831 = vmatpush1.msra.mxu0 0.0
        %832 = vmatprep.subr.mxu0 0.0
        %833 = vmatpush1.msra.mxu0 0.0
        %834 = vmatprep.subr.mxu0 0.0
        %835 = vmatpush1.msra.mxu0 0.0
        %836 = vmatprep.subr.mxu0 0.0
        %837 = vmatpush1.msra.mxu0 0.0
        %838 = vmatprep.subr.mxu0 0.0
        %839 = vmatpush1.msra.mxu0 0.0
        %840 = vmatprep.mubr.f32.mxu0 0.0
        %841 = vmatmul.mubr.f32.gmra.mrb[0].mxu0 %v676
        %v842 = vpop.f32.mrb[0].mxu0
        %v843 = vadd.f32 0.0, %v842
        %v844 = vpop.f32.mrb[0].mxu0
        %v845 = vadd.f32 0.0, %v844
        %846 = vmatprep.mubr.f32.mxu0 0.0
        %847 = vmatmul.mubr.f32.gmra.mrb[0].mxu0 %v679
        %v848 = vpop.f32.mrb[0].mxu0
        %v849 = vadd.f32 0.0, %v848
        %v850 = vpop.f32.mrb[0].mxu0
        %v851 = vadd.f32 0.0, %v850
        %852 = vmatprep.mubr.f32.mxu0 0.0
        %853 = vmatmul.mubr.f32.gmra.mrb[0].mxu0 %v682
        %v854 = vpop.f32.mrb[0].mxu0
        %v855 = vadd.f32 0.0, %v854
        %v856 = vpop.f32.mrb[0].mxu0
        %v857 = vadd.f32 0.0, %v856
        %858 = vmatprep.mubr.f32.mxu0 0.0
        %859 = vmatmul.mubr.f32.gmra.mrb[0].mxu0 %v685
        %v860 = vpop.f32.mrb[0].mxu0
        %v861 = vadd.f32 0.0, %v860
        %v862 = vpop.f32.mrb[0].mxu0
        %v863 = vadd.f32 0.0, %v862
        %864 = vmatprep.mubr.f32.mxu0 0.0
        %865 = vmatmul.mubr.f32.gmra.mrb[0].mxu0 %v688
        %v866 = vpop.f32.mrb[0].mxu0
        %v867 = vadd.f32 0.0, %v866
        %v868 = vpop.f32.mrb[0].mxu0
        %v869 = vadd.f32 0.0, %v868
        %870 = vmatprep.mubr.f32.mxu0 0.0
        %871 = vmatmul.mubr.f32.gmra.mrb[0].mxu0 %v691
        %v872 = vpop.f32.mrb[0].mxu0
        %v873 = vadd.f32 0.0, %v872
        %v874 = vpop.f32.mrb[0].mxu0
        %v875 = vadd.f32 0.0, %v874
        %876 = vmatprep.mubr.f32.mxu0 0.0
        %877 = vmatmul.mubr.f32.gmra.mrb[0].mxu0 %v694
        %v878 = vpop.f32.mrb[0].mxu0
        %v879 = vadd.f32 0.0, %v878
        %v880 = vpop.f32.mrb[0].mxu0
        %v881 = vadd.f32 0.0, %v880
        %882 = vmatprep.mubr.f32.mxu0 0.0
        %883 = vmatmul.mubr.f32.gmra.mrb[0].mxu0 %v697
        %v884 = vpop.f32.mrb[0].mxu0
        %v885 = vadd.f32 0.0, %v884
        %v886 = vpop.f32.mrb[0].mxu0
        %v887 = vadd.f32 0.0, %v886
        %888 = vmatprep.mubr.f32.mxu0 0.0
        %889 = vmatmul.mubr.f32.gmra.mrb[0].mxu0 %v700
        %v890 = vpop.f32.mrb[0].mxu0
        %v891 = vadd.f32 0.0, %v890
        %v892 = vpop.f32.mrb[0].mxu0
        %v893 = vadd.f32 0.0, %v892
        %894 = vmatprep.mubr.f32.mxu0 0.0
        %895 = vmatmul.mubr.f32.gmra.mrb[0].mxu0 %v703
        %v896 = vpop.f32.mrb[0].mxu0
        %v897 = vadd.f32 0.0, %v896
        %v898 = vpop.f32.mrb[0].mxu0
        %v899 = vadd.f32 0.0, %v898
        %900 = vmatprep.mubr.f32.mxu0 0.0
        %901 = vmatmul.mubr.f32.gmra.mrb[0].mxu0 %v706
        %v902 = vpop.f32.mrb[0].mxu0
        %v903 = vadd.f32 0.0, %v902
        %v904 = vpop.f32.mrb[0].mxu0
        %v905 = vadd.f32 0.0, %v904
        %906 = vmatprep.mubr.f32.mxu0 0.0
        %907 = vmatmul.mubr.f32.gmra.mrb[0].mxu0 %v709
        %v908 = vpop.f32.mrb[0].mxu0
        %v909 = vadd.f32 0.0, %v908
        %v910 = vpop.f32.mrb[0].mxu0
        %v911 = vadd.f32 0.0, %v910
        %912 = vmatprep.mubr.f32.mxu0 0.0
        %913 = vmatmul.mubr.f32.gmra.mrb[0].mxu0 %v712
        %v914 = vpop.f32.mrb[0].mxu0
        %v915 = vadd.f32 0.0, %v914
        %v916 = vpop.f32.mrb[0].mxu0
        %v917 = vadd.f32 0.0, %v916
        %918 = vmatprep.mubr.f32.mxu0 0.0
        %919 = vmatmul.mubr.f32.gmra.mrb[0].mxu0 %v715
        %v920 = vpop.f32.mrb[0].mxu0
        %v921 = vadd.f32 0.0, %v920
        %v922 = vpop.f32.mrb[0].mxu0
        %v923 = vadd.f32 0.0, %v922
        %924 = vmatprep.mubr.f32.mxu0 0.0
        %925 = vmatmul.mubr.f32.gmra.mrb[0].mxu0 %v718
        %v926 = vpop.f32.mrb[0].mxu0
        %v927 = vadd.f32 0.0, %v926
        %v928 = vpop.f32.mrb[0].mxu0
        %v929 = vadd.f32 0.0, %v928
        %930 = vmatprep.mubr.f32.mxu0 0.0
        %931 = vmatmul.mubr.f32.gmra.mrb[0].mxu0 %v721
        %v932 = vpop.f32.mrb[0].mxu0
        %v933 = vadd.f32 0.0, %v932
        %v934 = vpop.f32.mrb[0].mxu0
        %v935 = vadd.f32 0.0, %v934
        %936 = vmatprep.mubr.f32.mxu0 0.0
        %937 = vmatmul.mubr.f32.gmra.mrb[0].mxu0 %v724
        %v938 = vpop.f32.mrb[0].mxu0
        %v939 = vadd.f32 0.0, %v938
        %v940 = vpop.f32.mrb[0].mxu0
        %v941 = vadd.f32 0.0, %v940
        %942 = vmatprep.mubr.f32.mxu0 0.0
        %943 = vmatmul.mubr.f32.gmra.mrb[0].mxu0 %v727
        %v944 = vpop.f32.mrb[0].mxu0
        %v945 = vadd.f32 0.0, %v944
        %v946 = vpop.f32.mrb[0].mxu0
        %v947 = vadd.f32 0.0, %v946
        %948 = vmatprep.mubr.f32.mxu0 0.0
        %949 = vmatmul.mubr.f32.gmra.mrb[0].mxu0 %v730
        %v950 = vpop.f32.mrb[0].mxu0
        %v951 = vadd.f32 0.0, %v950
        %v952 = vpop.f32.mrb[0].mxu0
        %v953 = vadd.f32 0.0, %v952
        %954 = vmatprep.mubr.f32.mxu0 0.0
        %955 = vmatmul.mubr.f32.gmra.mrb[0].mxu0 %v733
        %v956 = vpop.f32.mrb[0].mxu0
        %v957 = vadd.f32 0.0, %v956
        %v958 = vpop.f32.mrb[0].mxu0
        %v959 = vadd.f32 0.0, %v958
        %960 = vmatprep.mubr.f32.mxu0 0.0
        %961 = vmatmul.mubr.f32.gmra.mrb[0].mxu0 %v736
        %v962 = vpop.f32.mrb[0].mxu0
        %v963 = vadd.f32 0.0, %v962
        %v964 = vpop.f32.mrb[0].mxu0
        %v965 = vadd.f32 0.0, %v964
        %966 = vmatprep.mubr.f32.mxu0 0.0
        %967 = vmatmul.mubr.f32.gmra.mrb[0].mxu0 %v739
        %v968 = vpop.f32.mrb[0].mxu0
        %v969 = vadd.f32 0.0, %v968
        %v970 = vpop.f32.mrb[0].mxu0
        %v971 = vadd.f32 0.0, %v970
        %972 = vmatprep.mubr.f32.mxu0 0.0
        %973 = vmatmul.mubr.f32.gmra.mrb[0].mxu0 %v742
        %v974 = vpop.f32.mrb[0].mxu0
        %v975 = vadd.f32 0.0, %v974
        %v976 = vpop.f32.mrb[0].mxu0
        %v977 = vadd.f32 0.0, %v976
        %978 = vmatprep.mubr.f32.mxu0 0.0
        %979 = vmatmul.mubr.f32.gmra.mrb[0].mxu0 %v745
        %v980 = vpop.f32.mrb[0].mxu0
        %v981 = vadd.f32 0.0, %v980
        %v982 = vpop.f32.mrb[0].mxu0
        %v983 = vadd.f32 0.0, %v982
        %984 = vmatprep.mubr.f32.mxu0 0.0
        %985 = vmatmul.mubr.f32.gmra.mrb[0].mxu0 %v748
        %v986 = vpop.f32.mrb[0].mxu0
        %v987 = vadd.f32 0.0, %v986
        %v988 = vpop.f32.mrb[0].mxu0
        %v989 = vadd.f32 0.0, %v988
        %990 = vmatprep.mubr.f32.mxu0 0.0
        %991 = vmatmul.mubr.f32.gmra.mrb[0].mxu0 %v751
        %v992 = vpop.f32.mrb[0].mxu0
        %v993 = vadd.f32 0.0, %v992
        %v994 = vpop.f32.mrb[0].mxu0
        %v995 = vadd.f32 0.0, %v994
        %996 = vmatprep.mubr.f32.mxu0 0.0
        %997 = vmatmul.mubr.f32.gmra.mrb[0].mxu0 %v754
        %v998 = vpop.f32.mrb[0].mxu0
        %v999 = vadd.f32 0.0, %v998
        %v1000 = vpop.f32.mrb[0].mxu0
        %v1001 = vadd.f32 0.0, %v1000
        %1002 = vmatprep.mubr.f32.mxu0 0.0
        %1003 = vmatmul.mubr.f32.gmra.mrb[0].mxu0 %v757
        %v1004 = vpop.f32.mrb[0].mxu0
        %v1005 = vadd.f32 0.0, %v1004
        %v1006 = vpop.f32.mrb[0].mxu0
        %v1007 = vadd.f32 0.0, %v1006
        %1008 = vmatprep.mubr.f32.mxu0 0.0
        %1009 = vmatmul.mubr.f32.gmra.mrb[0].mxu0 %v760
        %v1010 = vpop.f32.mrb[0].mxu0
        %v1011 = vadd.f32 0.0, %v1010
        %v1012 = vpop.f32.mrb[0].mxu0
        %v1013 = vadd.f32 0.0, %v1012
        %1014 = vmatprep.mubr.f32.mxu0 0.0
        %1015 = vmatmul.mubr.f32.gmra.mrb[0].mxu0 %v763
        %v1016 = vpop.f32.mrb[0].mxu0
        %v1017 = vadd.f32 0.0, %v1016
        %v1018 = vpop.f32.mrb[0].mxu0
        %v1019 = vadd.f32 0.0, %v1018
        %1020 = vmatprep.mubr.f32.mxu0 0.0
        %1021 = vmatmul.mubr.f32.gmra.mrb[0].mxu0 %v766
        %v1022 = vpop.f32.mrb[0].mxu0
        %v1023 = vadd.f32 0.0, %v1022
        %v1024 = vpop.f32.mrb[0].mxu0
        %v1025 = vadd.f32 0.0, %v1024
        %1026 = vmatprep.mubr.f32.mxu0 0.0
        %1027 = vmatmul.mubr.f32.gmra.mrb[0].mxu0 %v769
        %v1028 = vpop.f32.mrb[0].mxu0
        %v1029 = vadd.f32 0.0, %v1028
        %v1030 = vpop.f32.mrb[0].mxu0
        %v1031 = vadd.f32 0.0, %v1030
        %1032 = vdwg.mxu0
        %v1033 = vpack.c.bf16 %v849, %v843
        %v1034 = vpack.c.bf16 %v851, %v845
        %v1035 = vpack.c.bf16 %v861, %v855
        %v1036 = vpack.c.bf16 %v863, %v857
        %v1037 = vpack.c.bf16 %v873, %v867
        %v1038 = vpack.c.bf16 %v875, %v869
        %v1039 = vpack.c.bf16 %v885, %v879
        %v1040 = vpack.c.bf16 %v887, %v881
        %v1041 = vpack.c.bf16 %v897, %v891
        %v1042 = vpack.c.bf16 %v899, %v893
        %v1043 = vpack.c.bf16 %v909, %v903
        %v1044 = vpack.c.bf16 %v911, %v905
        %v1045 = vpack.c.bf16 %v921, %v915
        %v1046 = vpack.c.bf16 %v923, %v917
        %v1047 = vpack.c.bf16 %v933, %v927
        %v1048 = vpack.c.bf16 %v935, %v929
        %v1049 = vpack.c.bf16 %v945, %v939
        %v1050 = vpack.c.bf16 %v947, %v941
        %v1051 = vpack.c.bf16 %v957, %v951
        %v1052 = vpack.c.bf16 %v959, %v953
        %v1053 = vpack.c.bf16 %v969, %v963
        %v1054 = vpack.c.bf16 %v971, %v965
        %v1055 = vpack.c.bf16 %v981, %v975
        %v1056 = vpack.c.bf16 %v983, %v977
        %v1057 = vpack.c.bf16 %v993, %v987
        %v1058 = vpack.c.bf16 %v995, %v989
        %v1059 = vpack.c.bf16 %v1005, %v999
        %v1060 = vpack.c.bf16 %v1007, %v1001
        %v1061 = vpack.c.bf16 %v1017, %v1011
        %v1062 = vpack.c.bf16 %v1019, %v1013
        %v1063 = vpack.c.bf16 %v1029, %v1023
        %v1064 = vpack.c.bf16 %v1031, %v1025
        %v1065 = vld [vmem:[#allocation2] sm:$0xff]
        %v1066 = vld [vmem:[#allocation2 + $0x8] sm:$0xff]
        %v1067 = vld [vmem:[#allocation2 + $0x10] sm:$0xff]
        %v1068 = vld [vmem:[#allocation2 + $0x18] sm:$0xff]
        %v1069 = vld [vmem:[#allocation2 + $0x20] sm:$0xff]
        %v1070 = vld [vmem:[#allocation2 + $0x28] sm:$0xff]
        %v1071 = vld [vmem:[#allocation2 + $0x30] sm:$0xff]
        %v1072 = vld [vmem:[#allocation2 + $0x38] sm:$0xff]
        %v1073 = vld [vmem:[#allocation2 + $0x40] sm:$0xff]
        %v1074 = vld [vmem:[#allocation2 + $0x48] sm:$0xff]
        %v1075 = vld [vmem:[#allocation2 + $0x50] sm:$0xff]
        %v1076 = vld [vmem:[#allocation2 + $0x58] sm:$0xff]
        %v1077 = vld [vmem:[#allocation2 + $0x60] sm:$0xff]
        %v1078 = vld [vmem:[#allocation2 + $0x68] sm:$0xff]
        %v1079 = vld [vmem:[#allocation2 + $0x70] sm:$0xff]
        %v1080 = vld [vmem:[#allocation2 + $0x78] sm:$0xff]
        %1081 = vxpose.xlu0.c.b16.start [1/8] %v1033, 128
        %1082 = vxpose.xlu0.c.b16.cont [2/8] %v1035, 128
        %1083 = vxpose.xlu0.c.b16.cont [3/8] 0, 128
        %1084 = vxpose.xlu0.c.b16.cont [4/8] 0, 128
        %1085 = vxpose.xlu0.c.b16.cont [5/8] 0, 128
        %1086 = vxpose.xlu0.c.b16.cont [6/8] 0, 128
        %1087 = vxpose.xlu0.c.b16.cont [7/8] 0, 128
        %1088 = vxpose.xlu0.c.b16.end [8/8] 0, 128
        %v1089 = vpop.trf.xlu0
        %v1090 = vpop.trf.xlu0
        %v1091 = vpop.trf.xlu0
        %v1092 = vpop.trf.xlu0
        %v1093 = vpop.trf.xlu0
        %v1094 = vpop.trf.xlu0
        %v1095 = vpop.trf.xlu0
        %v1096 = vpop.trf.xlu0
        %1097 = vxpose.xlu0.c.b16.start [1/8] %v1034, 128
        %1098 = vxpose.xlu0.c.b16.cont [2/8] %v1036, 128
        %1099 = vxpose.xlu0.c.b16.cont [3/8] 0, 128
        %1100 = vxpose.xlu0.c.b16.cont [4/8] 0, 128
        %1101 = vxpose.xlu0.c.b16.cont [5/8] 0, 128
        %1102 = vxpose.xlu0.c.b16.cont [6/8] 0, 128
        %1103 = vxpose.xlu0.c.b16.cont [7/8] 0, 128
        %1104 = vxpose.xlu0.c.b16.end [8/8] 0, 128
        %v1105 = vpop.trf.xlu0
        %v1106 = vpop.trf.xlu0
        %v1107 = vpop.trf.xlu0
        %v1108 = vpop.trf.xlu0
        %v1109 = vpop.trf.xlu0
        %v1110 = vpop.trf.xlu0
        %v1111 = vpop.trf.xlu0
        %v1112 = vpop.trf.xlu0
        %vm1113 = vcmask 261120
        %v1115 = vsel %vm1113, %v1089, 0
        %v1118 = vsel %vm1113, %v1090, 0
        %v1121 = vsel %vm1113, %v1091, 0
        %v1124 = vsel %vm1113, %v1092, 0
        %v1127 = vsel %vm1113, %v1093, 0
        %v1130 = vsel %vm1113, %v1094, 0
        %v1133 = vsel %vm1113, %v1095, 0
        %v1136 = vsel %vm1113, %v1096, 0
        %v1139 = vsel %vm1113, %v1105, 0
        %v1142 = vsel %vm1113, %v1106, 0
        %v1145 = vsel %vm1113, %v1107, 0
        %v1148 = vsel %vm1113, %v1108, 0
        %v1151 = vsel %vm1113, %v1109, 0
        %v1154 = vsel %vm1113, %v1110, 0
        %v1157 = vsel %vm1113, %v1111, 0
        %v1160 = vsel %vm1113, %v1112, 0
        %1162 = vmatprep.subr.bf16.mxu0 %v1066
        %1163 = vmatpush1.bf16.msra.mxu0 %v1065
        %1164 = vmatprep.subr.bf16.mxu0 %v1068
        %1165 = vmatpush1.bf16.msra.mxu0 %v1067
        %1166 = vmatprep.subr.bf16.mxu0 0
        %1167 = vmatpush1.bf16.msra.mxu0 0
        %1168 = vmatprep.subr.bf16.mxu0 0
        %1169 = vmatpush1.bf16.msra.mxu0 0
        %1170 = vmatprep.subr.bf16.mxu0 0
        %1171 = vmatpush1.bf16.msra.mxu0 0
        %1172 = vmatprep.subr.bf16.mxu0 0
        %1173 = vmatpush1.bf16.msra.mxu0 0
        %1174 = vmatprep.subr.bf16.mxu0 0
        %1175 = vmatpush1.bf16.msra.mxu0 0
        %1176 = vmatprep.subr.bf16.mxu0 0
        %1177 = vmatpush1.bf16.msra.mxu0 0
        %1178 = vmatprep.subr.bf16.mxu0 0
        %1179 = vmatpush1.bf16.msra.mxu0 0
        %1180 = vmatprep.subr.bf16.mxu0 0
        %1181 = vmatpush1.bf16.msra.mxu0 0
        %1182 = vmatprep.subr.bf16.mxu0 0
        %1183 = vmatpush1.bf16.msra.mxu0 0
        %1184 = vmatprep.subr.bf16.mxu0 0
        %1185 = vmatpush1.bf16.msra.mxu0 0
        %1186 = vmatprep.subr.bf16.mxu0 0
        %1187 = vmatpush1.bf16.msra.mxu0 0
        %1188 = vmatprep.subr.bf16.mxu0 0
        %1189 = vmatpush1.bf16.msra.mxu0 0
        %1190 = vmatprep.subr.bf16.mxu0 0
        %1191 = vmatpush1.bf16.msra.mxu0 0
        %1192 = vmatprep.subr.bf16.mxu0 0
        %1193 = vmatpush1.bf16.msra.mxu0 0
        %1194 = vmatprep.mubr.bf16.mxu0 0
        %1195 = vmatmul.mubr.bf16.gmra.mrb[0].mxu0 %v1115
        %v1196 = vpop.f32.mrb[0].mxu0
        %v1197 = vadd.f32 0.0, %v1196
        %v1198 = vpop.f32.mrb[0].mxu0
        %v1199 = vadd.f32 0.0, %v1198
        %v1200 = vpop.f32.mrb[0].mxu0
        %v1201 = vadd.f32 0.0, %v1200
        %v1202 = vpop.f32.mrb[0].mxu0
        %v1203 = vadd.f32 0.0, %v1202
        %1204 = vmatprep.mubr.bf16.mxu0 0
        %1205 = vmatmul.mubr.bf16.gmra.mrb[0].mxu0 %v1118
        %v1206 = vpop.f32.mrb[0].mxu0
        %v1207 = vadd.f32 0.0, %v1206
        %v1208 = vpop.f32.mrb[0].mxu0
        %v1209 = vadd.f32 0.0, %v1208
        %v1210 = vpop.f32.mrb[0].mxu0
        %v1211 = vadd.f32 0.0, %v1210
        %v1212 = vpop.f32.mrb[0].mxu0
        %v1213 = vadd.f32 0.0, %v1212
        %1214 = vmatprep.mubr.bf16.mxu0 0
        %1215 = vmatmul.mubr.bf16.gmra.mrb[0].mxu0 %v1121
        %v1216 = vpop.f32.mrb[0].mxu0
        %v1217 = vadd.f32 0.0, %v1216
        %v1218 = vpop.f32.mrb[0].mxu0
        %v1219 = vadd.f32 0.0, %v1218
        %v1220 = vpop.f32.mrb[0].mxu0
        %v1221 = vadd.f32 0.0, %v1220
        %v1222 = vpop.f32.mrb[0].mxu0
        %v1223 = vadd.f32 0.0, %v1222
        %1224 = vmatprep.mubr.bf16.mxu0 0
        %1225 = vmatmul.mubr.bf16.gmra.mrb[0].mxu0 %v1124
        %v1226 = vpop.f32.mrb[0].mxu0
        %v1227 = vadd.f32 0.0, %v1226
        %v1228 = vpop.f32.mrb[0].mxu0
        %v1229 = vadd.f32 0.0, %v1228
        %v1230 = vpop.f32.mrb[0].mxu0
        %v1231 = vadd.f32 0.0, %v1230
        %v1232 = vpop.f32.mrb[0].mxu0
        %v1233 = vadd.f32 0.0, %v1232
        %1234 = vmatprep.mubr.bf16.mxu0 0
        %1235 = vmatmul.mubr.bf16.gmra.mrb[0].mxu0 %v1127
        %v1236 = vpop.f32.mrb[0].mxu0
        %v1237 = vadd.f32 0.0, %v1236
        %v1238 = vpop.f32.mrb[0].mxu0
        %v1239 = vadd.f32 0.0, %v1238
        %v1240 = vpop.f32.mrb[0].mxu0
        %v1241 = vadd.f32 0.0, %v1240
        %v1242 = vpop.f32.mrb[0].mxu0
        %v1243 = vadd.f32 0.0, %v1242
        %1244 = vmatprep.mubr.bf16.mxu0 0
        %1245 = vmatmul.mubr.bf16.gmra.mrb[0].mxu0 %v1130
        %v1246 = vpop.f32.mrb[0].mxu0
        %v1247 = vadd.f32 0.0, %v1246
        %v1248 = vpop.f32.mrb[0].mxu0
        %v1249 = vadd.f32 0.0, %v1248
        %v1250 = vpop.f32.mrb[0].mxu0
        %v1251 = vadd.f32 0.0, %v1250
        %v1252 = vpop.f32.mrb[0].mxu0
        %v1253 = vadd.f32 0.0, %v1252
        %1254 = vmatprep.mubr.bf16.mxu0 0
        %1255 = vmatmul.mubr.bf16.gmra.mrb[0].mxu0 %v1133
        %v1256 = vpop.f32.mrb[0].mxu0
        %v1257 = vadd.f32 0.0, %v1256
        %v1258 = vpop.f32.mrb[0].mxu0
        %v1259 = vadd.f32 0.0, %v1258
        %v1260 = vpop.f32.mrb[0].mxu0
        %v1261 = vadd.f32 0.0, %v1260
        %v1262 = vpop.f32.mrb[0].mxu0
        %v1263 = vadd.f32 0.0, %v1262
        %1264 = vmatprep.mubr.bf16.mxu0 0
        %1265 = vmatmul.mubr.bf16.gmra.mrb[0].mxu0 %v1136
        %v1266 = vpop.f32.mrb[0].mxu0
        %v1267 = vadd.f32 0.0, %v1266
        %v1268 = vpop.f32.mrb[0].mxu0
        %v1269 = vadd.f32 0.0, %v1268
        %v1270 = vpop.f32.mrb[0].mxu0
        %v1271 = vadd.f32 0.0, %v1270
        %v1272 = vpop.f32.mrb[0].mxu0
        %v1273 = vadd.f32 0.0, %v1272
        %1274 = vmatprep.mubr.bf16.mxu0 0
        %1275 = vmatmul.mubr.bf16.gmra.mrb[0].mxu0 %v1139
        %v1276 = vpop.f32.mrb[0].mxu0
        %v1277 = vadd.f32 0.0, %v1276
        %v1278 = vpop.f32.mrb[0].mxu0
        %v1279 = vadd.f32 0.0, %v1278
        %v1280 = vpop.f32.mrb[0].mxu0
        %v1281 = vadd.f32 0.0, %v1280
        %v1282 = vpop.f32.mrb[0].mxu0
        %v1283 = vadd.f32 0.0, %v1282
        %1284 = vmatprep.mubr.bf16.mxu0 0
        %1285 = vmatmul.mubr.bf16.gmra.mrb[0].mxu0 %v1142
        %v1286 = vpop.f32.mrb[0].mxu0
        %v1287 = vadd.f32 0.0, %v1286
        %v1288 = vpop.f32.mrb[0].mxu0
        %v1289 = vadd.f32 0.0, %v1288
        %v1290 = vpop.f32.mrb[0].mxu0
        %v1291 = vadd.f32 0.0, %v1290
        %v1292 = vpop.f32.mrb[0].mxu0
        %v1293 = vadd.f32 0.0, %v1292
        %1294 = vmatprep.mubr.bf16.mxu0 0
        %1295 = vmatmul.mubr.bf16.gmra.mrb[0].mxu0 %v1145
        %v1296 = vpop.f32.mrb[0].mxu0
        %v1297 = vadd.f32 0.0, %v1296
        %v1298 = vpop.f32.mrb[0].mxu0
        %v1299 = vadd.f32 0.0, %v1298
        %v1300 = vpop.f32.mrb[0].mxu0
        %v1301 = vadd.f32 0.0, %v1300
        %v1302 = vpop.f32.mrb[0].mxu0
        %v1303 = vadd.f32 0.0, %v1302
        %1304 = vmatprep.mubr.bf16.mxu0 0
        %1305 = vmatmul.mubr.bf16.gmra.mrb[0].mxu0 %v1148
        %v1306 = vpop.f32.mrb[0].mxu0
        %v1307 = vadd.f32 0.0, %v1306
        %v1308 = vpop.f32.mrb[0].mxu0
        %v1309 = vadd.f32 0.0, %v1308
        %v1310 = vpop.f32.mrb[0].mxu0
        %v1311 = vadd.f32 0.0, %v1310
        %v1312 = vpop.f32.mrb[0].mxu0
        %v1313 = vadd.f32 0.0, %v1312
        %1314 = vmatprep.mubr.bf16.mxu0 0
        %1315 = vmatmul.mubr.bf16.gmra.mrb[0].mxu0 %v1151
        %v1316 = vpop.f32.mrb[0].mxu0
        %v1317 = vadd.f32 0.0, %v1316
        %v1318 = vpop.f32.mrb[0].mxu0
        %v1319 = vadd.f32 0.0, %v1318
        %v1320 = vpop.f32.mrb[0].mxu0
        %v1321 = vadd.f32 0.0, %v1320
        %v1322 = vpop.f32.mrb[0].mxu0
        %v1323 = vadd.f32 0.0, %v1322
        %1324 = vmatprep.mubr.bf16.mxu0 0
        %1325 = vmatmul.mubr.bf16.gmra.mrb[0].mxu0 %v1154
        %v1326 = vpop.f32.mrb[0].mxu0
        %v1327 = vadd.f32 0.0, %v1326
        %v1328 = vpop.f32.mrb[0].mxu0
        %v1329 = vadd.f32 0.0, %v1328
        %v1330 = vpop.f32.mrb[0].mxu0
        %v1331 = vadd.f32 0.0, %v1330
        %v1332 = vpop.f32.mrb[0].mxu0
        %v1333 = vadd.f32 0.0, %v1332
        %1334 = vmatprep.mubr.bf16.mxu0 0
        %1335 = vmatmul.mubr.bf16.gmra.mrb[0].mxu0 %v1157
        %v1336 = vpop.f32.mrb[0].mxu0
        %v1337 = vadd.f32 0.0, %v1336
        %v1338 = vpop.f32.mrb[0].mxu0
        %v1339 = vadd.f32 0.0, %v1338
        %v1340 = vpop.f32.mrb[0].mxu0
        %v1341 = vadd.f32 0.0, %v1340
        %v1342 = vpop.f32.mrb[0].mxu0
        %v1343 = vadd.f32 0.0, %v1342
        %1344 = vmatprep.mubr.bf16.mxu0 0
        %1345 = vmatmul.mubr.bf16.gmra.mrb[0].mxu0 %v1160
        %v1346 = vpop.f32.mrb[0].mxu0
        %v1347 = vadd.f32 0.0, %v1346
        %v1348 = vpop.f32.mrb[0].mxu0
        %v1349 = vadd.f32 0.0, %v1348
        %v1350 = vpop.f32.mrb[0].mxu0
        %v1351 = vadd.f32 0.0, %v1350
        %v1352 = vpop.f32.mrb[0].mxu0
        %v1353 = vadd.f32 0.0, %v1352
        %1354 = vdwg.mxu0
        %1355 = vxpose.xlu0.c.b16.start [1/8] %v1037, 128
        %1356 = vxpose.xlu0.c.b16.cont [2/8] %v1039, 128
        %1357 = vxpose.xlu0.c.b16.cont [3/8] 0, 128
        %1358 = vxpose.xlu0.c.b16.cont [4/8] 0, 128
        %1359 = vxpose.xlu0.c.b16.cont [5/8] 0, 128
        %1360 = vxpose.xlu0.c.b16.cont [6/8] 0, 128
        %1361 = vxpose.xlu0.c.b16.cont [7/8] 0, 128
        %1362 = vxpose.xlu0.c.b16.end [8/8] 0, 128
        %v1363 = vpop.trf.xlu0
        %v1364 = vpop.trf.xlu0
        %v1365 = vpop.trf.xlu0
        %v1366 = vpop.trf.xlu0
        %v1367 = vpop.trf.xlu0
        %v1368 = vpop.trf.xlu0
        %v1369 = vpop.trf.xlu0
        %v1370 = vpop.trf.xlu0
        %1371 = vxpose.xlu0.c.b16.start [1/8] %v1038, 128
        %1372 = vxpose.xlu0.c.b16.cont [2/8] %v1040, 128
        %1373 = vxpose.xlu0.c.b16.cont [3/8] 0, 128
        %1374 = vxpose.xlu0.c.b16.cont [4/8] 0, 128
        %1375 = vxpose.xlu0.c.b16.cont [5/8] 0, 128
        %1376 = vxpose.xlu0.c.b16.cont [6/8] 0, 128
        %1377 = vxpose.xlu0.c.b16.cont [7/8] 0, 128
        %1378 = vxpose.xlu0.c.b16.end [8/8] 0, 128
        %v1379 = vpop.trf.xlu0
        %v1380 = vpop.trf.xlu0
        %v1381 = vpop.trf.xlu0
        %v1382 = vpop.trf.xlu0
        %v1383 = vpop.trf.xlu0
        %v1384 = vpop.trf.xlu0
        %v1385 = vpop.trf.xlu0
        %v1386 = vpop.trf.xlu0
        %v1388 = vsel %vm1113, %v1363, 0
        %v1391 = vsel %vm1113, %v1364, 0
        %v1394 = vsel %vm1113, %v1365, 0
        %v1397 = vsel %vm1113, %v1366, 0
        %v1400 = vsel %vm1113, %v1367, 0
        %v1403 = vsel %vm1113, %v1368, 0
        %v1406 = vsel %vm1113, %v1369, 0
        %v1409 = vsel %vm1113, %v1370, 0
        %v1412 = vsel %vm1113, %v1379, 0
        %v1415 = vsel %vm1113, %v1380, 0
        %v1418 = vsel %vm1113, %v1381, 0
        %v1421 = vsel %vm1113, %v1382, 0
        %v1424 = vsel %vm1113, %v1383, 0
        %v1427 = vsel %vm1113, %v1384, 0
        %v1430 = vsel %vm1113, %v1385, 0
        %v1433 = vsel %vm1113, %v1386, 0
        %1435 = vmatprep.subr.bf16.mxu0 %v1070
        %1436 = vmatpush1.bf16.msra.mxu0 %v1069
        %1437 = vmatprep.subr.bf16.mxu0 %v1072
        %1438 = vmatpush1.bf16.msra.mxu0 %v1071
        %1439 = vmatprep.subr.bf16.mxu0 0
        %1440 = vmatpush1.bf16.msra.mxu0 0
        %1441 = vmatprep.subr.bf16.mxu0 0
        %1442 = vmatpush1.bf16.msra.mxu0 0
        %1443 = vmatprep.subr.bf16.mxu0 0
        %1444 = vmatpush1.bf16.msra.mxu0 0
        %1445 = vmatprep.subr.bf16.mxu0 0
        %1446 = vmatpush1.bf16.msra.mxu0 0
        %1447 = vmatprep.subr.bf16.mxu0 0
        %1448 = vmatpush1.bf16.msra.mxu0 0
        %1449 = vmatprep.subr.bf16.mxu0 0
        %1450 = vmatpush1.bf16.msra.mxu0 0
        %1451 = vmatprep.subr.bf16.mxu0 0
        %1452 = vmatpush1.bf16.msra.mxu0 0
        %1453 = vmatprep.subr.bf16.mxu0 0
        %1454 = vmatpush1.bf16.msra.mxu0 0
        %1455 = vmatprep.subr.bf16.mxu0 0
        %1456 = vmatpush1.bf16.msra.mxu0 0
        %1457 = vmatprep.subr.bf16.mxu0 0
        %1458 = vmatpush1.bf16.msra.mxu0 0
        %1459 = vmatprep.subr.bf16.mxu0 0
        %1460 = vmatpush1.bf16.msra.mxu0 0
        %1461 = vmatprep.subr.bf16.mxu0 0
        %1462 = vmatpush1.bf16.msra.mxu0 0
        %1463 = vmatprep.subr.bf16.mxu0 0
        %1464 = vmatpush1.bf16.msra.mxu0 0
        %1465 = vmatprep.subr.bf16.mxu0 0
        %1466 = vmatpush1.bf16.msra.mxu0 0
        %1467 = vmatprep.mubr.bf16.mxu0 0
        %1468 = vmatmul.mubr.bf16.gmra.mrb[0].mxu0 %v1388
        %v1469 = vpop.f32.mrb[0].mxu0
        %v1470 = vadd.f32 0.0, %v1469
        %v1471 = vpop.f32.mrb[0].mxu0
        %v1472 = vadd.f32 0.0, %v1471
        %v1473 = vpop.f32.mrb[0].mxu0
        %v1474 = vadd.f32 0.0, %v1473
        %v1475 = vpop.f32.mrb[0].mxu0
        %v1476 = vadd.f32 0.0, %v1475
        %1477 = vmatprep.mubr.bf16.mxu0 0
        %1478 = vmatmul.mubr.bf16.gmra.mrb[0].mxu0 %v1391
        %v1479 = vpop.f32.mrb[0].mxu0
        %v1480 = vadd.f32 0.0, %v1479
        %v1481 = vpop.f32.mrb[0].mxu0
        %v1482 = vadd.f32 0.0, %v1481
        %v1483 = vpop.f32.mrb[0].mxu0
        %v1484 = vadd.f32 0.0, %v1483
        %v1485 = vpop.f32.mrb[0].mxu0
        %v1486 = vadd.f32 0.0, %v1485
        %1487 = vmatprep.mubr.bf16.mxu0 0
        %1488 = vmatmul.mubr.bf16.gmra.mrb[0].mxu0 %v1394
        %v1489 = vpop.f32.mrb[0].mxu0
        %v1490 = vadd.f32 0.0, %v1489
        %v1491 = vpop.f32.mrb[0].mxu0
        %v1492 = vadd.f32 0.0, %v1491
        %v1493 = vpop.f32.mrb[0].mxu0
        %v1494 = vadd.f32 0.0, %v1493
        %v1495 = vpop.f32.mrb[0].mxu0
        %v1496 = vadd.f32 0.0, %v1495
        %1497 = vmatprep.mubr.bf16.mxu0 0
        %1498 = vmatmul.mubr.bf16.gmra.mrb[0].mxu0 %v1397
        %v1499 = vpop.f32.mrb[0].mxu0
        %v1500 = vadd.f32 0.0, %v1499
        %v1501 = vpop.f32.mrb[0].mxu0
        %v1502 = vadd.f32 0.0, %v1501
        %v1503 = vpop.f32.mrb[0].mxu0
        %v1504 = vadd.f32 0.0, %v1503
        %v1505 = vpop.f32.mrb[0].mxu0
        %v1506 = vadd.f32 0.0, %v1505
        %1507 = vmatprep.mubr.bf16.mxu0 0
        %1508 = vmatmul.mubr.bf16.gmra.mrb[0].mxu0 %v1400
        %v1509 = vpop.f32.mrb[0].mxu0
        %v1510 = vadd.f32 0.0, %v1509
        %v1511 = vpop.f32.mrb[0].mxu0
        %v1512 = vadd.f32 0.0, %v1511
        %v1513 = vpop.f32.mrb[0].mxu0
        %v1514 = vadd.f32 0.0, %v1513
        %v1515 = vpop.f32.mrb[0].mxu0
        %v1516 = vadd.f32 0.0, %v1515
        %1517 = vmatprep.mubr.bf16.mxu0 0
        %1518 = vmatmul.mubr.bf16.gmra.mrb[0].mxu0 %v1403
        %v1519 = vpop.f32.mrb[0].mxu0
        %v1520 = vadd.f32 0.0, %v1519
        %v1521 = vpop.f32.mrb[0].mxu0
        %v1522 = vadd.f32 0.0, %v1521
        %v1523 = vpop.f32.mrb[0].mxu0
        %v1524 = vadd.f32 0.0, %v1523
        %v1525 = vpop.f32.mrb[0].mxu0
        %v1526 = vadd.f32 0.0, %v1525
        %1527 = vmatprep.mubr.bf16.mxu0 0
        %1528 = vmatmul.mubr.bf16.gmra.mrb[0].mxu0 %v1406
        %v1529 = vpop.f32.mrb[0].mxu0
        %v1530 = vadd.f32 0.0, %v1529
        %v1531 = vpop.f32.mrb[0].mxu0
        %v1532 = vadd.f32 0.0, %v1531
        %v1533 = vpop.f32.mrb[0].mxu0
        %v1534 = vadd.f32 0.0, %v1533
        %v1535 = vpop.f32.mrb[0].mxu0
        %v1536 = vadd.f32 0.0, %v1535
        %1537 = vmatprep.mubr.bf16.mxu0 0
        %1538 = vmatmul.mubr.bf16.gmra.mrb[0].mxu0 %v1409
        %v1539 = vpop.f32.mrb[0].mxu0
        %v1540 = vadd.f32 0.0, %v1539
        %v1541 = vpop.f32.mrb[0].mxu0
        %v1542 = vadd.f32 0.0, %v1541
        %v1543 = vpop.f32.mrb[0].mxu0
        %v1544 = vadd.f32 0.0, %v1543
        %v1545 = vpop.f32.mrb[0].mxu0
        %v1546 = vadd.f32 0.0, %v1545
        %1547 = vmatprep.mubr.bf16.mxu0 0
        %1548 = vmatmul.mubr.bf16.gmra.mrb[0].mxu0 %v1412
        %v1549 = vpop.f32.mrb[0].mxu0
        %v1550 = vadd.f32 0.0, %v1549
        %v1551 = vpop.f32.mrb[0].mxu0
        %v1552 = vadd.f32 0.0, %v1551
        %v1553 = vpop.f32.mrb[0].mxu0
        %v1554 = vadd.f32 0.0, %v1553
        %v1555 = vpop.f32.mrb[0].mxu0
        %v1556 = vadd.f32 0.0, %v1555
        %1557 = vmatprep.mubr.bf16.mxu0 0
        %1558 = vmatmul.mubr.bf16.gmra.mrb[0].mxu0 %v1415
        %v1559 = vpop.f32.mrb[0].mxu0
        %v1560 = vadd.f32 0.0, %v1559
        %v1561 = vpop.f32.mrb[0].mxu0
        %v1562 = vadd.f32 0.0, %v1561
        %v1563 = vpop.f32.mrb[0].mxu0
        %v1564 = vadd.f32 0.0, %v1563
        %v1565 = vpop.f32.mrb[0].mxu0
        %v1566 = vadd.f32 0.0, %v1565
        %1567 = vmatprep.mubr.bf16.mxu0 0
        %1568 = vmatmul.mubr.bf16.gmra.mrb[0].mxu0 %v1418
        %v1569 = vpop.f32.mrb[0].mxu0
        %v1570 = vadd.f32 0.0, %v1569
        %v1571 = vpop.f32.mrb[0].mxu0
        %v1572 = vadd.f32 0.0, %v1571
        %v1573 = vpop.f32.mrb[0].mxu0
        %v1574 = vadd.f32 0.0, %v1573
        %v1575 = vpop.f32.mrb[0].mxu0
        %v1576 = vadd.f32 0.0, %v1575
        %1577 = vmatprep.mubr.bf16.mxu0 0
        %1578 = vmatmul.mubr.bf16.gmra.mrb[0].mxu0 %v1421
        %v1579 = vpop.f32.mrb[0].mxu0
        %v1580 = vadd.f32 0.0, %v1579
        %v1581 = vpop.f32.mrb[0].mxu0
        %v1582 = vadd.f32 0.0, %v1581
        %v1583 = vpop.f32.mrb[0].mxu0
        %v1584 = vadd.f32 0.0, %v1583
        %v1585 = vpop.f32.mrb[0].mxu0
        %v1586 = vadd.f32 0.0, %v1585
        %1587 = vmatprep.mubr.bf16.mxu0 0
        %1588 = vmatmul.mubr.bf16.gmra.mrb[0].mxu0 %v1424
        %v1589 = vpop.f32.mrb[0].mxu0
        %v1590 = vadd.f32 0.0, %v1589
        %v1591 = vpop.f32.mrb[0].mxu0
        %v1592 = vadd.f32 0.0, %v1591
        %v1593 = vpop.f32.mrb[0].mxu0
        %v1594 = vadd.f32 0.0, %v1593
        %v1595 = vpop.f32.mrb[0].mxu0
        %v1596 = vadd.f32 0.0, %v1595
        %1597 = vmatprep.mubr.bf16.mxu0 0
        %1598 = vmatmul.mubr.bf16.gmra.mrb[0].mxu0 %v1427
        %v1599 = vpop.f32.mrb[0].mxu0
        %v1600 = vadd.f32 0.0, %v1599
        %v1601 = vpop.f32.mrb[0].mxu0
        %v1602 = vadd.f32 0.0, %v1601
        %v1603 = vpop.f32.mrb[0].mxu0
        %v1604 = vadd.f32 0.0, %v1603
        %v1605 = vpop.f32.mrb[0].mxu0
        %v1606 = vadd.f32 0.0, %v1605
        %1607 = vmatprep.mubr.bf16.mxu0 0
        %1608 = vmatmul.mubr.bf16.gmra.mrb[0].mxu0 %v1430
        %v1609 = vpop.f32.mrb[0].mxu0
        %v1610 = vadd.f32 0.0, %v1609
        %v1611 = vpop.f32.mrb[0].mxu0
        %v1612 = vadd.f32 0.0, %v1611
        %v1613 = vpop.f32.mrb[0].mxu0
        %v1614 = vadd.f32 0.0, %v1613
        %v1615 = vpop.f32.mrb[0].mxu0
        %v1616 = vadd.f32 0.0, %v1615
        %1617 = vmatprep.mubr.bf16.mxu0 0
        %1618 = vmatmul.mubr.bf16.gmra.mrb[0].mxu0 %v1433
        %v1619 = vpop.f32.mrb[0].mxu0
        %v1620 = vadd.f32 0.0, %v1619
        %v1621 = vpop.f32.mrb[0].mxu0
        %v1622 = vadd.f32 0.0, %v1621
        %v1623 = vpop.f32.mrb[0].mxu0
        %v1624 = vadd.f32 0.0, %v1623
        %v1625 = vpop.f32.mrb[0].mxu0
        %v1626 = vadd.f32 0.0, %v1625
        %1627 = vdwg.mxu0
        %1628 = vxpose.xlu0.c.b16.start [1/8] %v1041, 128
        %1629 = vxpose.xlu0.c.b16.cont [2/8] %v1043, 128
        %1630 = vxpose.xlu0.c.b16.cont [3/8] 0, 128
        %1631 = vxpose.xlu0.c.b16.cont [4/8] 0, 128
        %1632 = vxpose.xlu0.c.b16.cont [5/8] 0, 128
        %1633 = vxpose.xlu0.c.b16.cont [6/8] 0, 128
        %1634 = vxpose.xlu0.c.b16.cont [7/8] 0, 128
        %1635 = vxpose.xlu0.c.b16.end [8/8] 0, 128
        %v1636 = vpop.trf.xlu0
        %v1637 = vpop.trf.xlu0
        %v1638 = vpop.trf.xlu0
        %v1639 = vpop.trf.xlu0
        %v1640 = vpop.trf.xlu0
        %v1641 = vpop.trf.xlu0
        %v1642 = vpop.trf.xlu0
        %v1643 = vpop.trf.xlu0
        %1644 = vxpose.xlu0.c.b16.start [1/8] %v1042, 128
        %1645 = vxpose.xlu0.c.b16.cont [2/8] %v1044, 128
        %1646 = vxpose.xlu0.c.b16.cont [3/8] 0, 128
        %1647 = vxpose.xlu0.c.b16.cont [4/8] 0, 128
        %1648 = vxpose.xlu0.c.b16.cont [5/8] 0, 128
        %1649 = vxpose.xlu0.c.b16.cont [6/8] 0, 128
        %1650 = vxpose.xlu0.c.b16.cont [7/8] 0, 128
        %1651 = vxpose.xlu0.c.b16.end [8/8] 0, 128
        %v1652 = vpop.trf.xlu0
        %v1653 = vpop.trf.xlu0
        %v1654 = vpop.trf.xlu0
        %v1655 = vpop.trf.xlu0
        %v1656 = vpop.trf.xlu0
        %v1657 = vpop.trf.xlu0
        %v1658 = vpop.trf.xlu0
        %v1659 = vpop.trf.xlu0
        %v1661 = vsel %vm1113, %v1636, 0
        %v1664 = vsel %vm1113, %v1637, 0
        %v1667 = vsel %vm1113, %v1638, 0
        %v1670 = vsel %vm1113, %v1639, 0
        %v1673 = vsel %vm1113, %v1640, 0
        %v1676 = vsel %vm1113, %v1641, 0
        %v1679 = vsel %vm1113, %v1642, 0
        %v1682 = vsel %vm1113, %v1643, 0
        %v1685 = vsel %vm1113, %v1652, 0
        %v1688 = vsel %vm1113, %v1653, 0
        %v1691 = vsel %vm1113, %v1654, 0
        %v1694 = vsel %vm1113, %v1655, 0
        %v1697 = vsel %vm1113, %v1656, 0
        %v1700 = vsel %vm1113, %v1657, 0
        %v1703 = vsel %vm1113, %v1658, 0
        %v1706 = vsel %vm1113, %v1659, 0
        %1708 = vmatprep.subr.bf16.mxu0 %v1074
        %1709 = vmatpush1.bf16.msra.mxu0 %v1073
        %1710 = vmatprep.subr.bf16.mxu0 %v1076
        %1711 = vmatpush1.bf16.msra.mxu0 %v1075
        %1712 = vmatprep.subr.bf16.mxu0 0
        %1713 = vmatpush1.bf16.msra.mxu0 0
        %1714 = vmatprep.subr.bf16.mxu0 0
        %1715 = vmatpush1.bf16.msra.mxu0 0
        %1716 = vmatprep.subr.bf16.mxu0 0
        %1717 = vmatpush1.bf16.msra.mxu0 0
        %1718 = vmatprep.subr.bf16.mxu0 0
        %1719 = vmatpush1.bf16.msra.mxu0 0
        %1720 = vmatprep.subr.bf16.mxu0 0
        %1721 = vmatpush1.bf16.msra.mxu0 0
        %1722 = vmatprep.subr.bf16.mxu0 0
        %1723 = vmatpush1.bf16.msra.mxu0 0
        %1724 = vmatprep.subr.bf16.mxu0 0
        %1725 = vmatpush1.bf16.msra.mxu0 0
        %1726 = vmatprep.subr.bf16.mxu0 0
        %1727 = vmatpush1.bf16.msra.mxu0 0
        %1728 = vmatprep.subr.bf16.mxu0 0
        %1729 = vmatpush1.bf16.msra.mxu0 0
        %1730 = vmatprep.subr.bf16.mxu0 0
        %1731 = vmatpush1.bf16.msra.mxu0 0
        %1732 = vmatprep.subr.bf16.mxu0 0
        %1733 = vmatpush1.bf16.msra.mxu0 0
        %1734 = vmatprep.subr.bf16.mxu0 0
        %1735 = vmatpush1.bf16.msra.mxu0 0
        %1736 = vmatprep.subr.bf16.mxu0 0
        %1737 = vmatpush1.bf16.msra.mxu0 0
        %1738 = vmatprep.subr.bf16.mxu0 0
        %1739 = vmatpush1.bf16.msra.mxu0 0
        %1740 = vmatprep.mubr.bf16.mxu0 0
        %1741 = vmatmul.mubr.bf16.gmra.mrb[0].mxu0 %v1661
        %v1742 = vpop.f32.mrb[0].mxu0
        %v1743 = vadd.f32 0.0, %v1742
        %v1744 = vpop.f32.mrb[0].mxu0
        %v1745 = vadd.f32 0.0, %v1744
        %v1746 = vpop.f32.mrb[0].mxu0
        %v1747 = vadd.f32 0.0, %v1746
        %v1748 = vpop.f32.mrb[0].mxu0
        %v1749 = vadd.f32 0.0, %v1748
        %1750 = vmatprep.mubr.bf16.mxu0 0
        %1751 = vmatmul.mubr.bf16.gmra.mrb[0].mxu0 %v1664
        %v1752 = vpop.f32.mrb[0].mxu0
        %v1753 = vadd.f32 0.0, %v1752
        %v1754 = vpop.f32.mrb[0].mxu0
        %v1755 = vadd.f32 0.0, %v1754
        %v1756 = vpop.f32.mrb[0].mxu0
        %v1757 = vadd.f32 0.0, %v1756
        %v1758 = vpop.f32.mrb[0].mxu0
        %v1759 = vadd.f32 0.0, %v1758
        %1760 = vmatprep.mubr.bf16.mxu0 0
        %1761 = vmatmul.mubr.bf16.gmra.mrb[0].mxu0 %v1667
        %v1762 = vpop.f32.mrb[0].mxu0
        %v1763 = vadd.f32 0.0, %v1762
        %v1764 = vpop.f32.mrb[0].mxu0
        %v1765 = vadd.f32 0.0, %v1764
        %v1766 = vpop.f32.mrb[0].mxu0
        %v1767 = vadd.f32 0.0, %v1766
        %v1768 = vpop.f32.mrb[0].mxu0
        %v1769 = vadd.f32 0.0, %v1768
        %1770 = vmatprep.mubr.bf16.mxu0 0
        %1771 = vmatmul.mubr.bf16.gmra.mrb[0].mxu0 %v1670
        %v1772 = vpop.f32.mrb[0].mxu0
        %v1773 = vadd.f32 0.0, %v1772
        %v1774 = vpop.f32.mrb[0].mxu0
        %v1775 = vadd.f32 0.0, %v1774
        %v1776 = vpop.f32.mrb[0].mxu0
        %v1777 = vadd.f32 0.0, %v1776
        %v1778 = vpop.f32.mrb[0].mxu0
        %v1779 = vadd.f32 0.0, %v1778
        %1780 = vmatprep.mubr.bf16.mxu0 0
        %1781 = vmatmul.mubr.bf16.gmra.mrb[0].mxu0 %v1673
        %v1782 = vpop.f32.mrb[0].mxu0
        %v1783 = vadd.f32 0.0, %v1782
        %v1784 = vpop.f32.mrb[0].mxu0
        %v1785 = vadd.f32 0.0, %v1784
        %v1786 = vpop.f32.mrb[0].mxu0
        %v1787 = vadd.f32 0.0, %v1786
        %v1788 = vpop.f32.mrb[0].mxu0
        %v1789 = vadd.f32 0.0, %v1788
        %1790 = vmatprep.mubr.bf16.mxu0 0
        %1791 = vmatmul.mubr.bf16.gmra.mrb[0].mxu0 %v1676
        %v1792 = vpop.f32.mrb[0].mxu0
        %v1793 = vadd.f32 0.0, %v1792
        %v1794 = vpop.f32.mrb[0].mxu0
        %v1795 = vadd.f32 0.0, %v1794
        %v1796 = vpop.f32.mrb[0].mxu0
        %v1797 = vadd.f32 0.0, %v1796
        %v1798 = vpop.f32.mrb[0].mxu0
        %v1799 = vadd.f32 0.0, %v1798
        %1800 = vmatprep.mubr.bf16.mxu0 0
        %1801 = vmatmul.mubr.bf16.gmra.mrb[0].mxu0 %v1679
        %v1802 = vpop.f32.mrb[0].mxu0
        %v1803 = vadd.f32 0.0, %v1802
        %v1804 = vpop.f32.mrb[0].mxu0
        %v1805 = vadd.f32 0.0, %v1804
        %v1806 = vpop.f32.mrb[0].mxu0
        %v1807 = vadd.f32 0.0, %v1806
        %v1808 = vpop.f32.mrb[0].mxu0
        %v1809 = vadd.f32 0.0, %v1808
        %1810 = vmatprep.mubr.bf16.mxu0 0
        %1811 = vmatmul.mubr.bf16.gmra.mrb[0].mxu0 %v1682
        %v1812 = vpop.f32.mrb[0].mxu0
        %v1813 = vadd.f32 0.0, %v1812
        %v1814 = vpop.f32.mrb[0].mxu0
        %v1815 = vadd.f32 0.0, %v1814
        %v1816 = vpop.f32.mrb[0].mxu0
        %v1817 = vadd.f32 0.0, %v1816
        %v1818 = vpop.f32.mrb[0].mxu0
        %v1819 = vadd.f32 0.0, %v1818
        %1820 = vmatprep.mubr.bf16.mxu0 0
        %1821 = vmatmul.mubr.bf16.gmra.mrb[0].mxu0 %v1685
        %v1822 = vpop.f32.mrb[0].mxu0
        %v1823 = vadd.f32 0.0, %v1822
        %v1824 = vpop.f32.mrb[0].mxu0
        %v1825 = vadd.f32 0.0, %v1824
        %v1826 = vpop.f32.mrb[0].mxu0
        %v1827 = vadd.f32 0.0, %v1826
        %v1828 = vpop.f32.mrb[0].mxu0
        %v1829 = vadd.f32 0.0, %v1828
        %1830 = vmatprep.mubr.bf16.mxu0 0
        %1831 = vmatmul.mubr.bf16.gmra.mrb[0].mxu0 %v1688
        %v1832 = vpop.f32.mrb[0].mxu0
        %v1833 = vadd.f32 0.0, %v1832
        %v1834 = vpop.f32.mrb[0].mxu0
        %v1835 = vadd.f32 0.0, %v1834
        %v1836 = vpop.f32.mrb[0].mxu0
        %v1837 = vadd.f32 0.0, %v1836
        %v1838 = vpop.f32.mrb[0].mxu0
        %v1839 = vadd.f32 0.0, %v1838
        %1840 = vmatprep.mubr.bf16.mxu0 0
        %1841 = vmatmul.mubr.bf16.gmra.mrb[0].mxu0 %v1691
        %v1842 = vpop.f32.mrb[0].mxu0
        %v1843 = vadd.f32 0.0, %v1842
        %v1844 = vpop.f32.mrb[0].mxu0
        %v1845 = vadd.f32 0.0, %v1844
        %v1846 = vpop.f32.mrb[0].mxu0
        %v1847 = vadd.f32 0.0, %v1846
        %v1848 = vpop.f32.mrb[0].mxu0
        %v1849 = vadd.f32 0.0, %v1848
        %1850 = vmatprep.mubr.bf16.mxu0 0
        %1851 = vmatmul.mubr.bf16.gmra.mrb[0].mxu0 %v1694
        %v1852 = vpop.f32.mrb[0].mxu0
        %v1853 = vadd.f32 0.0, %v1852
        %v1854 = vpop.f32.mrb[0].mxu0
        %v1855 = vadd.f32 0.0, %v1854
        %v1856 = vpop.f32.mrb[0].mxu0
        %v1857 = vadd.f32 0.0, %v1856
        %v1858 = vpop.f32.mrb[0].mxu0
        %v1859 = vadd.f32 0.0, %v1858
        %1860 = vmatprep.mubr.bf16.mxu0 0
        %1861 = vmatmul.mubr.bf16.gmra.mrb[0].mxu0 %v1697
        %v1862 = vpop.f32.mrb[0].mxu0
        %v1863 = vadd.f32 0.0, %v1862
        %v1864 = vpop.f32.mrb[0].mxu0
        %v1865 = vadd.f32 0.0, %v1864
        %v1866 = vpop.f32.mrb[0].mxu0
        %v1867 = vadd.f32 0.0, %v1866
        %v1868 = vpop.f32.mrb[0].mxu0
        %v1869 = vadd.f32 0.0, %v1868
        %1870 = vmatprep.mubr.bf16.mxu0 0
        %1871 = vmatmul.mubr.bf16.gmra.mrb[0].mxu0 %v1700
        %v1872 = vpop.f32.mrb[0].mxu0
        %v1873 = vadd.f32 0.0, %v1872
        %v1874 = vpop.f32.mrb[0].mxu0
        %v1875 = vadd.f32 0.0, %v1874
        %v1876 = vpop.f32.mrb[0].mxu0
        %v1877 = vadd.f32 0.0, %v1876
        %v1878 = vpop.f32.mrb[0].mxu0
        %v1879 = vadd.f32 0.0, %v1878
        %1880 = vmatprep.mubr.bf16.mxu0 0
        %1881 = vmatmul.mubr.bf16.gmra.mrb[0].mxu0 %v1703
        %v1882 = vpop.f32.mrb[0].mxu0
        %v1883 = vadd.f32 0.0, %v1882
        %v1884 = vpop.f32.mrb[0].mxu0
        %v1885 = vadd.f32 0.0, %v1884
        %v1886 = vpop.f32.mrb[0].mxu0
        %v1887 = vadd.f32 0.0, %v1886
        %v1888 = vpop.f32.mrb[0].mxu0
        %v1889 = vadd.f32 0.0, %v1888
        %1890 = vmatprep.mubr.bf16.mxu0 0
        %1891 = vmatmul.mubr.bf16.gmra.mrb[0].mxu0 %v1706
        %v1892 = vpop.f32.mrb[0].mxu0
        %v1893 = vadd.f32 0.0, %v1892
        %v1894 = vpop.f32.mrb[0].mxu0
        %v1895 = vadd.f32 0.0, %v1894
        %v1896 = vpop.f32.mrb[0].mxu0
        %v1897 = vadd.f32 0.0, %v1896
        %v1898 = vpop.f32.mrb[0].mxu0
        %v1899 = vadd.f32 0.0, %v1898
        %1900 = vdwg.mxu0
        %1901 = vxpose.xlu0.c.b16.start [1/8] %v1045, 128
        %1902 = vxpose.xlu0.c.b16.cont [2/8] %v1047, 128
        %1903 = vxpose.xlu0.c.b16.cont [3/8] 0, 128
        %1904 = vxpose.xlu0.c.b16.cont [4/8] 0, 128
        %1905 = vxpose.xlu0.c.b16.cont [5/8] 0, 128
        %1906 = vxpose.xlu0.c.b16.cont [6/8] 0, 128
        %1907 = vxpose.xlu0.c.b16.cont [7/8] 0, 128
        %1908 = vxpose.xlu0.c.b16.end [8/8] 0, 128
        %v1909 = vpop.trf.xlu0
        %v1910 = vpop.trf.xlu0
        %v1911 = vpop.trf.xlu0
        %v1912 = vpop.trf.xlu0
        %v1913 = vpop.trf.xlu0
        %v1914 = vpop.trf.xlu0
        %v1915 = vpop.trf.xlu0
        %v1916 = vpop.trf.xlu0
        %1917 = vxpose.xlu0.c.b16.start [1/8] %v1046, 128
        %1918 = vxpose.xlu0.c.b16.cont [2/8] %v1048, 128
        %1919 = vxpose.xlu0.c.b16.cont [3/8] 0, 128
        %1920 = vxpose.xlu0.c.b16.cont [4/8] 0, 128
        %1921 = vxpose.xlu0.c.b16.cont [5/8] 0, 128
        %1922 = vxpose.xlu0.c.b16.cont [6/8] 0, 128
        %1923 = vxpose.xlu0.c.b16.cont [7/8] 0, 128
        %1924 = vxpose.xlu0.c.b16.end [8/8] 0, 128
        %v1925 = vpop.trf.xlu0
        %v1926 = vpop.trf.xlu0
        %v1927 = vpop.trf.xlu0
        %v1928 = vpop.trf.xlu0
        %v1929 = vpop.trf.xlu0
        %v1930 = vpop.trf.xlu0
        %v1931 = vpop.trf.xlu0
        %v1932 = vpop.trf.xlu0
        %v1934 = vsel %vm1113, %v1909, 0
        %v1937 = vsel %vm1113, %v1910, 0
        %v1940 = vsel %vm1113, %v1911, 0
        %v1943 = vsel %vm1113, %v1912, 0
        %v1946 = vsel %vm1113, %v1913, 0
        %v1949 = vsel %vm1113, %v1914, 0
        %v1952 = vsel %vm1113, %v1915, 0
        %v1955 = vsel %vm1113, %v1916, 0
        %v1958 = vsel %vm1113, %v1925, 0
        %v1961 = vsel %vm1113, %v1926, 0
        %v1964 = vsel %vm1113, %v1927, 0
        %v1967 = vsel %vm1113, %v1928, 0
        %v1970 = vsel %vm1113, %v1929, 0
        %v1973 = vsel %vm1113, %v1930, 0
        %v1976 = vsel %vm1113, %v1931, 0
        %v1979 = vsel %vm1113, %v1932, 0
        %1981 = vmatprep.subr.bf16.mxu0 %v1078
        %1982 = vmatpush1.bf16.msra.mxu0 %v1077
        %1983 = vmatprep.subr.bf16.mxu0 %v1080
        %1984 = vmatpush1.bf16.msra.mxu0 %v1079
        %1985 = vmatprep.subr.bf16.mxu0 0
        %1986 = vmatpush1.bf16.msra.mxu0 0
        %1987 = vmatprep.subr.bf16.mxu0 0
        %1988 = vmatpush1.bf16.msra.mxu0 0
        %1989 = vmatprep.subr.bf16.mxu0 0
        %1990 = vmatpush1.bf16.msra.mxu0 0
        %1991 = vmatprep.subr.bf16.mxu0 0
        %1992 = vmatpush1.bf16.msra.mxu0 0
        %1993 = vmatprep.subr.bf16.mxu0 0
        %1994 = vmatpush1.bf16.msra.mxu0 0
        %1995 = vmatprep.subr.bf16.mxu0 0
        %1996 = vmatpush1.bf16.msra.mxu0 0
        %1997 = vmatprep.subr.bf16.mxu0 0
        %1998 = vmatpush1.bf16.msra.mxu0 0
        %1999 = vmatprep.subr.bf16.mxu0 0
        %2000 = vmatpush1.bf16.msra.mxu0 0
        %2001 = vmatprep.subr.bf16.mxu0 0
        %2002 = vmatpush1.bf16.msra.mxu0 0
        %2003 = vmatprep.subr.bf16.mxu0 0
        %2004 = vmatpush1.bf16.msra.mxu0 0
        %2005 = vmatprep.subr.bf16.mxu0 0
        %2006 = vmatpush1.bf16.msra.mxu0 0
        %2007 = vmatprep.subr.bf16.mxu0 0
        %2008 = vmatpush1.bf16.msra.mxu0 0
        %2009 = vmatprep.subr.bf16.mxu0 0
        %2010 = vmatpush1.bf16.msra.mxu0 0
        %2011 = vmatprep.subr.bf16.mxu0 0
        %2012 = vmatpush1.bf16.msra.mxu0 0
        %2013 = vmatprep.mubr.bf16.mxu0 0
        %2014 = vmatmul.mubr.bf16.gmra.mrb[0].mxu0 %v1934
        %v2015 = vpop.f32.mrb[0].mxu0
        %v2016 = vadd.f32 0.0, %v2015
        %v2017 = vpop.f32.mrb[0].mxu0
        %v2018 = vadd.f32 0.0, %v2017
        %v2019 = vpop.f32.mrb[0].mxu0
        %v2020 = vadd.f32 0.0, %v2019
        %v2021 = vpop.f32.mrb[0].mxu0
        %v2022 = vadd.f32 0.0, %v2021
        %2023 = vmatprep.mubr.bf16.mxu0 0
        %2024 = vmatmul.mubr.bf16.gmra.mrb[0].mxu0 %v1937
        %v2025 = vpop.f32.mrb[0].mxu0
        %v2026 = vadd.f32 0.0, %v2025
        %v2027 = vpop.f32.mrb[0].mxu0
        %v2028 = vadd.f32 0.0, %v2027
        %v2029 = vpop.f32.mrb[0].mxu0
        %v2030 = vadd.f32 0.0, %v2029
        %v2031 = vpop.f32.mrb[0].mxu0
        %v2032 = vadd.f32 0.0, %v2031
        %2033 = vmatprep.mubr.bf16.mxu0 0
        %2034 = vmatmul.mubr.bf16.gmra.mrb[0].mxu0 %v1940
        %v2035 = vpop.f32.mrb[0].mxu0
        %v2036 = vadd.f32 0.0, %v2035
        %v2037 = vpop.f32.mrb[0].mxu0
        %v2038 = vadd.f32 0.0, %v2037
        %v2039 = vpop.f32.mrb[0].mxu0
        %v2040 = vadd.f32 0.0, %v2039
        %v2041 = vpop.f32.mrb[0].mxu0
        %v2042 = vadd.f32 0.0, %v2041
        %2043 = vmatprep.mubr.bf16.mxu0 0
        %2044 = vmatmul.mubr.bf16.gmra.mrb[0].mxu0 %v1943
        %v2045 = vpop.f32.mrb[0].mxu0
        %v2046 = vadd.f32 0.0, %v2045
        %v2047 = vpop.f32.mrb[0].mxu0
        %v2048 = vadd.f32 0.0, %v2047
        %v2049 = vpop.f32.mrb[0].mxu0
        %v2050 = vadd.f32 0.0, %v2049
        %v2051 = vpop.f32.mrb[0].mxu0
        %v2052 = vadd.f32 0.0, %v2051
        %2053 = vmatprep.mubr.bf16.mxu0 0
        %2054 = vmatmul.mubr.bf16.gmra.mrb[0].mxu0 %v1946
        %v2055 = vpop.f32.mrb[0].mxu0
        %v2056 = vadd.f32 0.0, %v2055
        %v2057 = vpop.f32.mrb[0].mxu0
        %v2058 = vadd.f32 0.0, %v2057
        %v2059 = vpop.f32.mrb[0].mxu0
        %v2060 = vadd.f32 0.0, %v2059
        %v2061 = vpop.f32.mrb[0].mxu0
        %v2062 = vadd.f32 0.0, %v2061
        %2063 = vmatprep.mubr.bf16.mxu0 0
        %2064 = vmatmul.mubr.bf16.gmra.mrb[0].mxu0 %v1949
        %v2065 = vpop.f32.mrb[0].mxu0
        %v2066 = vadd.f32 0.0, %v2065
        %v2067 = vpop.f32.mrb[0].mxu0
        %v2068 = vadd.f32 0.0, %v2067
        %v2069 = vpop.f32.mrb[0].mxu0
        %v2070 = vadd.f32 0.0, %v2069
        %v2071 = vpop.f32.mrb[0].mxu0
        %v2072 = vadd.f32 0.0, %v2071
        %2073 = vmatprep.mubr.bf16.mxu0 0
        %2074 = vmatmul.mubr.bf16.gmra.mrb[0].mxu0 %v1952
        %v2075 = vpop.f32.mrb[0].mxu0
        %v2076 = vadd.f32 0.0, %v2075
        %v2077 = vpop.f32.mrb[0].mxu0
        %v2078 = vadd.f32 0.0, %v2077
        %v2079 = vpop.f32.mrb[0].mxu0
        %v2080 = vadd.f32 0.0, %v2079
        %v2081 = vpop.f32.mrb[0].mxu0
        %v2082 = vadd.f32 0.0, %v2081
        %2083 = vmatprep.mubr.bf16.mxu0 0
        %2084 = vmatmul.mubr.bf16.gmra.mrb[0].mxu0 %v1955
        %v2085 = vpop.f32.mrb[0].mxu0
        %v2086 = vadd.f32 0.0, %v2085
        %v2087 = vpop.f32.mrb[0].mxu0
        %v2088 = vadd.f32 0.0, %v2087
        %v2089 = vpop.f32.mrb[0].mxu0
        %v2090 = vadd.f32 0.0, %v2089
        %v2091 = vpop.f32.mrb[0].mxu0
        %v2092 = vadd.f32 0.0, %v2091
        %2093 = vmatprep.mubr.bf16.mxu0 0
        %2094 = vmatmul.mubr.bf16.gmra.mrb[0].mxu0 %v1958
        %v2095 = vpop.f32.mrb[0].mxu0
        %v2096 = vadd.f32 0.0, %v2095
        %v2097 = vpop.f32.mrb[0].mxu0
        %v2098 = vadd.f32 0.0, %v2097
        %v2099 = vpop.f32.mrb[0].mxu0
        %v2100 = vadd.f32 0.0, %v2099
        %v2101 = vpop.f32.mrb[0].mxu0
        %v2102 = vadd.f32 0.0, %v2101
        %2103 = vmatprep.mubr.bf16.mxu0 0
        %2104 = vmatmul.mubr.bf16.gmra.mrb[0].mxu0 %v1961
        %v2105 = vpop.f32.mrb[0].mxu0
        %v2106 = vadd.f32 0.0, %v2105
        %v2107 = vpop.f32.mrb[0].mxu0
        %v2108 = vadd.f32 0.0, %v2107
        %v2109 = vpop.f32.mrb[0].mxu0
        %v2110 = vadd.f32 0.0, %v2109
        %v2111 = vpop.f32.mrb[0].mxu0
        %v2112 = vadd.f32 0.0, %v2111
        %2113 = vmatprep.mubr.bf16.mxu0 0
        %2114 = vmatmul.mubr.bf16.gmra.mrb[0].mxu0 %v1964
        %v2115 = vpop.f32.mrb[0].mxu0
        %v2116 = vadd.f32 0.0, %v2115
        %v2117 = vpop.f32.mrb[0].mxu0
        %v2118 = vadd.f32 0.0, %v2117
        %v2119 = vpop.f32.mrb[0].mxu0
        %v2120 = vadd.f32 0.0, %v2119
        %v2121 = vpop.f32.mrb[0].mxu0
        %v2122 = vadd.f32 0.0, %v2121
        %2123 = vmatprep.mubr.bf16.mxu0 0
        %2124 = vmatmul.mubr.bf16.gmra.mrb[0].mxu0 %v1967
        %v2125 = vpop.f32.mrb[0].mxu0
        %v2126 = vadd.f32 0.0, %v2125
        %v2127 = vpop.f32.mrb[0].mxu0
        %v2128 = vadd.f32 0.0, %v2127
        %v2129 = vpop.f32.mrb[0].mxu0
        %v2130 = vadd.f32 0.0, %v2129
        %v2131 = vpop.f32.mrb[0].mxu0
        %v2132 = vadd.f32 0.0, %v2131
        %2133 = vmatprep.mubr.bf16.mxu0 0
        %2134 = vmatmul.mubr.bf16.gmra.mrb[0].mxu0 %v1970
        %v2135 = vpop.f32.mrb[0].mxu0
        %v2136 = vadd.f32 0.0, %v2135
        %v2137 = vpop.f32.mrb[0].mxu0
        %v2138 = vadd.f32 0.0, %v2137
        %v2139 = vpop.f32.mrb[0].mxu0
        %v2140 = vadd.f32 0.0, %v2139
        %v2141 = vpop.f32.mrb[0].mxu0
        %v2142 = vadd.f32 0.0, %v2141
        %2143 = vmatprep.mubr.bf16.mxu0 0
        %2144 = vmatmul.mubr.bf16.gmra.mrb[0].mxu0 %v1973
        %v2145 = vpop.f32.mrb[0].mxu0
        %v2146 = vadd.f32 0.0, %v2145
        %v2147 = vpop.f32.mrb[0].mxu0
        %v2148 = vadd.f32 0.0, %v2147
        %v2149 = vpop.f32.mrb[0].mxu0
        %v2150 = vadd.f32 0.0, %v2149
        %v2151 = vpop.f32.mrb[0].mxu0
        %v2152 = vadd.f32 0.0, %v2151
        %2153 = vmatprep.mubr.bf16.mxu0 0
        %2154 = vmatmul.mubr.bf16.gmra.mrb[0].mxu0 %v1976
        %v2155 = vpop.f32.mrb[0].mxu0
        %v2156 = vadd.f32 0.0, %v2155
        %v2157 = vpop.f32.mrb[0].mxu0
        %v2158 = vadd.f32 0.0, %v2157
        %v2159 = vpop.f32.mrb[0].mxu0
        %v2160 = vadd.f32 0.0, %v2159
        %v2161 = vpop.f32.mrb[0].mxu0
        %v2162 = vadd.f32 0.0, %v2161
        %2163 = vmatprep.mubr.bf16.mxu0 0
        %2164 = vmatmul.mubr.bf16.gmra.mrb[0].mxu0 %v1979
        %v2165 = vpop.f32.mrb[0].mxu0
        %v2166 = vadd.f32 0.0, %v2165
        %v2167 = vpop.f32.mrb[0].mxu0
        %v2168 = vadd.f32 0.0, %v2167
        %v2169 = vpop.f32.mrb[0].mxu0
        %v2170 = vadd.f32 0.0, %v2169
        %v2171 = vpop.f32.mrb[0].mxu0
        %v2172 = vadd.f32 0.0, %v2171
        %2173 = vdwg.mxu0
        %v2174 = vld [vmem:[#allocation3] sm:$0x3]
        %v2175 = vld [vmem:[#allocation3 + $0x2] sm:$0x3]
        %v2176 = vld [vmem:[#allocation3 + $0x4] sm:$0x3]
        %v2177 = vld [vmem:[#allocation3 + $0x6] sm:$0x3]
        %v2178 = vmax.f32 %v1197, %v1201
        %v2179 = vmax.f32 %v2178, %v1207
        %v2180 = vmax.f32 %v2179, %v1211
        %v2181 = vmax.f32 %v2180, %v1217
        %v2182 = vmax.f32 %v2181, %v1221
        %v2183 = vmax.f32 %v2182, %v1227
        %v2184 = vmax.f32 %v2183, %v1231
        %v2185 = vmax.f32 %v2184, %v1237
        %v2186 = vmax.f32 %v2185, %v1241
        %v2187 = vmax.f32 %v2186, %v1247
        %v2188 = vmax.f32 %v2187, %v1251
        %v2189 = vmax.f32 %v2188, %v1257
        %v2190 = vmax.f32 %v2189, %v1261
        %v2191 = vmax.f32 %v2190, %v1267
        %v2192 = vmax.f32 %v2191, %v1271
        %v2193 = vmax.f32 %v2192, %v1277
        %v2194 = vmax.f32 %v2193, %v1281
        %v2195 = vmax.f32 %v2194, %v1287
        %v2196 = vmax.f32 %v2195, %v1291
        %v2197 = vmax.f32 %v2196, %v1297
        %v2198 = vmax.f32 %v2197, %v1301
        %v2199 = vmax.f32 %v2198, %v1307
        %v2200 = vmax.f32 %v2199, %v1311
        %v2201 = vmax.f32 %v2200, %v1317
        %v2202 = vmax.f32 %v2201, %v1321
        %v2203 = vmax.f32 %v2202, %v1327
        %v2204 = vmax.f32 %v2203, %v1331
        %v2205 = vmax.f32 %v2204, %v1337
        %v2206 = vmax.f32 %v2205, %v1341
        %v2207 = vmax.f32 %v2206, %v1347
        %v2208 = vmax.f32 %v2207, %v1351
        %v2209 = vrot.slane %v2208, 4
        %v2210 = vmax.f32 %v2208, %v2209
        %v2211 = vrot.slane %v2210, 2
        %v2212 = vmax.f32 %v2210, %v2211
        %v2213 = vrot.slane %v2212, 1
        %v2214 = vmax.f32 %v2212, %v2213
        %v2215 = vmax.f32 %v1199, %v1203
        %v2216 = vmax.f32 %v2215, %v1209
        %v2217 = vmax.f32 %v2216, %v1213
        %v2218 = vmax.f32 %v2217, %v1219
        %v2219 = vmax.f32 %v2218, %v1223
        %v2220 = vmax.f32 %v2219, %v1229
        %v2221 = vmax.f32 %v2220, %v1233
        %v2222 = vmax.f32 %v2221, %v1239
        %v2223 = vmax.f32 %v2222, %v1243
        %v2224 = vmax.f32 %v2223, %v1249
        %v2225 = vmax.f32 %v2224, %v1253
        %v2226 = vmax.f32 %v2225, %v1259
        %v2227 = vmax.f32 %v2226, %v1263
        %v2228 = vmax.f32 %v2227, %v1269
        %v2229 = vmax.f32 %v2228, %v1273
        %v2230 = vmax.f32 %v2229, %v1279
        %v2231 = vmax.f32 %v2230, %v1283
        %v2232 = vmax.f32 %v2231, %v1289
        %v2233 = vmax.f32 %v2232, %v1293
        %v2234 = vmax.f32 %v2233, %v1299
        %v2235 = vmax.f32 %v2234, %v1303
        %v2236 = vmax.f32 %v2235, %v1309
        %v2237 = vmax.f32 %v2236, %v1313
        %v2238 = vmax.f32 %v2237, %v1319
        %v2239 = vmax.f32 %v2238, %v1323
        %v2240 = vmax.f32 %v2239, %v1329
        %v2241 = vmax.f32 %v2240, %v1333
        %v2242 = vmax.f32 %v2241, %v1339
        %v2243 = vmax.f32 %v2242, %v1343
        %v2244 = vmax.f32 %v2243, %v1349
        %v2245 = vmax.f32 %v2244, %v1353
        %v2246 = vrot.slane %v2245, 4
        %v2247 = vmax.f32 %v2245, %v2246
        %v2248 = vrot.slane %v2247, 2
        %v2249 = vmax.f32 %v2247, %v2248
        %v2250 = vrot.slane %v2249, 1
        %v2251 = vmax.f32 %v2249, %v2250
        %v2252 = vmax.f32 %v1470, %v1474
        %v2253 = vmax.f32 %v2252, %v1480
        %v2254 = vmax.f32 %v2253, %v1484
        %v2255 = vmax.f32 %v2254, %v1490
        %v2256 = vmax.f32 %v2255, %v1494
        %v2257 = vmax.f32 %v2256, %v1500
        %v2258 = vmax.f32 %v2257, %v1504
        %v2259 = vmax.f32 %v2258, %v1510
        %v2260 = vmax.f32 %v2259, %v1514
        %v2261 = vmax.f32 %v2260, %v1520
        %v2262 = vmax.f32 %v2261, %v1524
        %v2263 = vmax.f32 %v2262, %v1530
        %v2264 = vmax.f32 %v2263, %v1534
        %v2265 = vmax.f32 %v2264, %v1540
        %v2266 = vmax.f32 %v2265, %v1544
        %v2267 = vmax.f32 %v2266, %v1550
        %v2268 = vmax.f32 %v2267, %v1554
        %v2269 = vmax.f32 %v2268, %v1560
        %v2270 = vmax.f32 %v2269, %v1564
        %v2271 = vmax.f32 %v2270, %v1570
        %v2272 = vmax.f32 %v2271, %v1574
        %v2273 = vmax.f32 %v2272, %v1580
        %v2274 = vmax.f32 %v2273, %v1584
        %v2275 = vmax.f32 %v2274, %v1590
        %v2276 = vmax.f32 %v2275, %v1594
        %v2277 = vmax.f32 %v2276, %v1600
        %v2278 = vmax.f32 %v2277, %v1604
        %v2279 = vmax.f32 %v2278, %v1610
        %v2280 = vmax.f32 %v2279, %v1614
        %v2281 = vmax.f32 %v2280, %v1620
        %v2282 = vmax.f32 %v2281, %v1624
        %v2283 = vrot.slane %v2282, 4
        %v2284 = vmax.f32 %v2282, %v2283
        %v2285 = vrot.slane %v2284, 2
        %v2286 = vmax.f32 %v2284, %v2285
        %v2287 = vrot.slane %v2286, 1
        %v2288 = vmax.f32 %v2286, %v2287
        %v2289 = vmax.f32 %v1472, %v1476
        %v2290 = vmax.f32 %v2289, %v1482
        %v2291 = vmax.f32 %v2290, %v1486
        %v2292 = vmax.f32 %v2291, %v1492
        %v2293 = vmax.f32 %v2292, %v1496
        %v2294 = vmax.f32 %v2293, %v1502
        %v2295 = vmax.f32 %v2294, %v1506
        %v2296 = vmax.f32 %v2295, %v1512
        %v2297 = vmax.f32 %v2296, %v1516
        %v2298 = vmax.f32 %v2297, %v1522
        %v2299 = vmax.f32 %v2298, %v1526
        %v2300 = vmax.f32 %v2299, %v1532
        %v2301 = vmax.f32 %v2300, %v1536
        %v2302 = vmax.f32 %v2301, %v1542
        %v2303 = vmax.f32 %v2302, %v1546
        %v2304 = vmax.f32 %v2303, %v1552
        %v2305 = vmax.f32 %v2304, %v1556
        %v2306 = vmax.f32 %v2305, %v1562
        %v2307 = vmax.f32 %v2306, %v1566
        %v2308 = vmax.f32 %v2307, %v1572
        %v2309 = vmax.f32 %v2308, %v1576
        %v2310 = vmax.f32 %v2309, %v1582
        %v2311 = vmax.f32 %v2310, %v1586
        %v2312 = vmax.f32 %v2311, %v1592
        %v2313 = vmax.f32 %v2312, %v1596
        %v2314 = vmax.f32 %v2313, %v1602
        %v2315 = vmax.f32 %v2314, %v1606
        %v2316 = vmax.f32 %v2315, %v1612
        %v2317 = vmax.f32 %v2316, %v1616
        %v2318 = vmax.f32 %v2317, %v1622
        %v2319 = vmax.f32 %v2318, %v1626
        %v2320 = vrot.slane %v2319, 4
        %v2321 = vmax.f32 %v2319, %v2320
        %v2322 = vrot.slane %v2321, 2
        %v2323 = vmax.f32 %v2321, %v2322
        %v2324 = vrot.slane %v2323, 1
        %v2325 = vmax.f32 %v2323, %v2324
        %v2326 = vmax.f32 %v1743, %v1747
        %v2327 = vmax.f32 %v2326, %v1753
        %v2328 = vmax.f32 %v2327, %v1757
        %v2329 = vmax.f32 %v2328, %v1763
        %v2330 = vmax.f32 %v2329, %v1767
        %v2331 = vmax.f32 %v2330, %v1773
        %v2332 = vmax.f32 %v2331, %v1777
        %v2333 = vmax.f32 %v2332, %v1783
        %v2334 = vmax.f32 %v2333, %v1787
        %v2335 = vmax.f32 %v2334, %v1793
        %v2336 = vmax.f32 %v2335, %v1797
        %v2337 = vmax.f32 %v2336, %v1803
        %v2338 = vmax.f32 %v2337, %v1807
        %v2339 = vmax.f32 %v2338, %v1813
        %v2340 = vmax.f32 %v2339, %v1817
        %v2341 = vmax.f32 %v2340, %v1823
        %v2342 = vmax.f32 %v2341, %v1827
        %v2343 = vmax.f32 %v2342, %v1833
        %v2344 = vmax.f32 %v2343, %v1837
        %v2345 = vmax.f32 %v2344, %v1843
        %v2346 = vmax.f32 %v2345, %v1847
        %v2347 = vmax.f32 %v2346, %v1853
        %v2348 = vmax.f32 %v2347, %v1857
        %v2349 = vmax.f32 %v2348, %v1863
        %v2350 = vmax.f32 %v2349, %v1867
        %v2351 = vmax.f32 %v2350, %v1873
        %v2352 = vmax.f32 %v2351, %v1877
        %v2353 = vmax.f32 %v2352, %v1883
        %v2354 = vmax.f32 %v2353, %v1887
        %v2355 = vmax.f32 %v2354, %v1893
        %v2356 = vmax.f32 %v2355, %v1897
        %v2357 = vrot.slane %v2356, 4
        %v2358 = vmax.f32 %v2356, %v2357
        %v2359 = vrot.slane %v2358, 2
        %v2360 = vmax.f32 %v2358, %v2359
        %v2361 = vrot.slane %v2360, 1
        %v2362 = vmax.f32 %v2360, %v2361
        %v2363 = vmax.f32 %v1745, %v1749
        %v2364 = vmax.f32 %v2363, %v1755
        %v2365 = vmax.f32 %v2364, %v1759
        %v2366 = vmax.f32 %v2365, %v1765
        %v2367 = vmax.f32 %v2366, %v1769
        %v2368 = vmax.f32 %v2367, %v1775
        %v2369 = vmax.f32 %v2368, %v1779
        %v2370 = vmax.f32 %v2369, %v1785
        %v2371 = vmax.f32 %v2370, %v1789
        %v2372 = vmax.f32 %v2371, %v1795
        %v2373 = vmax.f32 %v2372, %v1799
        %v2374 = vmax.f32 %v2373, %v1805
        %v2375 = vmax.f32 %v2374, %v1809
        %v2376 = vmax.f32 %v2375, %v1815
        %v2377 = vmax.f32 %v2376, %v1819
        %v2378 = vmax.f32 %v2377, %v1825
        %v2379 = vmax.f32 %v2378, %v1829
        %v2380 = vmax.f32 %v2379, %v1835
        %v2381 = vmax.f32 %v2380, %v1839
        %v2382 = vmax.f32 %v2381, %v1845
        %v2383 = vmax.f32 %v2382, %v1849
        %v2384 = vmax.f32 %v2383, %v1855
        %v2385 = vmax.f32 %v2384, %v1859
        %v2386 = vmax.f32 %v2385, %v1865
        %v2387 = vmax.f32 %v2386, %v1869
        %v2388 = vmax.f32 %v2387, %v1875
        %v2389 = vmax.f32 %v2388, %v1879
        %v2390 = vmax.f32 %v2389, %v1885
        %v2391 = vmax.f32 %v2390, %v1889
        %v2392 = vmax.f32 %v2391, %v1895
        %v2393 = vmax.f32 %v2392, %v1899
        %v2394 = vrot.slane %v2393, 4
        %v2395 = vmax.f32 %v2393, %v2394
        %v2396 = vrot.slane %v2395, 2
        %v2397 = vmax.f32 %v2395, %v2396
        %v2398 = vrot.slane %v2397, 1
        %v2399 = vmax.f32 %v2397, %v2398
        %v2400 = vmax.f32 %v2016, %v2020
        %v2401 = vmax.f32 %v2400, %v2026
        %v2402 = vmax.f32 %v2401, %v2030
        %v2403 = vmax.f32 %v2402, %v2036
        %v2404 = vmax.f32 %v2403, %v2040
        %v2405 = vmax.f32 %v2404, %v2046
        %v2406 = vmax.f32 %v2405, %v2050
        %v2407 = vmax.f32 %v2406, %v2056
        %v2408 = vmax.f32 %v2407, %v2060
        %v2409 = vmax.f32 %v2408, %v2066
        %v2410 = vmax.f32 %v2409, %v2070
        %v2411 = vmax.f32 %v2410, %v2076
        %v2412 = vmax.f32 %v2411, %v2080
        %v2413 = vmax.f32 %v2412, %v2086
        %v2414 = vmax.f32 %v2413, %v2090
        %v2415 = vmax.f32 %v2414, %v2096
        %v2416 = vmax.f32 %v2415, %v2100
        %v2417 = vmax.f32 %v2416, %v2106
        %v2418 = vmax.f32 %v2417, %v2110
        %v2419 = vmax.f32 %v2418, %v2116
        %v2420 = vmax.f32 %v2419, %v2120
        %v2421 = vmax.f32 %v2420, %v2126
        %v2422 = vmax.f32 %v2421, %v2130
        %v2423 = vmax.f32 %v2422, %v2136
        %v2424 = vmax.f32 %v2423, %v2140
        %v2425 = vmax.f32 %v2424, %v2146
        %v2426 = vmax.f32 %v2425, %v2150
        %v2427 = vmax.f32 %v2426, %v2156
        %v2428 = vmax.f32 %v2427, %v2160
        %v2429 = vmax.f32 %v2428, %v2166
        %v2430 = vmax.f32 %v2429, %v2170
        %v2431 = vrot.slane %v2430, 4
        %v2432 = vmax.f32 %v2430, %v2431
        %v2433 = vrot.slane %v2432, 2
        %v2434 = vmax.f32 %v2432, %v2433
        %v2435 = vrot.slane %v2434, 1
        %v2436 = vmax.f32 %v2434, %v2435
        %v2437 = vmax.f32 %v2018, %v2022
        %v2438 = vmax.f32 %v2437, %v2028
        %v2439 = vmax.f32 %v2438, %v2032
        %v2440 = vmax.f32 %v2439, %v2038
        %v2441 = vmax.f32 %v2440, %v2042
        %v2442 = vmax.f32 %v2441, %v2048
        %v2443 = vmax.f32 %v2442, %v2052
        %v2444 = vmax.f32 %v2443, %v2058
        %v2445 = vmax.f32 %v2444, %v2062
        %v2446 = vmax.f32 %v2445, %v2068
        %v2447 = vmax.f32 %v2446, %v2072
        %v2448 = vmax.f32 %v2447, %v2078
        %v2449 = vmax.f32 %v2448, %v2082
        %v2450 = vmax.f32 %v2449, %v2088
        %v2451 = vmax.f32 %v2450, %v2092
        %v2452 = vmax.f32 %v2451, %v2098
        %v2453 = vmax.f32 %v2452, %v2102
        %v2454 = vmax.f32 %v2453, %v2108
        %v2455 = vmax.f32 %v2454, %v2112
        %v2456 = vmax.f32 %v2455, %v2118
        %v2457 = vmax.f32 %v2456, %v2122
        %v2458 = vmax.f32 %v2457, %v2128
        %v2459 = vmax.f32 %v2458, %v2132
        %v2460 = vmax.f32 %v2459, %v2138
        %v2461 = vmax.f32 %v2460, %v2142
        %v2462 = vmax.f32 %v2461, %v2148
        %v2463 = vmax.f32 %v2462, %v2152
        %v2464 = vmax.f32 %v2463, %v2158
        %v2465 = vmax.f32 %v2464, %v2162
        %v2466 = vmax.f32 %v2465, %v2168
        %v2467 = vmax.f32 %v2466, %v2172
        %v2468 = vrot.slane %v2467, 4
        %v2469 = vmax.f32 %v2467, %v2468
        %v2470 = vrot.slane %v2469, 2
        %v2471 = vmax.f32 %v2469, %v2470
        %v2472 = vrot.slane %v2471, 1
        %v2473 = vmax.f32 %v2471, %v2472
        %v2482 = vcombine.low %v2214, %v2251
        %v2484 = vunpack.c.l.s4 1966171168
        %v2485 = vunpack.c.0.s8 %v2484
        %v2486 = vlaneseq
        %v2487 = vshrl.u32 %v2486, 7
        %v2488 = vsub.s32 %v2485, %v2487
        %v2489 = vrot.slane %v2482, %v2488
        %v2491 = vunpack.c.l.s4 1966171168
        %v2492 = vunpack.c.0.s8 %v2491
        %v2493 = vlaneseq
        %v2494 = vshrl.u32 %v2493, 7
        %v2495 = vsub.s32 %v2492, %v2494
        %v2496 = vrot.slane %v2489, %v2495
        %v2497 = vcombine.low %v2288, %v2325
        %v2499 = vunpack.c.l.s4 1966171168
        %v2500 = vunpack.c.0.s8 %v2499
        %v2501 = vlaneseq
        %v2502 = vshrl.u32 %v2501, 7
        %v2503 = vsub.s32 %v2500, %v2502
        %v2504 = vrot.slane %v2497, %v2503
        %v2506 = vunpack.c.l.s4 1966171168
        %v2507 = vunpack.c.0.s8 %v2506
        %v2508 = vlaneseq
        %v2509 = vshrl.u32 %v2508, 7
        %v2510 = vsub.s32 %v2507, %v2509
        %v2511 = vrot.slane %v2504, %v2510
        %v2512 = vcombine.low %v2362, %v2399
        %v2514 = vunpack.c.l.s4 1966171168
        %v2515 = vunpack.c.0.s8 %v2514
        %v2516 = vlaneseq
        %v2517 = vshrl.u32 %v2516, 7
        %v2518 = vsub.s32 %v2515, %v2517
        %v2519 = vrot.slane %v2512, %v2518
        %v2521 = vunpack.c.l.s4 1966171168
        %v2522 = vunpack.c.0.s8 %v2521
        %v2523 = vlaneseq
        %v2524 = vshrl.u32 %v2523, 7
        %v2525 = vsub.s32 %v2522, %v2524
        %v2526 = vrot.slane %v2519, %v2525
        %v2527 = vcombine.low %v2436, %v2473
        %v2529 = vunpack.c.l.s4 1966171168
        %v2530 = vunpack.c.0.s8 %v2529
        %v2531 = vlaneseq
        %v2532 = vshrl.u32 %v2531, 7
        %v2533 = vsub.s32 %v2530, %v2532
        %v2534 = vrot.slane %v2527, %v2533
        %v2536 = vunpack.c.l.s4 1966171168
        %v2537 = vunpack.c.0.s8 %v2536
        %v2538 = vlaneseq
        %v2539 = vshrl.u32 %v2538, 7
        %v2540 = vsub.s32 %v2537, %v2539
        %v2541 = vrot.slane %v2534, %v2540
        %v2546 = vmax.f32 %v2174, %v2496
        %v2547 = vmax.f32 %v2175, %v2511
        %v2548 = vmax.f32 %v2176, %v2526
        %v2549 = vmax.f32 %v2177, %v2541
        %v2550 = vsub.f32 %v2174, %v2546
        %v2551 = vsub.f32 %v2175, %v2547
        %v2552 = vsub.f32 %v2176, %v2548
        %v2553 = vsub.f32 %v2177, %v2549
        %v2554 = vmul.f32 %v2550, 1.442695
        %v2555 = vpow.pop %v2554
        %v2556 = vmul.f32 %v2551, 1.442695
        %v2557 = vpow.pop %v2556
        %v2558 = vmul.f32 %v2552, 1.442695
        %v2559 = vpow.pop %v2558
        %v2560 = vmul.f32 %v2553, 1.442695
        %v2561 = vpow.pop %v2560
        %v2566 = vlaneseq
        %v2567 = vshrl.u32 %v2566, 7
        %v2568 = vsub.s32 0, %v2567
        %v2569 = vrot.slane %v2546, %v2568
        %v2570 = vlaneseq
        %v2571 = vshrl.u32 %v2570, 7
        %v2572 = vsub.s32 1, %v2571
        %v2573 = vrot.slane %v2546, %v2572
        %v2574 = vlaneseq
        %v2575 = vshrl.u32 %v2574, 7
        %v2576 = vsub.s32 0, %v2575
        %v2577 = vrot.slane %v2547, %v2576
        %v2578 = vlaneseq
        %v2579 = vshrl.u32 %v2578, 7
        %v2580 = vsub.s32 1, %v2579
        %v2581 = vrot.slane %v2547, %v2580
        %v2582 = vlaneseq
        %v2583 = vshrl.u32 %v2582, 7
        %v2584 = vsub.s32 0, %v2583
        %v2585 = vrot.slane %v2548, %v2584
        %v2586 = vlaneseq
        %v2587 = vshrl.u32 %v2586, 7
        %v2588 = vsub.s32 1, %v2587
        %v2589 = vrot.slane %v2548, %v2588
        %v2590 = vlaneseq
        %v2591 = vshrl.u32 %v2590, 7
        %v2592 = vsub.s32 0, %v2591
        %v2593 = vrot.slane %v2549, %v2592
        %v2594 = vlaneseq
        %v2595 = vshrl.u32 %v2594, 7
        %v2596 = vsub.s32 1, %v2595
        %v2597 = vrot.slane %v2549, %v2596
        %v2606 = vsub.f32 %v1197, %v2569
        %v2607 = vsub.f32 %v1199, %v2573
        %v2608 = vsub.f32 %v1201, %v2569
        %v2609 = vsub.f32 %v1203, %v2573
        %v2610 = vsub.f32 %v1207, %v2569
        %v2611 = vsub.f32 %v1209, %v2573
        %v2612 = vsub.f32 %v1211, %v2569
        %v2613 = vsub.f32 %v1213, %v2573
        %v2614 = vsub.f32 %v1217, %v2569
        %v2615 = vsub.f32 %v1219, %v2573
        %v2616 = vsub.f32 %v1221, %v2569
        %v2617 = vsub.f32 %v1223, %v2573
        %v2618 = vsub.f32 %v1227, %v2569
        %v2619 = vsub.f32 %v1229, %v2573
        %v2620 = vsub.f32 %v1231, %v2569
        %v2621 = vsub.f32 %v1233, %v2573
        %v2622 = vsub.f32 %v1237, %v2569
        %v2623 = vsub.f32 %v1239, %v2573
        %v2624 = vsub.f32 %v1241, %v2569
        %v2625 = vsub.f32 %v1243, %v2573
        %v2626 = vsub.f32 %v1247, %v2569
        %v2627 = vsub.f32 %v1249, %v2573
        %v2628 = vsub.f32 %v1251, %v2569
        %v2629 = vsub.f32 %v1253, %v2573
        %v2630 = vsub.f32 %v1257, %v2569
        %v2631 = vsub.f32 %v1259, %v2573
        %v2632 = vsub.f32 %v1261, %v2569
        %v2633 = vsub.f32 %v1263, %v2573
        %v2634 = vsub.f32 %v1267, %v2569
        %v2635 = vsub.f32 %v1269, %v2573
        %v2636 = vsub.f32 %v1271, %v2569
        %v2637 = vsub.f32 %v1273, %v2573
        %v2638 = vsub.f32 %v1277, %v2569
        %v2639 = vsub.f32 %v1279, %v2573
        %v2640 = vsub.f32 %v1281, %v2569
        %v2641 = vsub.f32 %v1283, %v2573
        %v2642 = vsub.f32 %v1287, %v2569
        %v2643 = vsub.f32 %v1289, %v2573
        %v2644 = vsub.f32 %v1291, %v2569
        %v2645 = vsub.f32 %v1293, %v2573
        %v2646 = vsub.f32 %v1297, %v2569
        %v2647 = vsub.f32 %v1299, %v2573
        %v2648 = vsub.f32 %v1301, %v2569
        %v2649 = vsub.f32 %v1303, %v2573
        %v2650 = vsub.f32 %v1307, %v2569
        %v2651 = vsub.f32 %v1309, %v2573
        %v2652 = vsub.f32 %v1311, %v2569
        %v2653 = vsub.f32 %v1313, %v2573
        %v2654 = vsub.f32 %v1317, %v2569
        %v2655 = vsub.f32 %v1319, %v2573
        %v2656 = vsub.f32 %v1321, %v2569
        %v2657 = vsub.f32 %v1323, %v2573
        %v2658 = vsub.f32 %v1327, %v2569
        %v2659 = vsub.f32 %v1329, %v2573
        %v2660 = vsub.f32 %v1331, %v2569
        %v2661 = vsub.f32 %v1333, %v2573
        %v2662 = vsub.f32 %v1337, %v2569
        %v2663 = vsub.f32 %v1339, %v2573
        %v2664 = vsub.f32 %v1341, %v2569
        %v2665 = vsub.f32 %v1343, %v2573
        %v2666 = vsub.f32 %v1347, %v2569
        %v2667 = vsub.f32 %v1349, %v2573
        %v2668 = vsub.f32 %v1351, %v2569
        %v2669 = vsub.f32 %v1353, %v2573
        %v2670 = vsub.f32 %v1470, %v2577
        %v2671 = vsub.f32 %v1472, %v2581
        %v2672 = vsub.f32 %v1474, %v2577
        %v2673 = vsub.f32 %v1476, %v2581
        %v2674 = vsub.f32 %v1480, %v2577
        %v2675 = vsub.f32 %v1482, %v2581
        %v2676 = vsub.f32 %v1484, %v2577
        %v2677 = vsub.f32 %v1486, %v2581
        %v2678 = vsub.f32 %v1490, %v2577
        %v2679 = vsub.f32 %v1492, %v2581
        %v2680 = vsub.f32 %v1494, %v2577
        %v2681 = vsub.f32 %v1496, %v2581
        %v2682 = vsub.f32 %v1500, %v2577
        %v2683 = vsub.f32 %v1502, %v2581
        %v2684 = vsub.f32 %v1504, %v2577
        %v2685 = vsub.f32 %v1506, %v2581
        %v2686 = vsub.f32 %v1510, %v2577
        %v2687 = vsub.f32 %v1512, %v2581
        %v2688 = vsub.f32 %v1514, %v2577
        %v2689 = vsub.f32 %v1516, %v2581
        %v2690 = vsub.f32 %v1520, %v2577
        %v2691 = vsub.f32 %v1522, %v2581
        %v2692 = vsub.f32 %v1524, %v2577
        %v2693 = vsub.f32 %v1526, %v2581
        %v2694 = vsub.f32 %v1530, %v2577
        %v2695 = vsub.f32 %v1532, %v2581
        %v2696 = vsub.f32 %v1534, %v2577
        %v2697 = vsub.f32 %v1536, %v2581
        %v2698 = vsub.f32 %v1540, %v2577
        %v2699 = vsub.f32 %v1542, %v2581
        %v2700 = vsub.f32 %v1544, %v2577
        %v2701 = vsub.f32 %v1546, %v2581
        %v2702 = vsub.f32 %v1550, %v2577
        %v2703 = vsub.f32 %v1552, %v2581
        %v2704 = vsub.f32 %v1554, %v2577
        %v2705 = vsub.f32 %v1556, %v2581
        %v2706 = vsub.f32 %v1560, %v2577
        %v2707 = vsub.f32 %v1562, %v2581
        %v2708 = vsub.f32 %v1564, %v2577
        %v2709 = vsub.f32 %v1566, %v2581
        %v2710 = vsub.f32 %v1570, %v2577
        %v2711 = vsub.f32 %v1572, %v2581
        %v2712 = vsub.f32 %v1574, %v2577
        %v2713 = vsub.f32 %v1576, %v2581
        %v2714 = vsub.f32 %v1580, %v2577
        %v2715 = vsub.f32 %v1582, %v2581
        %v2716 = vsub.f32 %v1584, %v2577
        %v2717 = vsub.f32 %v1586, %v2581
        %v2718 = vsub.f32 %v1590, %v2577
        %v2719 = vsub.f32 %v1592, %v2581
        %v2720 = vsub.f32 %v1594, %v2577
        %v2721 = vsub.f32 %v1596, %v2581
        %v2722 = vsub.f32 %v1600, %v2577
        %v2723 = vsub.f32 %v1602, %v2581
        %v2724 = vsub.f32 %v1604, %v2577
        %v2725 = vsub.f32 %v1606, %v2581
        %v2726 = vsub.f32 %v1610, %v2577
        %v2727 = vsub.f32 %v1612, %v2581
        %v2728 = vsub.f32 %v1614, %v2577
        %v2729 = vsub.f32 %v1616, %v2581
        %v2730 = vsub.f32 %v1620, %v2577
        %v2731 = vsub.f32 %v1622, %v2581
        %v2732 = vsub.f32 %v1624, %v2577
        %v2733 = vsub.f32 %v1626, %v2581
        %v2734 = vsub.f32 %v1743, %v2585
        %v2735 = vsub.f32 %v1745, %v2589
        %v2736 = vsub.f32 %v1747, %v2585
        %v2737 = vsub.f32 %v1749, %v2589
        %v2738 = vsub.f32 %v1753, %v2585
        %v2739 = vsub.f32 %v1755, %v2589
        %v2740 = vsub.f32 %v1757, %v2585
        %v2741 = vsub.f32 %v1759, %v2589
        %v2742 = vsub.f32 %v1763, %v2585
        %v2743 = vsub.f32 %v1765, %v2589
        %v2744 = vsub.f32 %v1767, %v2585
        %v2745 = vsub.f32 %v1769, %v2589
        %v2746 = vsub.f32 %v1773, %v2585
        %v2747 = vsub.f32 %v1775, %v2589
        %v2748 = vsub.f32 %v1777, %v2585
        %v2749 = vsub.f32 %v1779, %v2589
        %v2750 = vsub.f32 %v1783, %v2585
        %v2751 = vsub.f32 %v1785, %v2589
        %v2752 = vsub.f32 %v1787, %v2585
        %v2753 = vsub.f32 %v1789, %v2589
        %v2754 = vsub.f32 %v1793, %v2585
        %v2755 = vsub.f32 %v1795, %v2589
        %v2756 = vsub.f32 %v1797, %v2585
        %v2757 = vsub.f32 %v1799, %v2589
        %v2758 = vsub.f32 %v1803, %v2585
        %v2759 = vsub.f32 %v1805, %v2589
        %v2760 = vsub.f32 %v1807, %v2585
        %v2761 = vsub.f32 %v1809, %v2589
        %v2762 = vsub.f32 %v1813, %v2585
        %v2763 = vsub.f32 %v1815, %v2589
        %v2764 = vsub.f32 %v1817, %v2585
        %v2765 = vsub.f32 %v1819, %v2589
        %v2766 = vsub.f32 %v1823, %v2585
        %v2767 = vsub.f32 %v1825, %v2589
        %v2768 = vsub.f32 %v1827, %v2585
        %v2769 = vsub.f32 %v1829, %v2589
        %v2770 = vsub.f32 %v1833, %v2585
        %v2771 = vsub.f32 %v1835, %v2589
        %v2772 = vsub.f32 %v1837, %v2585
        %v2773 = vsub.f32 %v1839, %v2589
        %v2774 = vsub.f32 %v1843, %v2585
        %v2775 = vsub.f32 %v1845, %v2589
        %v2776 = vsub.f32 %v1847, %v2585
        %v2777 = vsub.f32 %v1849, %v2589
        %v2778 = vsub.f32 %v1853, %v2585
        %v2779 = vsub.f32 %v1855, %v2589
        %v2780 = vsub.f32 %v1857, %v2585
        %v2781 = vsub.f32 %v1859, %v2589
        %v2782 = vsub.f32 %v1863, %v2585
        %v2783 = vsub.f32 %v1865, %v2589
        %v2784 = vsub.f32 %v1867, %v2585
        %v2785 = vsub.f32 %v1869, %v2589
        %v2786 = vsub.f32 %v1873, %v2585
        %v2787 = vsub.f32 %v1875, %v2589
        %v2788 = vsub.f32 %v1877, %v2585
        %v2789 = vsub.f32 %v1879, %v2589
        %v2790 = vsub.f32 %v1883, %v2585
        %v2791 = vsub.f32 %v1885, %v2589
        %v2792 = vsub.f32 %v1887, %v2585
        %v2793 = vsub.f32 %v1889, %v2589
        %v2794 = vsub.f32 %v1893, %v2585
        %v2795 = vsub.f32 %v1895, %v2589
        %v2796 = vsub.f32 %v1897, %v2585
        %v2797 = vsub.f32 %v1899, %v2589
        %v2798 = vsub.f32 %v2016, %v2593
        %v2799 = vsub.f32 %v2018, %v2597
        %v2800 = vsub.f32 %v2020, %v2593
        %v2801 = vsub.f32 %v2022, %v2597
        %v2802 = vsub.f32 %v2026, %v2593
        %v2803 = vsub.f32 %v2028, %v2597
        %v2804 = vsub.f32 %v2030, %v2593
        %v2805 = vsub.f32 %v2032, %v2597
        %v2806 = vsub.f32 %v2036, %v2593
        %v2807 = vsub.f32 %v2038, %v2597
        %v2808 = vsub.f32 %v2040, %v2593
        %v2809 = vsub.f32 %v2042, %v2597
        %v2810 = vsub.f32 %v2046, %v2593
        %v2811 = vsub.f32 %v2048, %v2597
        %v2812 = vsub.f32 %v2050, %v2593
        %v2813 = vsub.f32 %v2052, %v2597
        %v2814 = vsub.f32 %v2056, %v2593
        %v2815 = vsub.f32 %v2058, %v2597
        %v2816 = vsub.f32 %v2060, %v2593
        %v2817 = vsub.f32 %v2062, %v2597
        %v2818 = vsub.f32 %v2066, %v2593
        %v2819 = vsub.f32 %v2068, %v2597
        %v2820 = vsub.f32 %v2070, %v2593
        %v2821 = vsub.f32 %v2072, %v2597
        %v2822 = vsub.f32 %v2076, %v2593
        %v2823 = vsub.f32 %v2078, %v2597
        %v2824 = vsub.f32 %v2080, %v2593
        %v2825 = vsub.f32 %v2082, %v2597
        %v2826 = vsub.f32 %v2086, %v2593
        %v2827 = vsub.f32 %v2088, %v2597
        %v2828 = vsub.f32 %v2090, %v2593
        %v2829 = vsub.f32 %v2092, %v2597
        %v2830 = vsub.f32 %v2096, %v2593
        %v2831 = vsub.f32 %v2098, %v2597
        %v2832 = vsub.f32 %v2100, %v2593
        %v2833 = vsub.f32 %v2102, %v2597
        %v2834 = vsub.f32 %v2106, %v2593
        %v2835 = vsub.f32 %v2108, %v2597
        %v2836 = vsub.f32 %v2110, %v2593
        %v2837 = vsub.f32 %v2112, %v2597
        %v2838 = vsub.f32 %v2116, %v2593
        %v2839 = vsub.f32 %v2118, %v2597
        %v2840 = vsub.f32 %v2120, %v2593
        %v2841 = vsub.f32 %v2122, %v2597
        %v2842 = vsub.f32 %v2126, %v2593
        %v2843 = vsub.f32 %v2128, %v2597
        %v2844 = vsub.f32 %v2130, %v2593
        %v2845 = vsub.f32 %v2132, %v2597
        %v2846 = vsub.f32 %v2136, %v2593
        %v2847 = vsub.f32 %v2138, %v2597
        %v2848 = vsub.f32 %v2140, %v2593
        %v2849 = vsub.f32 %v2142, %v2597
        %v2850 = vsub.f32 %v2146, %v2593
        %v2851 = vsub.f32 %v2148, %v2597
        %v2852 = vsub.f32 %v2150, %v2593
        %v2853 = vsub.f32 %v2152, %v2597
        %v2854 = vsub.f32 %v2156, %v2593
        %v2855 = vsub.f32 %v2158, %v2597
        %v2856 = vsub.f32 %v2160, %v2593
        %v2857 = vsub.f32 %v2162, %v2597
        %v2858 = vsub.f32 %v2166, %v2593
        %v2859 = vsub.f32 %v2168, %v2597
        %v2860 = vsub.f32 %v2170, %v2593
        %v2861 = vsub.f32 %v2172, %v2597
        %v2862 = vmul.f32 %v2606, 1.442695
        %v2863 = vpow.pop %v2862
        %v2864 = vmul.f32 %v2607, 1.442695
        %v2865 = vpow.pop %v2864
        %v2866 = vmul.f32 %v2608, 1.442695
        %v2867 = vpow.pop %v2866
        %v2868 = vmul.f32 %v2609, 1.442695
        %v2869 = vpow.pop %v2868
        %v2870 = vmul.f32 %v2610, 1.442695
        %v2871 = vpow.pop %v2870
        %v2872 = vmul.f32 %v2611, 1.442695
        %v2873 = vpow.pop %v2872
        %v2874 = vmul.f32 %v2612, 1.442695
        %v2875 = vpow.pop %v2874
        %v2876 = vmul.f32 %v2613, 1.442695
        %v2877 = vpow.pop %v2876
        %v2878 = vmul.f32 %v2614, 1.442695
        %v2879 = vpow.pop %v2878
        %v2880 = vmul.f32 %v2615, 1.442695
        %v2881 = vpow.pop %v2880
        %v2882 = vmul.f32 %v2616, 1.442695
        %v2883 = vpow.pop %v2882
        %v2884 = vmul.f32 %v2617, 1.442695
        %v2885 = vpow.pop %v2884
        %v2886 = vmul.f32 %v2618, 1.442695
        %v2887 = vpow.pop %v2886
        %v2888 = vmul.f32 %v2619, 1.442695
        %v2889 = vpow.pop %v2888
        %v2890 = vmul.f32 %v2620, 1.442695
        %v2891 = vpow.pop %v2890
        %v2892 = vmul.f32 %v2621, 1.442695
        %v2893 = vpow.pop %v2892
        %v2894 = vmul.f32 %v2622, 1.442695
        %v2895 = vpow.pop %v2894
        %v2896 = vmul.f32 %v2623, 1.442695
        %v2897 = vpow.pop %v2896
        %v2898 = vmul.f32 %v2624, 1.442695
        %v2899 = vpow.pop %v2898
        %v2900 = vmul.f32 %v2625, 1.442695
        %v2901 = vpow.pop %v2900
        %v2902 = vmul.f32 %v2626, 1.442695
        %v2903 = vpow.pop %v2902
        %v2904 = vmul.f32 %v2627, 1.442695
        %v2905 = vpow.pop %v2904
        %v2906 = vmul.f32 %v2628, 1.442695
        %v2907 = vpow.pop %v2906
        %v2908 = vmul.f32 %v2629, 1.442695
        %v2909 = vpow.pop %v2908
        %v2910 = vmul.f32 %v2630, 1.442695
        %v2911 = vpow.pop %v2910
        %v2912 = vmul.f32 %v2631, 1.442695
        %v2913 = vpow.pop %v2912
        %v2914 = vmul.f32 %v2632, 1.442695
        %v2915 = vpow.pop %v2914
        %v2916 = vmul.f32 %v2633, 1.442695
        %v2917 = vpow.pop %v2916
        %v2918 = vmul.f32 %v2634, 1.442695
        %v2919 = vpow.pop %v2918
        %v2920 = vmul.f32 %v2635, 1.442695
        %v2921 = vpow.pop %v2920
        %v2922 = vmul.f32 %v2636, 1.442695
        %v2923 = vpow.pop %v2922
        %v2924 = vmul.f32 %v2637, 1.442695
        %v2925 = vpow.pop %v2924
        %v2926 = vmul.f32 %v2638, 1.442695
        %v2927 = vpow.pop %v2926
        %v2928 = vmul.f32 %v2639, 1.442695
        %v2929 = vpow.pop %v2928
        %v2930 = vmul.f32 %v2640, 1.442695
        %v2931 = vpow.pop %v2930
        %v2932 = vmul.f32 %v2641, 1.442695
        %v2933 = vpow.pop %v2932
        %v2934 = vmul.f32 %v2642, 1.442695
        %v2935 = vpow.pop %v2934
        %v2936 = vmul.f32 %v2643, 1.442695
        %v2937 = vpow.pop %v2936
        %v2938 = vmul.f32 %v2644, 1.442695
        %v2939 = vpow.pop %v2938
        %v2940 = vmul.f32 %v2645, 1.442695
        %v2941 = vpow.pop %v2940
        %v2942 = vmul.f32 %v2646, 1.442695
        %v2943 = vpow.pop %v2942
        %v2944 = vmul.f32 %v2647, 1.442695
        %v2945 = vpow.pop %v2944
        %v2946 = vmul.f32 %v2648, 1.442695
        %v2947 = vpow.pop %v2946
        %v2948 = vmul.f32 %v2649, 1.442695
        %v2949 = vpow.pop %v2948
        %v2950 = vmul.f32 %v2650, 1.442695
        %v2951 = vpow.pop %v2950
        %v2952 = vmul.f32 %v2651, 1.442695
        %v2953 = vpow.pop %v2952
        %v2954 = vmul.f32 %v2652, 1.442695
        %v2955 = vpow.pop %v2954
        %v2956 = vmul.f32 %v2653, 1.442695
        %v2957 = vpow.pop %v2956
        %v2958 = vmul.f32 %v2654, 1.442695
        %v2959 = vpow.pop %v2958
        %v2960 = vmul.f32 %v2655, 1.442695
        %v2961 = vpow.pop %v2960
        %v2962 = vmul.f32 %v2656, 1.442695
        %v2963 = vpow.pop %v2962
        %v2964 = vmul.f32 %v2657, 1.442695
        %v2965 = vpow.pop %v2964
        %v2966 = vmul.f32 %v2658, 1.442695
        %v2967 = vpow.pop %v2966
        %v2968 = vmul.f32 %v2659, 1.442695
        %v2969 = vpow.pop %v2968
        %v2970 = vmul.f32 %v2660, 1.442695
        %v2971 = vpow.pop %v2970
        %v2972 = vmul.f32 %v2661, 1.442695
        %v2973 = vpow.pop %v2972
        %v2974 = vmul.f32 %v2662, 1.442695
        %v2975 = vpow.pop %v2974
        %v2976 = vmul.f32 %v2663, 1.442695
        %v2977 = vpow.pop %v2976
        %v2978 = vmul.f32 %v2664, 1.442695
        %v2979 = vpow.pop %v2978
        %v2980 = vmul.f32 %v2665, 1.442695
        %v2981 = vpow.pop %v2980
        %v2982 = vmul.f32 %v2666, 1.442695
        %v2983 = vpow.pop %v2982
        %v2984 = vmul.f32 %v2667, 1.442695
        %v2985 = vpow.pop %v2984
        %v2986 = vmul.f32 %v2668, 1.442695
        %v2987 = vpow.pop %v2986
        %v2988 = vmul.f32 %v2669, 1.442695
        %v2989 = vpow.pop %v2988
        %v2990 = vmul.f32 %v2670, 1.442695
        %v2991 = vpow.pop %v2990
        %v2992 = vmul.f32 %v2671, 1.442695
        %v2993 = vpow.pop %v2992
        %v2994 = vmul.f32 %v2672, 1.442695
        %v2995 = vpow.pop %v2994
        %v2996 = vmul.f32 %v2673, 1.442695
        %v2997 = vpow.pop %v2996
        %v2998 = vmul.f32 %v2674, 1.442695
        %v2999 = vpow.pop %v2998
        %v3000 = vmul.f32 %v2675, 1.442695
        %v3001 = vpow.pop %v3000
        %v3002 = vmul.f32 %v2676, 1.442695
        %v3003 = vpow.pop %v3002
        %v3004 = vmul.f32 %v2677, 1.442695
        %v3005 = vpow.pop %v3004
        %v3006 = vmul.f32 %v2678, 1.442695
        %v3007 = vpow.pop %v3006
        %v3008 = vmul.f32 %v2679, 1.442695
        %v3009 = vpow.pop %v3008
        %v3010 = vmul.f32 %v2680, 1.442695
        %v3011 = vpow.pop %v3010
        %v3012 = vmul.f32 %v2681, 1.442695
        %v3013 = vpow.pop %v3012
        %v3014 = vmul.f32 %v2682, 1.442695
        %v3015 = vpow.pop %v3014
        %v3016 = vmul.f32 %v2683, 1.442695
        %v3017 = vpow.pop %v3016
        %v3018 = vmul.f32 %v2684, 1.442695
        %v3019 = vpow.pop %v3018
        %v3020 = vmul.f32 %v2685, 1.442695
        %v3021 = vpow.pop %v3020
        %v3022 = vmul.f32 %v2686, 1.442695
        %v3023 = vpow.pop %v3022
        %v3024 = vmul.f32 %v2687, 1.442695
        %v3025 = vpow.pop %v3024
        %v3026 = vmul.f32 %v2688, 1.442695
        %v3027 = vpow.pop %v3026
        %v3028 = vmul.f32 %v2689, 1.442695
        %v3029 = vpow.pop %v3028
        %v3030 = vmul.f32 %v2690, 1.442695
        %v3031 = vpow.pop %v3030
        %v3032 = vmul.f32 %v2691, 1.442695
        %v3033 = vpow.pop %v3032
        %v3034 = vmul.f32 %v2692, 1.442695
        %v3035 = vpow.pop %v3034
        %v3036 = vmul.f32 %v2693, 1.442695
        %v3037 = vpow.pop %v3036
        %v3038 = vmul.f32 %v2694, 1.442695
        %v3039 = vpow.pop %v3038
        %v3040 = vmul.f32 %v2695, 1.442695
        %v3041 = vpow.pop %v3040
        %v3042 = vmul.f32 %v2696, 1.442695
        %v3043 = vpow.pop %v3042
        %v3044 = vmul.f32 %v2697, 1.442695
        %v3045 = vpow.pop %v3044
        %v3046 = vmul.f32 %v2698, 1.442695
        %v3047 = vpow.pop %v3046
        %v3048 = vmul.f32 %v2699, 1.442695
        %v3049 = vpow.pop %v3048
        %v3050 = vmul.f32 %v2700, 1.442695
        %v3051 = vpow.pop %v3050
        %v3052 = vmul.f32 %v2701, 1.442695
        %v3053 = vpow.pop %v3052
        %v3054 = vmul.f32 %v2702, 1.442695
        %v3055 = vpow.pop %v3054
        %v3056 = vmul.f32 %v2703, 1.442695
        %v3057 = vpow.pop %v3056
        %v3058 = vmul.f32 %v2704, 1.442695
        %v3059 = vpow.pop %v3058
        %v3060 = vmul.f32 %v2705, 1.442695
        %v3061 = vpow.pop %v3060
        %v3062 = vmul.f32 %v2706, 1.442695
        %v3063 = vpow.pop %v3062
        %v3064 = vmul.f32 %v2707, 1.442695
        %v3065 = vpow.pop %v3064
        %v3066 = vmul.f32 %v2708, 1.442695
        %v3067 = vpow.pop %v3066
        %v3068 = vmul.f32 %v2709, 1.442695
        %v3069 = vpow.pop %v3068
        %v3070 = vmul.f32 %v2710, 1.442695
        %v3071 = vpow.pop %v3070
        %v3072 = vmul.f32 %v2711, 1.442695
        %v3073 = vpow.pop %v3072
        %v3074 = vmul.f32 %v2712, 1.442695
        %v3075 = vpow.pop %v3074
        %v3076 = vmul.f32 %v2713, 1.442695
        %v3077 = vpow.pop %v3076
        %v3078 = vmul.f32 %v2714, 1.442695
        %v3079 = vpow.pop %v3078
        %v3080 = vmul.f32 %v2715, 1.442695
        %v3081 = vpow.pop %v3080
        %v3082 = vmul.f32 %v2716, 1.442695
        %v3083 = vpow.pop %v3082
        %v3084 = vmul.f32 %v2717, 1.442695
        %v3085 = vpow.pop %v3084
        %v3086 = vmul.f32 %v2718, 1.442695
        %v3087 = vpow.pop %v3086
        %v3088 = vmul.f32 %v2719, 1.442695
        %v3089 = vpow.pop %v3088
        %v3090 = vmul.f32 %v2720, 1.442695
        %v3091 = vpow.pop %v3090
        %v3092 = vmul.f32 %v2721, 1.442695
        %v3093 = vpow.pop %v3092
        %v3094 = vmul.f32 %v2722, 1.442695
        %v3095 = vpow.pop %v3094
        %v3096 = vmul.f32 %v2723, 1.442695
        %v3097 = vpow.pop %v3096
        %v3098 = vmul.f32 %v2724, 1.442695
        %v3099 = vpow.pop %v3098
        %v3100 = vmul.f32 %v2725, 1.442695
        %v3101 = vpow.pop %v3100
        %v3102 = vmul.f32 %v2726, 1.442695
        %v3103 = vpow.pop %v3102
        %v3104 = vmul.f32 %v2727, 1.442695
        %v3105 = vpow.pop %v3104
        %v3106 = vmul.f32 %v2728, 1.442695
        %v3107 = vpow.pop %v3106
        %v3108 = vmul.f32 %v2729, 1.442695
        %v3109 = vpow.pop %v3108
        %v3110 = vmul.f32 %v2730, 1.442695
        %v3111 = vpow.pop %v3110
        %v3112 = vmul.f32 %v2731, 1.442695
        %v3113 = vpow.pop %v3112
        %v3114 = vmul.f32 %v2732, 1.442695
        %v3115 = vpow.pop %v3114
        %v3116 = vmul.f32 %v2733, 1.442695
        %v3117 = vpow.pop %v3116
        %v3118 = vmul.f32 %v2734, 1.442695
        %v3119 = vpow.pop %v3118
        %v3120 = vmul.f32 %v2735, 1.442695
        %v3121 = vpow.pop %v3120
        %v3122 = vmul.f32 %v2736, 1.442695
        %v3123 = vpow.pop %v3122
        %v3124 = vmul.f32 %v2737, 1.442695
        %v3125 = vpow.pop %v3124
        %v3126 = vmul.f32 %v2738, 1.442695
        %v3127 = vpow.pop %v3126
        %v3128 = vmul.f32 %v2739, 1.442695
        %v3129 = vpow.pop %v3128
        %v3130 = vmul.f32 %v2740, 1.442695
        %v3131 = vpow.pop %v3130
        %v3132 = vmul.f32 %v2741, 1.442695
        %v3133 = vpow.pop %v3132
        %v3134 = vmul.f32 %v2742, 1.442695
        %v3135 = vpow.pop %v3134
        %v3136 = vmul.f32 %v2743, 1.442695
        %v3137 = vpow.pop %v3136
        %v3138 = vmul.f32 %v2744, 1.442695
        %v3139 = vpow.pop %v3138
        %v3140 = vmul.f32 %v2745, 1.442695
        %v3141 = vpow.pop %v3140
        %v3142 = vmul.f32 %v2746, 1.442695
        %v3143 = vpow.pop %v3142
        %v3144 = vmul.f32 %v2747, 1.442695
        %v3145 = vpow.pop %v3144
        %v3146 = vmul.f32 %v2748, 1.442695
        %v3147 = vpow.pop %v3146
        %v3148 = vmul.f32 %v2749, 1.442695
        %v3149 = vpow.pop %v3148
        %v3150 = vmul.f32 %v2750, 1.442695
        %v3151 = vpow.pop %v3150
        %v3152 = vmul.f32 %v2751, 1.442695
        %v3153 = vpow.pop %v3152
        %v3154 = vmul.f32 %v2752, 1.442695
        %v3155 = vpow.pop %v3154
        %v3156 = vmul.f32 %v2753, 1.442695
        %v3157 = vpow.pop %v3156
        %v3158 = vmul.f32 %v2754, 1.442695
        %v3159 = vpow.pop %v3158
        %v3160 = vmul.f32 %v2755, 1.442695
        %v3161 = vpow.pop %v3160
        %v3162 = vmul.f32 %v2756, 1.442695
        %v3163 = vpow.pop %v3162
        %v3164 = vmul.f32 %v2757, 1.442695
        %v3165 = vpow.pop %v3164
        %v3166 = vmul.f32 %v2758, 1.442695
        %v3167 = vpow.pop %v3166
        %v3168 = vmul.f32 %v2759, 1.442695
        %v3169 = vpow.pop %v3168
        %v3170 = vmul.f32 %v2760, 1.442695
        %v3171 = vpow.pop %v3170
        %v3172 = vmul.f32 %v2761, 1.442695
        %v3173 = vpow.pop %v3172
        %v3174 = vmul.f32 %v2762, 1.442695
        %v3175 = vpow.pop %v3174
        %v3176 = vmul.f32 %v2763, 1.442695
        %v3177 = vpow.pop %v3176
        %v3178 = vmul.f32 %v2764, 1.442695
        %v3179 = vpow.pop %v3178
        %v3180 = vmul.f32 %v2765, 1.442695
        %v3181 = vpow.pop %v3180
        %v3182 = vmul.f32 %v2766, 1.442695
        %v3183 = vpow.pop %v3182
        %v3184 = vmul.f32 %v2767, 1.442695
        %v3185 = vpow.pop %v3184
        %v3186 = vmul.f32 %v2768, 1.442695
        %v3187 = vpow.pop %v3186
        %v3188 = vmul.f32 %v2769, 1.442695
        %v3189 = vpow.pop %v3188
        %v3190 = vmul.f32 %v2770, 1.442695
        %v3191 = vpow.pop %v3190
        %v3192 = vmul.f32 %v2771, 1.442695
        %v3193 = vpow.pop %v3192
        %v3194 = vmul.f32 %v2772, 1.442695
        %v3195 = vpow.pop %v3194
        %v3196 = vmul.f32 %v2773, 1.442695
        %v3197 = vpow.pop %v3196
        %v3198 = vmul.f32 %v2774, 1.442695
        %v3199 = vpow.pop %v3198
        %v3200 = vmul.f32 %v2775, 1.442695
        %v3201 = vpow.pop %v3200
        %v3202 = vmul.f32 %v2776, 1.442695
        %v3203 = vpow.pop %v3202
        %v3204 = vmul.f32 %v2777, 1.442695
        %v3205 = vpow.pop %v3204
        %v3206 = vmul.f32 %v2778, 1.442695
        %v3207 = vpow.pop %v3206
        %v3208 = vmul.f32 %v2779, 1.442695
        %v3209 = vpow.pop %v3208
        %v3210 = vmul.f32 %v2780, 1.442695
        %v3211 = vpow.pop %v3210
        %v3212 = vmul.f32 %v2781, 1.442695
        %v3213 = vpow.pop %v3212
        %v3214 = vmul.f32 %v2782, 1.442695
        %v3215 = vpow.pop %v3214
        %v3216 = vmul.f32 %v2783, 1.442695
        %v3217 = vpow.pop %v3216
        %v3218 = vmul.f32 %v2784, 1.442695
        %v3219 = vpow.pop %v3218
        %v3220 = vmul.f32 %v2785, 1.442695
        %v3221 = vpow.pop %v3220
        %v3222 = vmul.f32 %v2786, 1.442695
        %v3223 = vpow.pop %v3222
        %v3224 = vmul.f32 %v2787, 1.442695
        %v3225 = vpow.pop %v3224
        %v3226 = vmul.f32 %v2788, 1.442695
        %v3227 = vpow.pop %v3226
        %v3228 = vmul.f32 %v2789, 1.442695
        %v3229 = vpow.pop %v3228
        %v3230 = vmul.f32 %v2790, 1.442695
        %v3231 = vpow.pop %v3230
        %v3232 = vmul.f32 %v2791, 1.442695
        %v3233 = vpow.pop %v3232
        %v3234 = vmul.f32 %v2792, 1.442695
        %v3235 = vpow.pop %v3234
        %v3236 = vmul.f32 %v2793, 1.442695
        %v3237 = vpow.pop %v3236
        %v3238 = vmul.f32 %v2794, 1.442695
        %v3239 = vpow.pop %v3238
        %v3240 = vmul.f32 %v2795, 1.442695
        %v3241 = vpow.pop %v3240
        %v3242 = vmul.f32 %v2796, 1.442695
        %v3243 = vpow.pop %v3242
        %v3244 = vmul.f32 %v2797, 1.442695
        %v3245 = vpow.pop %v3244
        %v3246 = vmul.f32 %v2798, 1.442695
        %v3247 = vpow.pop %v3246
        %v3248 = vmul.f32 %v2799, 1.442695
        %v3249 = vpow.pop %v3248
        %v3250 = vmul.f32 %v2800, 1.442695
        %v3251 = vpow.pop %v3250
        %v3252 = vmul.f32 %v2801, 1.442695
        %v3253 = vpow.pop %v3252
        %v3254 = vmul.f32 %v2802, 1.442695
        %v3255 = vpow.pop %v3254
        %v3256 = vmul.f32 %v2803, 1.442695
        %v3257 = vpow.pop %v3256
        %v3258 = vmul.f32 %v2804, 1.442695
        %v3259 = vpow.pop %v3258
        %v3260 = vmul.f32 %v2805, 1.442695
        %v3261 = vpow.pop %v3260
        %v3262 = vmul.f32 %v2806, 1.442695
        %v3263 = vpow.pop %v3262
        %v3264 = vmul.f32 %v2807, 1.442695
        %v3265 = vpow.pop %v3264
        %v3266 = vmul.f32 %v2808, 1.442695
        %v3267 = vpow.pop %v3266
        %v3268 = vmul.f32 %v2809, 1.442695
        %v3269 = vpow.pop %v3268
        %v3270 = vmul.f32 %v2810, 1.442695
        %v3271 = vpow.pop %v3270
        %v3272 = vmul.f32 %v2811, 1.442695
        %v3273 = vpow.pop %v3272
        %v3274 = vmul.f32 %v2812, 1.442695
        %v3275 = vpow.pop %v3274
        %v3276 = vmul.f32 %v2813, 1.442695
        %v3277 = vpow.pop %v3276
        %v3278 = vmul.f32 %v2814, 1.442695
        %v3279 = vpow.pop %v3278
        %v3280 = vmul.f32 %v2815, 1.442695
        %v3281 = vpow.pop %v3280
        %v3282 = vmul.f32 %v2816, 1.442695
        %v3283 = vpow.pop %v3282
        %v3284 = vmul.f32 %v2817, 1.442695
        %v3285 = vpow.pop %v3284
        %v3286 = vmul.f32 %v2818, 1.442695
        %v3287 = vpow.pop %v3286
        %v3288 = vmul.f32 %v2819, 1.442695
        %v3289 = vpow.pop %v3288
        %v3290 = vmul.f32 %v2820, 1.442695
        %v3291 = vpow.pop %v3290
        %v3292 = vmul.f32 %v2821, 1.442695
        %v3293 = vpow.pop %v3292
        %v3294 = vmul.f32 %v2822, 1.442695
        %v3295 = vpow.pop %v3294
        %v3296 = vmul.f32 %v2823, 1.442695
        %v3297 = vpow.pop %v3296
        %v3298 = vmul.f32 %v2824, 1.442695
        %v3299 = vpow.pop %v3298
        %v3300 = vmul.f32 %v2825, 1.442695
        %v3301 = vpow.pop %v3300
        %v3302 = vmul.f32 %v2826, 1.442695
        %v3303 = vpow.pop %v3302
        %v3304 = vmul.f32 %v2827, 1.442695
        %v3305 = vpow.pop %v3304
        %v3306 = vmul.f32 %v2828, 1.442695
        %v3307 = vpow.pop %v3306
        %v3308 = vmul.f32 %v2829, 1.442695
        %v3309 = vpow.pop %v3308
        %v3310 = vmul.f32 %v2830, 1.442695
        %v3311 = vpow.pop %v3310
        %v3312 = vmul.f32 %v2831, 1.442695
        %v3313 = vpow.pop %v3312
        %v3314 = vmul.f32 %v2832, 1.442695
        %v3315 = vpow.pop %v3314
        %v3316 = vmul.f32 %v2833, 1.442695
        %v3317 = vpow.pop %v3316
        %v3318 = vmul.f32 %v2834, 1.442695
        %v3319 = vpow.pop %v3318
        %v3320 = vmul.f32 %v2835, 1.442695
        %v3321 = vpow.pop %v3320
        %v3322 = vmul.f32 %v2836, 1.442695
        %v3323 = vpow.pop %v3322
        %v3324 = vmul.f32 %v2837, 1.442695
        %v3325 = vpow.pop %v3324
        %v3326 = vmul.f32 %v2838, 1.442695
        %v3327 = vpow.pop %v3326
        %v3328 = vmul.f32 %v2839, 1.442695
        %v3329 = vpow.pop %v3328
        %v3330 = vmul.f32 %v2840, 1.442695
        %v3331 = vpow.pop %v3330
        %v3332 = vmul.f32 %v2841, 1.442695
        %v3333 = vpow.pop %v3332
        %v3334 = vmul.f32 %v2842, 1.442695
        %v3335 = vpow.pop %v3334
        %v3336 = vmul.f32 %v2843, 1.442695
        %v3337 = vpow.pop %v3336
        %v3338 = vmul.f32 %v2844, 1.442695
        %v3339 = vpow.pop %v3338
        %v3340 = vmul.f32 %v2845, 1.442695
        %v3341 = vpow.pop %v3340
        %v3342 = vmul.f32 %v2846, 1.442695
        %v3343 = vpow.pop %v3342
        %v3344 = vmul.f32 %v2847, 1.442695
        %v3345 = vpow.pop %v3344
        %v3346 = vmul.f32 %v2848, 1.442695
        %v3347 = vpow.pop %v3346
        %v3348 = vmul.f32 %v2849, 1.442695
        %v3349 = vpow.pop %v3348
        %v3350 = vmul.f32 %v2850, 1.442695
        %v3351 = vpow.pop %v3350
        %v3352 = vmul.f32 %v2851, 1.442695
        %v3353 = vpow.pop %v3352
        %v3354 = vmul.f32 %v2852, 1.442695
        %v3355 = vpow.pop %v3354
        %v3356 = vmul.f32 %v2853, 1.442695
        %v3357 = vpow.pop %v3356
        %v3358 = vmul.f32 %v2854, 1.442695
        %v3359 = vpow.pop %v3358
        %v3360 = vmul.f32 %v2855, 1.442695
        %v3361 = vpow.pop %v3360
        %v3362 = vmul.f32 %v2856, 1.442695
        %v3363 = vpow.pop %v3362
        %v3364 = vmul.f32 %v2857, 1.442695
        %v3365 = vpow.pop %v3364
        %v3366 = vmul.f32 %v2858, 1.442695
        %v3367 = vpow.pop %v3366
        %v3368 = vmul.f32 %v2859, 1.442695
        %v3369 = vpow.pop %v3368
        %v3370 = vmul.f32 %v2860, 1.442695
        %v3371 = vpow.pop %v3370
        %v3372 = vmul.f32 %v2861, 1.442695
        %v3373 = vpow.pop %v3372
        %v3374 = vld [vmem:[#allocation4] sm:$0x3]
        %v3375 = vld [vmem:[#allocation4 + $0x2] sm:$0x3]
        %v3376 = vld [vmem:[#allocation4 + $0x4] sm:$0x3]
        %v3377 = vld [vmem:[#allocation4 + $0x6] sm:$0x3]
        %v3378 = vmul.f32 %v2555, %v3374
        %v3379 = vmul.f32 %v2557, %v3375
        %v3380 = vmul.f32 %v2559, %v3376
        %v3381 = vmul.f32 %v2561, %v3377
        %v3382 = vadd.f32 %v2863, %v2867
        %v3383 = vadd.f32 %v3382, %v2871
        %v3384 = vadd.f32 %v3383, %v2875
        %v3385 = vadd.f32 %v3384, %v2879
        %v3386 = vadd.f32 %v3385, %v2883
        %v3387 = vadd.f32 %v3386, %v2887
        %v3388 = vadd.f32 %v3387, %v2891
        %v3389 = vadd.f32 %v3388, %v2895
        %v3390 = vadd.f32 %v3389, %v2899
        %v3391 = vadd.f32 %v3390, %v2903
        %v3392 = vadd.f32 %v3391, %v2907
        %v3393 = vadd.f32 %v3392, %v2911
        %v3394 = vadd.f32 %v3393, %v2915
        %v3395 = vadd.f32 %v3394, %v2919
        %v3396 = vadd.f32 %v3395, %v2923
        %v3397 = vadd.f32 %v3396, %v2927
        %v3398 = vadd.f32 %v3397, %v2931
        %v3399 = vadd.f32 %v3398, %v2935
        %v3400 = vadd.f32 %v3399, %v2939
        %v3401 = vadd.f32 %v3400, %v2943
        %v3402 = vadd.f32 %v3401, %v2947
        %v3403 = vadd.f32 %v3402, %v2951
        %v3404 = vadd.f32 %v3403, %v2955
        %v3405 = vadd.f32 %v3404, %v2959
        %v3406 = vadd.f32 %v3405, %v2963
        %v3407 = vadd.f32 %v3406, %v2967
        %v3408 = vadd.f32 %v3407, %v2971
        %v3409 = vadd.f32 %v3408, %v2975
        %v3410 = vadd.f32 %v3409, %v2979
        %v3411 = vadd.f32 %v3410, %v2983
        %v3412 = vadd.f32 %v3411, %v2987
        %v3413 = vrot.slane %v3412, 4
        %v3414 = vadd.f32 %v3412, %v3413
        %v3415 = vrot.slane %v3414, 2
        %v3416 = vadd.f32 %v3414, %v3415
        %v3417 = vrot.slane %v3416, 1
        %v3418 = vadd.f32 %v3416, %v3417
        %v3419 = vadd.f32 %v2865, %v2869
        %v3420 = vadd.f32 %v3419, %v2873
        %v3421 = vadd.f32 %v3420, %v2877
        %v3422 = vadd.f32 %v3421, %v2881
        %v3423 = vadd.f32 %v3422, %v2885
        %v3424 = vadd.f32 %v3423, %v2889
        %v3425 = vadd.f32 %v3424, %v2893
        %v3426 = vadd.f32 %v3425, %v2897
        %v3427 = vadd.f32 %v3426, %v2901
        %v3428 = vadd.f32 %v3427, %v2905
        %v3429 = vadd.f32 %v3428, %v2909
        %v3430 = vadd.f32 %v3429, %v2913
        %v3431 = vadd.f32 %v3430, %v2917
        %v3432 = vadd.f32 %v3431, %v2921
        %v3433 = vadd.f32 %v3432, %v2925
        %v3434 = vadd.f32 %v3433, %v2929
        %v3435 = vadd.f32 %v3434, %v2933
        %v3436 = vadd.f32 %v3435, %v2937
        %v3437 = vadd.f32 %v3436, %v2941
        %v3438 = vadd.f32 %v3437, %v2945
        %v3439 = vadd.f32 %v3438, %v2949
        %v3440 = vadd.f32 %v3439, %v2953
        %v3441 = vadd.f32 %v3440, %v2957
        %v3442 = vadd.f32 %v3441, %v2961
        %v3443 = vadd.f32 %v3442, %v2965
        %v3444 = vadd.f32 %v3443, %v2969
        %v3445 = vadd.f32 %v3444, %v2973
        %v3446 = vadd.f32 %v3445, %v2977
        %v3447 = vadd.f32 %v3446, %v2981
        %v3448 = vadd.f32 %v3447, %v2985
        %v3449 = vadd.f32 %v3448, %v2989
        %v3450 = vrot.slane %v3449, 4
        %v3451 = vadd.f32 %v3449, %v3450
        %v3452 = vrot.slane %v3451, 2
        %v3453 = vadd.f32 %v3451, %v3452
        %v3454 = vrot.slane %v3453, 1
        %v3455 = vadd.f32 %v3453, %v3454
        %v3456 = vadd.f32 %v2991, %v2995
        %v3457 = vadd.f32 %v3456, %v2999
        %v3458 = vadd.f32 %v3457, %v3003
        %v3459 = vadd.f32 %v3458, %v3007
        %v3460 = vadd.f32 %v3459, %v3011
        %v3461 = vadd.f32 %v3460, %v3015
        %v3462 = vadd.f32 %v3461, %v3019
        %v3463 = vadd.f32 %v3462, %v3023
        %v3464 = vadd.f32 %v3463, %v3027
        %v3465 = vadd.f32 %v3464, %v3031
        %v3466 = vadd.f32 %v3465, %v3035
        %v3467 = vadd.f32 %v3466, %v3039
        %v3468 = vadd.f32 %v3467, %v3043
        %v3469 = vadd.f32 %v3468, %v3047
        %v3470 = vadd.f32 %v3469, %v3051
        %v3471 = vadd.f32 %v3470, %v3055
        %v3472 = vadd.f32 %v3471, %v3059
        %v3473 = vadd.f32 %v3472, %v3063
        %v3474 = vadd.f32 %v3473, %v3067
        %v3475 = vadd.f32 %v3474, %v3071
        %v3476 = vadd.f32 %v3475, %v3075
        %v3477 = vadd.f32 %v3476, %v3079
        %v3478 = vadd.f32 %v3477, %v3083
        %v3479 = vadd.f32 %v3478, %v3087
        %v3480 = vadd.f32 %v3479, %v3091
        %v3481 = vadd.f32 %v3480, %v3095
        %v3482 = vadd.f32 %v3481, %v3099
        %v3483 = vadd.f32 %v3482, %v3103
        %v3484 = vadd.f32 %v3483, %v3107
        %v3485 = vadd.f32 %v3484, %v3111
        %v3486 = vadd.f32 %v3485, %v3115
        %v3487 = vrot.slane %v3486, 4
        %v3488 = vadd.f32 %v3486, %v3487
        %v3489 = vrot.slane %v3488, 2
        %v3490 = vadd.f32 %v3488, %v3489
        %v3491 = vrot.slane %v3490, 1
        %v3492 = vadd.f32 %v3490, %v3491
        %v3493 = vadd.f32 %v2993, %v2997
        %v3494 = vadd.f32 %v3493, %v3001
        %v3495 = vadd.f32 %v3494, %v3005
        %v3496 = vadd.f32 %v3495, %v3009
        %v3497 = vadd.f32 %v3496, %v3013
        %v3498 = vadd.f32 %v3497, %v3017
        %v3499 = vadd.f32 %v3498, %v3021
        %v3500 = vadd.f32 %v3499, %v3025
        %v3501 = vadd.f32 %v3500, %v3029
        %v3502 = vadd.f32 %v3501, %v3033
        %v3503 = vadd.f32 %v3502, %v3037
        %v3504 = vadd.f32 %v3503, %v3041
        %v3505 = vadd.f32 %v3504, %v3045
        %v3506 = vadd.f32 %v3505, %v3049
        %v3507 = vadd.f32 %v3506, %v3053
        %v3508 = vadd.f32 %v3507, %v3057
        %v3509 = vadd.f32 %v3508, %v3061
        %v3510 = vadd.f32 %v3509, %v3065
        %v3511 = vadd.f32 %v3510, %v3069
        %v3512 = vadd.f32 %v3511, %v3073
        %v3513 = vadd.f32 %v3512, %v3077
        %v3514 = vadd.f32 %v3513, %v3081
        %v3515 = vadd.f32 %v3514, %v3085
        %v3516 = vadd.f32 %v3515, %v3089
        %v3517 = vadd.f32 %v3516, %v3093
        %v3518 = vadd.f32 %v3517, %v3097
        %v3519 = vadd.f32 %v3518, %v3101
        %v3520 = vadd.f32 %v3519, %v3105
        %v3521 = vadd.f32 %v3520, %v3109
        %v3522 = vadd.f32 %v3521, %v3113
        %v3523 = vadd.f32 %v3522, %v3117
        %v3524 = vrot.slane %v3523, 4
        %v3525 = vadd.f32 %v3523, %v3524
        %v3526 = vrot.slane %v3525, 2
        %v3527 = vadd.f32 %v3525, %v3526
        %v3528 = vrot.slane %v3527, 1
        %v3529 = vadd.f32 %v3527, %v3528
        %v3530 = vadd.f32 %v3119, %v3123
        %v3531 = vadd.f32 %v3530, %v3127
        %v3532 = vadd.f32 %v3531, %v3131
        %v3533 = vadd.f32 %v3532, %v3135
        %v3534 = vadd.f32 %v3533, %v3139
        %v3535 = vadd.f32 %v3534, %v3143
        %v3536 = vadd.f32 %v3535, %v3147
        %v3537 = vadd.f32 %v3536, %v3151
        %v3538 = vadd.f32 %v3537, %v3155
        %v3539 = vadd.f32 %v3538, %v3159
        %v3540 = vadd.f32 %v3539, %v3163
        %v3541 = vadd.f32 %v3540, %v3167
        %v3542 = vadd.f32 %v3541, %v3171
        %v3543 = vadd.f32 %v3542, %v3175
        %v3544 = vadd.f32 %v3543, %v3179
        %v3545 = vadd.f32 %v3544, %v3183
        %v3546 = vadd.f32 %v3545, %v3187
        %v3547 = vadd.f32 %v3546, %v3191
        %v3548 = vadd.f32 %v3547, %v3195
        %v3549 = vadd.f32 %v3548, %v3199
        %v3550 = vadd.f32 %v3549, %v3203
        %v3551 = vadd.f32 %v3550, %v3207
        %v3552 = vadd.f32 %v3551, %v3211
        %v3553 = vadd.f32 %v3552, %v3215
        %v3554 = vadd.f32 %v3553, %v3219
        %v3555 = vadd.f32 %v3554, %v3223
        %v3556 = vadd.f32 %v3555, %v3227
        %v3557 = vadd.f32 %v3556, %v3231
        %v3558 = vadd.f32 %v3557, %v3235
        %v3559 = vadd.f32 %v3558, %v3239
        %v3560 = vadd.f32 %v3559, %v3243
        %v3561 = vrot.slane %v3560, 4
        %v3562 = vadd.f32 %v3560, %v3561
        %v3563 = vrot.slane %v3562, 2
        %v3564 = vadd.f32 %v3562, %v3563
        %v3565 = vrot.slane %v3564, 1
        %v3566 = vadd.f32 %v3564, %v3565
        %v3567 = vadd.f32 %v3121, %v3125
        %v3568 = vadd.f32 %v3567, %v3129
        %v3569 = vadd.f32 %v3568, %v3133
        %v3570 = vadd.f32 %v3569, %v3137
        %v3571 = vadd.f32 %v3570, %v3141
        %v3572 = vadd.f32 %v3571, %v3145
        %v3573 = vadd.f32 %v3572, %v3149
        %v3574 = vadd.f32 %v3573, %v3153
        %v3575 = vadd.f32 %v3574, %v3157
        %v3576 = vadd.f32 %v3575, %v3161
        %v3577 = vadd.f32 %v3576, %v3165
        %v3578 = vadd.f32 %v3577, %v3169
        %v3579 = vadd.f32 %v3578, %v3173
        %v3580 = vadd.f32 %v3579, %v3177
        %v3581 = vadd.f32 %v3580, %v3181
        %v3582 = vadd.f32 %v3581, %v3185
        %v3583 = vadd.f32 %v3582, %v3189
        %v3584 = vadd.f32 %v3583, %v3193
        %v3585 = vadd.f32 %v3584, %v3197
        %v3586 = vadd.f32 %v3585, %v3201
        %v3587 = vadd.f32 %v3586, %v3205
        %v3588 = vadd.f32 %v3587, %v3209
        %v3589 = vadd.f32 %v3588, %v3213
        %v3590 = vadd.f32 %v3589, %v3217
        %v3591 = vadd.f32 %v3590, %v3221
        %v3592 = vadd.f32 %v3591, %v3225
        %v3593 = vadd.f32 %v3592, %v3229
        %v3594 = vadd.f32 %v3593, %v3233
        %v3595 = vadd.f32 %v3594, %v3237
        %v3596 = vadd.f32 %v3595, %v3241
        %v3597 = vadd.f32 %v3596, %v3245
        %v3598 = vrot.slane %v3597, 4
        %v3599 = vadd.f32 %v3597, %v3598
        %v3600 = vrot.slane %v3599, 2
        %v3601 = vadd.f32 %v3599, %v3600
        %v3602 = vrot.slane %v3601, 1
        %v3603 = vadd.f32 %v3601, %v3602
        %v3604 = vadd.f32 %v3247, %v3251
        %v3605 = vadd.f32 %v3604, %v3255
        %v3606 = vadd.f32 %v3605, %v3259
        %v3607 = vadd.f32 %v3606, %v3263
        %v3608 = vadd.f32 %v3607, %v3267
        %v3609 = vadd.f32 %v3608, %v3271
        %v3610 = vadd.f32 %v3609, %v3275
        %v3611 = vadd.f32 %v3610, %v3279
        %v3612 = vadd.f32 %v3611, %v3283
        %v3613 = vadd.f32 %v3612, %v3287
        %v3614 = vadd.f32 %v3613, %v3291
        %v3615 = vadd.f32 %v3614, %v3295
        %v3616 = vadd.f32 %v3615, %v3299
        %v3617 = vadd.f32 %v3616, %v3303
        %v3618 = vadd.f32 %v3617, %v3307
        %v3619 = vadd.f32 %v3618, %v3311
        %v3620 = vadd.f32 %v3619, %v3315
        %v3621 = vadd.f32 %v3620, %v3319
        %v3622 = vadd.f32 %v3621, %v3323
        %v3623 = vadd.f32 %v3622, %v3327
        %v3624 = vadd.f32 %v3623, %v3331
        %v3625 = vadd.f32 %v3624, %v3335
        %v3626 = vadd.f32 %v3625, %v3339
        %v3627 = vadd.f32 %v3626, %v3343
        %v3628 = vadd.f32 %v3627, %v3347
        %v3629 = vadd.f32 %v3628, %v3351
        %v3630 = vadd.f32 %v3629, %v3355
        %v3631 = vadd.f32 %v3630, %v3359
        %v3632 = vadd.f32 %v3631, %v3363
        %v3633 = vadd.f32 %v3632, %v3367
        %v3634 = vadd.f32 %v3633, %v3371
        %v3635 = vrot.slane %v3634, 4
        %v3636 = vadd.f32 %v3634, %v3635
        %v3637 = vrot.slane %v3636, 2
        %v3638 = vadd.f32 %v3636, %v3637
        %v3639 = vrot.slane %v3638, 1
        %v3640 = vadd.f32 %v3638, %v3639
        %v3641 = vadd.f32 %v3249, %v3253
        %v3642 = vadd.f32 %v3641, %v3257
        %v3643 = vadd.f32 %v3642, %v3261
        %v3644 = vadd.f32 %v3643, %v3265
        %v3645 = vadd.f32 %v3644, %v3269
        %v3646 = vadd.f32 %v3645, %v3273
        %v3647 = vadd.f32 %v3646, %v3277
        %v3648 = vadd.f32 %v3647, %v3281
        %v3649 = vadd.f32 %v3648, %v3285
        %v3650 = vadd.f32 %v3649, %v3289
        %v3651 = vadd.f32 %v3650, %v3293
        %v3652 = vadd.f32 %v3651, %v3297
        %v3653 = vadd.f32 %v3652, %v3301
        %v3654 = vadd.f32 %v3653, %v3305
        %v3655 = vadd.f32 %v3654, %v3309
        %v3656 = vadd.f32 %v3655, %v3313
        %v3657 = vadd.f32 %v3656, %v3317
        %v3658 = vadd.f32 %v3657, %v3321
        %v3659 = vadd.f32 %v3658, %v3325
        %v3660 = vadd.f32 %v3659, %v3329
        %v3661 = vadd.f32 %v3660, %v3333
        %v3662 = vadd.f32 %v3661, %v3337
        %v3663 = vadd.f32 %v3662, %v3341
        %v3664 = vadd.f32 %v3663, %v3345
        %v3665 = vadd.f32 %v3664, %v3349
        %v3666 = vadd.f32 %v3665, %v3353
        %v3667 = vadd.f32 %v3666, %v3357
        %v3668 = vadd.f32 %v3667, %v3361
        %v3669 = vadd.f32 %v3668, %v3365
        %v3670 = vadd.f32 %v3669, %v3369
        %v3671 = vadd.f32 %v3670, %v3373
        %v3672 = vrot.slane %v3671, 4
        %v3673 = vadd.f32 %v3671, %v3672
        %v3674 = vrot.slane %v3673, 2
        %v3675 = vadd.f32 %v3673, %v3674
        %v3676 = vrot.slane %v3675, 1
        %v3677 = vadd.f32 %v3675, %v3676
        %v3686 = vcombine.low %v3418, %v3455
        %v3688 = vunpack.c.l.s4 1966171168
        %v3689 = vunpack.c.0.s8 %v3688
        %v3690 = vlaneseq
        %v3691 = vshrl.u32 %v3690, 7
        %v3692 = vsub.s32 %v3689, %v3691
        %v3693 = vrot.slane %v3686, %v3692
        %v3695 = vunpack.c.l.s4 1966171168
        %v3696 = vunpack.c.0.s8 %v3695
        %v3697 = vlaneseq
        %v3698 = vshrl.u32 %v3697, 7
        %v3699 = vsub.s32 %v3696, %v3698
        %v3700 = vrot.slane %v3693, %v3699
        %v3701 = vcombine.low %v3492, %v3529
        %v3703 = vunpack.c.l.s4 1966171168
        %v3704 = vunpack.c.0.s8 %v3703
        %v3705 = vlaneseq
        %v3706 = vshrl.u32 %v3705, 7
        %v3707 = vsub.s32 %v3704, %v3706
        %v3708 = vrot.slane %v3701, %v3707
        %v3710 = vunpack.c.l.s4 1966171168
        %v3711 = vunpack.c.0.s8 %v3710
        %v3712 = vlaneseq
        %v3713 = vshrl.u32 %v3712, 7
        %v3714 = vsub.s32 %v3711, %v3713
        %v3715 = vrot.slane %v3708, %v3714
        %v3716 = vcombine.low %v3566, %v3603
        %v3718 = vunpack.c.l.s4 1966171168
        %v3719 = vunpack.c.0.s8 %v3718
        %v3720 = vlaneseq
        %v3721 = vshrl.u32 %v3720, 7
        %v3722 = vsub.s32 %v3719, %v3721
        %v3723 = vrot.slane %v3716, %v3722
        %v3725 = vunpack.c.l.s4 1966171168
        %v3726 = vunpack.c.0.s8 %v3725
        %v3727 = vlaneseq
        %v3728 = vshrl.u32 %v3727, 7
        %v3729 = vsub.s32 %v3726, %v3728
        %v3730 = vrot.slane %v3723, %v3729
        %v3731 = vcombine.low %v3640, %v3677
        %v3733 = vunpack.c.l.s4 1966171168
        %v3734 = vunpack.c.0.s8 %v3733
        %v3735 = vlaneseq
        %v3736 = vshrl.u32 %v3735, 7
        %v3737 = vsub.s32 %v3734, %v3736
        %v3738 = vrot.slane %v3731, %v3737
        %v3740 = vunpack.c.l.s4 1966171168
        %v3741 = vunpack.c.0.s8 %v3740
        %v3742 = vlaneseq
        %v3743 = vshrl.u32 %v3742, 7
        %v3744 = vsub.s32 %v3741, %v3743
        %v3745 = vrot.slane %v3738, %v3744
        %v3750 = vadd.f32 %v3378, %v3700
        %v3751 = vadd.f32 %v3379, %v3715
        %v3752 = vadd.f32 %v3380, %v3730
        %v3753 = vadd.f32 %v3381, %v3745
        %v3754 = vlaneseq
        %vm3755 = vcmp.ge.s32.totalorder %v3754, 0
        %vm3756 = vcmp.lt.s32.totalorder %v3754, 256
        %vm3757 = vmand %vm3755, %vm3756
        %3758 = vst.msk [vmem:[#allocation4] sm:$0x3] %vm3757, %v3750
        %3759 = vst.msk [vmem:[#allocation4 + $0x2] sm:$0x3] %vm3757, %v3751
        %3760 = vst.msk [vmem:[#allocation4 + $0x4] sm:$0x3] %vm3757, %v3752
        %3761 = vst.msk [vmem:[#allocation4 + $0x6] sm:$0x3] %vm3757, %v3753
        %v3762 = vpack.c.bf16 %v2867, %v2863
        %v3763 = vpack.c.bf16 %v2869, %v2865
        %v3764 = vpack.c.bf16 %v2875, %v2871
        %v3765 = vpack.c.bf16 %v2877, %v2873
        %v3766 = vpack.c.bf16 %v2883, %v2879
        %v3767 = vpack.c.bf16 %v2885, %v2881
        %v3768 = vpack.c.bf16 %v2891, %v2887
        %v3769 = vpack.c.bf16 %v2893, %v2889
        %v3770 = vpack.c.bf16 %v2899, %v2895
        %v3771 = vpack.c.bf16 %v2901, %v2897
        %v3772 = vpack.c.bf16 %v2907, %v2903
        %v3773 = vpack.c.bf16 %v2909, %v2905
        %v3774 = vpack.c.bf16 %v2915, %v2911
        %v3775 = vpack.c.bf16 %v2917, %v2913
        %v3776 = vpack.c.bf16 %v2923, %v2919
        %v3777 = vpack.c.bf16 %v2925, %v2921
        %v3778 = vpack.c.bf16 %v2931, %v2927
        %v3779 = vpack.c.bf16 %v2933, %v2929
        %v3780 = vpack.c.bf16 %v2939, %v2935
        %v3781 = vpack.c.bf16 %v2941, %v2937
        %v3782 = vpack.c.bf16 %v2947, %v2943
        %v3783 = vpack.c.bf16 %v2949, %v2945
        %v3784 = vpack.c.bf16 %v2955, %v2951
        %v3785 = vpack.c.bf16 %v2957, %v2953
        %v3786 = vpack.c.bf16 %v2963, %v2959
        %v3787 = vpack.c.bf16 %v2965, %v2961
        %v3788 = vpack.c.bf16 %v2971, %v2967
        %v3789 = vpack.c.bf16 %v2973, %v2969
        %v3790 = vpack.c.bf16 %v2979, %v2975
        %v3791 = vpack.c.bf16 %v2981, %v2977
        %v3792 = vpack.c.bf16 %v2987, %v2983
        %v3793 = vpack.c.bf16 %v2989, %v2985
        %v3794 = vpack.c.bf16 %v2995, %v2991
        %v3795 = vpack.c.bf16 %v2997, %v2993
        %v3796 = vpack.c.bf16 %v3003, %v2999
        %v3797 = vpack.c.bf16 %v3005, %v3001
        %v3798 = vpack.c.bf16 %v3011, %v3007
        %v3799 = vpack.c.bf16 %v3013, %v3009
        %v3800 = vpack.c.bf16 %v3019, %v3015
        %v3801 = vpack.c.bf16 %v3021, %v3017
        %v3802 = vpack.c.bf16 %v3027, %v3023
        %v3803 = vpack.c.bf16 %v3029, %v3025
        %v3804 = vpack.c.bf16 %v3035, %v3031
        %v3805 = vpack.c.bf16 %v3037, %v3033
        %v3806 = vpack.c.bf16 %v3043, %v3039
        %v3807 = vpack.c.bf16 %v3045, %v3041
        %v3808 = vpack.c.bf16 %v3051, %v3047
        %v3809 = vpack.c.bf16 %v3053, %v3049
        %v3810 = vpack.c.bf16 %v3059, %v3055
        %v3811 = vpack.c.bf16 %v3061, %v3057
        %v3812 = vpack.c.bf16 %v3067, %v3063
        %v3813 = vpack.c.bf16 %v3069, %v3065
        %v3814 = vpack.c.bf16 %v3075, %v3071
        %v3815 = vpack.c.bf16 %v3077, %v3073
        %v3816 = vpack.c.bf16 %v3083, %v3079
        %v3817 = vpack.c.bf16 %v3085, %v3081
        %v3818 = vpack.c.bf16 %v3091, %v3087
        %v3819 = vpack.c.bf16 %v3093, %v3089
        %v3820 = vpack.c.bf16 %v3099, %v3095
        %v3821 = vpack.c.bf16 %v3101, %v3097
        %v3822 = vpack.c.bf16 %v3107, %v3103
        %v3823 = vpack.c.bf16 %v3109, %v3105
        %v3824 = vpack.c.bf16 %v3115, %v3111
        %v3825 = vpack.c.bf16 %v3117, %v3113
        %v3826 = vpack.c.bf16 %v3123, %v3119
        %v3827 = vpack.c.bf16 %v3125, %v3121
        %v3828 = vpack.c.bf16 %v3131, %v3127
        %v3829 = vpack.c.bf16 %v3133, %v3129
        %v3830 = vpack.c.bf16 %v3139, %v3135
        %v3831 = vpack.c.bf16 %v3141, %v3137
        %v3832 = vpack.c.bf16 %v3147, %v3143
        %v3833 = vpack.c.bf16 %v3149, %v3145
        %v3834 = vpack.c.bf16 %v3155, %v3151
        %v3835 = vpack.c.bf16 %v3157, %v3153
        %v3836 = vpack.c.bf16 %v3163, %v3159
        %v3837 = vpack.c.bf16 %v3165, %v3161
        %v3838 = vpack.c.bf16 %v3171, %v3167
        %v3839 = vpack.c.bf16 %v3173, %v3169
        %v3840 = vpack.c.bf16 %v3179, %v3175
        %v3841 = vpack.c.bf16 %v3181, %v3177
        %v3842 = vpack.c.bf16 %v3187, %v3183
        %v3843 = vpack.c.bf16 %v3189, %v3185
        %v3844 = vpack.c.bf16 %v3195, %v3191
        %v3845 = vpack.c.bf16 %v3197, %v3193
        %v3846 = vpack.c.bf16 %v3203, %v3199
        %v3847 = vpack.c.bf16 %v3205, %v3201
        %v3848 = vpack.c.bf16 %v3211, %v3207
        %v3849 = vpack.c.bf16 %v3213, %v3209
        %v3850 = vpack.c.bf16 %v3219, %v3215
        %v3851 = vpack.c.bf16 %v3221, %v3217
        %v3852 = vpack.c.bf16 %v3227, %v3223
        %v3853 = vpack.c.bf16 %v3229, %v3225
        %v3854 = vpack.c.bf16 %v3235, %v3231
        %v3855 = vpack.c.bf16 %v3237, %v3233
        %v3856 = vpack.c.bf16 %v3243, %v3239
        %v3857 = vpack.c.bf16 %v3245, %v3241
        %v3858 = vpack.c.bf16 %v3251, %v3247
        %v3859 = vpack.c.bf16 %v3253, %v3249
        %v3860 = vpack.c.bf16 %v3259, %v3255
        %v3861 = vpack.c.bf16 %v3261, %v3257
        %v3862 = vpack.c.bf16 %v3267, %v3263
        %v3863 = vpack.c.bf16 %v3269, %v3265
        %v3864 = vpack.c.bf16 %v3275, %v3271
        %v3865 = vpack.c.bf16 %v3277, %v3273
        %v3866 = vpack.c.bf16 %v3283, %v3279
        %v3867 = vpack.c.bf16 %v3285, %v3281
        %v3868 = vpack.c.bf16 %v3291, %v3287
        %v3869 = vpack.c.bf16 %v3293, %v3289
        %v3870 = vpack.c.bf16 %v3299, %v3295
        %v3871 = vpack.c.bf16 %v3301, %v3297
        %v3872 = vpack.c.bf16 %v3307, %v3303
        %v3873 = vpack.c.bf16 %v3309, %v3305
        %v3874 = vpack.c.bf16 %v3315, %v3311
        %v3875 = vpack.c.bf16 %v3317, %v3313
        %v3876 = vpack.c.bf16 %v3323, %v3319
        %v3877 = vpack.c.bf16 %v3325, %v3321
        %v3878 = vpack.c.bf16 %v3331, %v3327
        %v3879 = vpack.c.bf16 %v3333, %v3329
        %v3880 = vpack.c.bf16 %v3339, %v3335
        %v3881 = vpack.c.bf16 %v3341, %v3337
        %v3882 = vpack.c.bf16 %v3347, %v3343
        %v3883 = vpack.c.bf16 %v3349, %v3345
        %v3884 = vpack.c.bf16 %v3355, %v3351
        %v3885 = vpack.c.bf16 %v3357, %v3353
        %v3886 = vpack.c.bf16 %v3363, %v3359
        %v3887 = vpack.c.bf16 %v3365, %v3361
        %v3888 = vpack.c.bf16 %v3371, %v3367
        %v3889 = vpack.c.bf16 %v3373, %v3369
        %3890 = vmatprep.subr.bf16.mxu0 %v3763
        %3891 = vmatpush1.bf16.msra.mxu0 %v3762
        %3892 = vmatprep.subr.bf16.mxu0 %v3765
        %3893 = vmatpush1.bf16.msra.mxu0 %v3764
        %3894 = vmatprep.subr.bf16.mxu0 %v3767
        %3895 = vmatpush1.bf16.msra.mxu0 %v3766
        %3896 = vmatprep.subr.bf16.mxu0 %v3769
        %3897 = vmatpush1.bf16.msra.mxu0 %v3768
        %3898 = vmatprep.subr.bf16.mxu0 %v3771
        %3899 = vmatpush1.bf16.msra.mxu0 %v3770
        %3900 = vmatprep.subr.bf16.mxu0 %v3773
        %3901 = vmatpush1.bf16.msra.mxu0 %v3772
        %3902 = vmatprep.subr.bf16.mxu0 %v3775
        %3903 = vmatpush1.bf16.msra.mxu0 %v3774
        %3904 = vmatprep.subr.bf16.mxu0 %v3777
        %3905 = vmatpush1.bf16.msra.mxu0 %v3776
        %3906 = vmatprep.subr.bf16.mxu0 %v3779
        %3907 = vmatpush1.bf16.msra.mxu0 %v3778
        %3908 = vmatprep.subr.bf16.mxu0 %v3781
        %3909 = vmatpush1.bf16.msra.mxu0 %v3780
        %3910 = vmatprep.subr.bf16.mxu0 %v3783
        %3911 = vmatpush1.bf16.msra.mxu0 %v3782
        %3912 = vmatprep.subr.bf16.mxu0 %v3785
        %3913 = vmatpush1.bf16.msra.mxu0 %v3784
        %3914 = vmatprep.subr.bf16.mxu0 %v3787
        %3915 = vmatpush1.bf16.msra.mxu0 %v3786
        %3916 = vmatprep.subr.bf16.mxu0 %v3789
        %3917 = vmatpush1.bf16.msra.mxu0 %v3788
        %3918 = vmatprep.subr.bf16.mxu0 %v3791
        %3919 = vmatpush1.bf16.msra.mxu0 %v3790
        %3920 = vmatprep.subr.bf16.mxu0 %v3793
        %3921 = vmatpush1.bf16.msra.mxu0 %v3792
        %3922 = vmatprep.mubr.bf16.mxu0 %v1050
        %3923 = vmatmul.mubr.bf16.gmra.mrb[0].mxu0 %v1049
        %v3924 = vpop.f32.mrb[0].mxu0
        %v3925 = vadd.f32 0.0, %v3924
        %v3926 = vpop.f32.mrb[0].mxu0
        %v3927 = vadd.f32 0.0, %v3926
        %v3928 = vpop.f32.mrb[0].mxu0
        %v3929 = vadd.f32 0.0, %v3928
        %v3930 = vpop.f32.mrb[0].mxu0
        %v3931 = vadd.f32 0.0, %v3930
        %3932 = vmatprep.mubr.bf16.mxu0 %v1052
        %3933 = vmatmul.mubr.bf16.gmra.mrb[0].mxu0 %v1051
        %v3934 = vpop.f32.mrb[0].mxu0
        %v3935 = vadd.f32 0.0, %v3934
        %v3936 = vpop.f32.mrb[0].mxu0
        %v3937 = vadd.f32 0.0, %v3936
        %v3938 = vpop.f32.mrb[0].mxu0
        %v3939 = vadd.f32 0.0, %v3938
        %v3940 = vpop.f32.mrb[0].mxu0
        %v3941 = vadd.f32 0.0, %v3940
        %3942 = vdwg.mxu0
        %3943 = vmatprep.subr.bf16.mxu0 %v3795
        %3944 = vmatpush1.bf16.msra.mxu0 %v3794
        %3945 = vmatprep.subr.bf16.mxu0 %v3797
        %3946 = vmatpush1.bf16.msra.mxu0 %v3796
        %3947 = vmatprep.subr.bf16.mxu0 %v3799
        %3948 = vmatpush1.bf16.msra.mxu0 %v3798
        %3949 = vmatprep.subr.bf16.mxu0 %v3801
        %3950 = vmatpush1.bf16.msra.mxu0 %v3800
        %3951 = vmatprep.subr.bf16.mxu0 %v3803
        %3952 = vmatpush1.bf16.msra.mxu0 %v3802
        %3953 = vmatprep.subr.bf16.mxu0 %v3805
        %3954 = vmatpush1.bf16.msra.mxu0 %v3804
        %3955 = vmatprep.subr.bf16.mxu0 %v3807
        %3956 = vmatpush1.bf16.msra.mxu0 %v3806
        %3957 = vmatprep.subr.bf16.mxu0 %v3809
        %3958 = vmatpush1.bf16.msra.mxu0 %v3808
        %3959 = vmatprep.subr.bf16.mxu0 %v3811
        %3960 = vmatpush1.bf16.msra.mxu0 %v3810
        %3961 = vmatprep.subr.bf16.mxu0 %v3813
        %3962 = vmatpush1.bf16.msra.mxu0 %v3812
        %3963 = vmatprep.subr.bf16.mxu0 %v3815
        %3964 = vmatpush1.bf16.msra.mxu0 %v3814
        %3965 = vmatprep.subr.bf16.mxu0 %v3817
        %3966 = vmatpush1.bf16.msra.mxu0 %v3816
        %3967 = vmatprep.subr.bf16.mxu0 %v3819
        %3968 = vmatpush1.bf16.msra.mxu0 %v3818
        %3969 = vmatprep.subr.bf16.mxu0 %v3821
        %3970 = vmatpush1.bf16.msra.mxu0 %v3820
        %3971 = vmatprep.subr.bf16.mxu0 %v3823
        %3972 = vmatpush1.bf16.msra.mxu0 %v3822
        %3973 = vmatprep.subr.bf16.mxu0 %v3825
        %3974 = vmatpush1.bf16.msra.mxu0 %v3824
        %3975 = vmatprep.mubr.bf16.mxu0 %v1054
        %3976 = vmatmul.mubr.bf16.gmra.mrb[0].mxu0 %v1053
        %v3977 = vpop.f32.mrb[0].mxu0
        %v3978 = vadd.f32 0.0, %v3977
        %v3979 = vpop.f32.mrb[0].mxu0
        %v3980 = vadd.f32 0.0, %v3979
        %v3981 = vpop.f32.mrb[0].mxu0
        %v3982 = vadd.f32 0.0, %v3981
        %v3983 = vpop.f32.mrb[0].mxu0
        %v3984 = vadd.f32 0.0, %v3983
        %3985 = vmatprep.mubr.bf16.mxu0 %v1056
        %3986 = vmatmul.mubr.bf16.gmra.mrb[0].mxu0 %v1055
        %v3987 = vpop.f32.mrb[0].mxu0
        %v3988 = vadd.f32 0.0, %v3987
        %v3989 = vpop.f32.mrb[0].mxu0
        %v3990 = vadd.f32 0.0, %v3989
        %v3991 = vpop.f32.mrb[0].mxu0
        %v3992 = vadd.f32 0.0, %v3991
        %v3993 = vpop.f32.mrb[0].mxu0
        %v3994 = vadd.f32 0.0, %v3993
        %3995 = vdwg.mxu0
        %3996 = vmatprep.subr.bf16.mxu0 %v3827
        %3997 = vmatpush1.bf16.msra.mxu0 %v3826
        %3998 = vmatprep.subr.bf16.mxu0 %v3829
        %3999 = vmatpush1.bf16.msra.mxu0 %v3828
        %4000 = vmatprep.subr.bf16.mxu0 %v3831
        %4001 = vmatpush1.bf16.msra.mxu0 %v3830
        %4002 = vmatprep.subr.bf16.mxu0 %v3833
        %4003 = vmatpush1.bf16.msra.mxu0 %v3832
        %4004 = vmatprep.subr.bf16.mxu0 %v3835
        %4005 = vmatpush1.bf16.msra.mxu0 %v3834
        %4006 = vmatprep.subr.bf16.mxu0 %v3837
        %4007 = vmatpush1.bf16.msra.mxu0 %v3836
        %4008 = vmatprep.subr.bf16.mxu0 %v3839
        %4009 = vmatpush1.bf16.msra.mxu0 %v3838
        %4010 = vmatprep.subr.bf16.mxu0 %v3841
        %4011 = vmatpush1.bf16.msra.mxu0 %v3840
        %4012 = vmatprep.subr.bf16.mxu0 %v3843
        %4013 = vmatpush1.bf16.msra.mxu0 %v3842
        %4014 = vmatprep.subr.bf16.mxu0 %v3845
        %4015 = vmatpush1.bf16.msra.mxu0 %v3844
        %4016 = vmatprep.subr.bf16.mxu0 %v3847
        %4017 = vmatpush1.bf16.msra.mxu0 %v3846
        %4018 = vmatprep.subr.bf16.mxu0 %v3849
        %4019 = vmatpush1.bf16.msra.mxu0 %v3848
        %4020 = vmatprep.subr.bf16.mxu0 %v3851
        %4021 = vmatpush1.bf16.msra.mxu0 %v3850
        %4022 = vmatprep.subr.bf16.mxu0 %v3853
        %4023 = vmatpush1.bf16.msra.mxu0 %v3852
        %4024 = vmatprep.subr.bf16.mxu0 %v3855
        %4025 = vmatpush1.bf16.msra.mxu0 %v3854
        %4026 = vmatprep.subr.bf16.mxu0 %v3857
        %4027 = vmatpush1.bf16.msra.mxu0 %v3856
        %4028 = vmatprep.mubr.bf16.mxu0 %v1058
        %4029 = vmatmul.mubr.bf16.gmra.mrb[0].mxu0 %v1057
        %v4030 = vpop.f32.mrb[0].mxu0
        %v4031 = vadd.f32 0.0, %v4030
        %v4032 = vpop.f32.mrb[0].mxu0
        %v4033 = vadd.f32 0.0, %v4032
        %v4034 = vpop.f32.mrb[0].mxu0
        %v4035 = vadd.f32 0.0, %v4034
        %v4036 = vpop.f32.mrb[0].mxu0
        %v4037 = vadd.f32 0.0, %v4036
        %4038 = vmatprep.mubr.bf16.mxu0 %v1060
        %4039 = vmatmul.mubr.bf16.gmra.mrb[0].mxu0 %v1059
        %v4040 = vpop.f32.mrb[0].mxu0
        %v4041 = vadd.f32 0.0, %v4040
        %v4042 = vpop.f32.mrb[0].mxu0
        %v4043 = vadd.f32 0.0, %v4042
        %v4044 = vpop.f32.mrb[0].mxu0
        %v4045 = vadd.f32 0.0, %v4044
        %v4046 = vpop.f32.mrb[0].mxu0
        %v4047 = vadd.f32 0.0, %v4046
        %4048 = vdwg.mxu0
        %4049 = vmatprep.subr.bf16.mxu0 %v3859
        %4050 = vmatpush1.bf16.msra.mxu0 %v3858
        %4051 = vmatprep.subr.bf16.mxu0 %v3861
        %4052 = vmatpush1.bf16.msra.mxu0 %v3860
        %4053 = vmatprep.subr.bf16.mxu0 %v3863
        %4054 = vmatpush1.bf16.msra.mxu0 %v3862
        %4055 = vmatprep.subr.bf16.mxu0 %v3865
        %4056 = vmatpush1.bf16.msra.mxu0 %v3864
        %4057 = vmatprep.subr.bf16.mxu0 %v3867
        %4058 = vmatpush1.bf16.msra.mxu0 %v3866
        %4059 = vmatprep.subr.bf16.mxu0 %v3869
        %4060 = vmatpush1.bf16.msra.mxu0 %v3868
        %4061 = vmatprep.subr.bf16.mxu0 %v3871
        %4062 = vmatpush1.bf16.msra.mxu0 %v3870
        %4063 = vmatprep.subr.bf16.mxu0 %v3873
        %4064 = vmatpush1.bf16.msra.mxu0 %v3872
        %4065 = vmatprep.subr.bf16.mxu0 %v3875
        %4066 = vmatpush1.bf16.msra.mxu0 %v3874
        %4067 = vmatprep.subr.bf16.mxu0 %v3877
        %4068 = vmatpush1.bf16.msra.mxu0 %v3876
        %4069 = vmatprep.subr.bf16.mxu0 %v3879
        %4070 = vmatpush1.bf16.msra.mxu0 %v3878
        %4071 = vmatprep.subr.bf16.mxu0 %v3881
        %4072 = vmatpush1.bf16.msra.mxu0 %v3880
        %4073 = vmatprep.subr.bf16.mxu0 %v3883
        %4074 = vmatpush1.bf16.msra.mxu0 %v3882
        %4075 = vmatprep.subr.bf16.mxu0 %v3885
        %4076 = vmatpush1.bf16.msra.mxu0 %v3884
        %4077 = vmatprep.subr.bf16.mxu0 %v3887
        %4078 = vmatpush1.bf16.msra.mxu0 %v3886
        %4079 = vmatprep.subr.bf16.mxu0 %v3889
        %4080 = vmatpush1.bf16.msra.mxu0 %v3888
        %4081 = vmatprep.mubr.bf16.mxu0 %v1062
        %4082 = vmatmul.mubr.bf16.gmra.mrb[0].mxu0 %v1061
        %v4083 = vpop.f32.mrb[0].mxu0
        %v4084 = vadd.f32 0.0, %v4083
        %v4085 = vpop.f32.mrb[0].mxu0
        %v4086 = vadd.f32 0.0, %v4085
        %v4087 = vpop.f32.mrb[0].mxu0
        %v4088 = vadd.f32 0.0, %v4087
        %v4089 = vpop.f32.mrb[0].mxu0
        %v4090 = vadd.f32 0.0, %v4089
        %4091 = vmatprep.mubr.bf16.mxu0 %v1064
        %4092 = vmatmul.mubr.bf16.gmra.mrb[0].mxu0 %v1063
        %v4093 = vpop.f32.mrb[0].mxu0
        %v4094 = vadd.f32 0.0, %v4093
        %v4095 = vpop.f32.mrb[0].mxu0
        %v4096 = vadd.f32 0.0, %v4095
        %v4097 = vpop.f32.mrb[0].mxu0
        %v4098 = vadd.f32 0.0, %v4097
        %v4099 = vpop.f32.mrb[0].mxu0
        %v4100 = vadd.f32 0.0, %v4099
        %4101 = vdwg.mxu0
        %v4102 = vld [vmem:[#allocation5] sm:$0xff]
        %v4103 = vld [vmem:[#allocation5 + $0x8] sm:$0xff]
        %v4104 = vld [vmem:[#allocation5 + $0x10] sm:$0xff]
        %v4105 = vld [vmem:[#allocation5 + $0x18] sm:$0xff]
        %v4106 = vld [vmem:[#allocation5 + $0x20] sm:$0xff]
        %v4107 = vld [vmem:[#allocation5 + $0x28] sm:$0xff]
        %v4108 = vld [vmem:[#allocation5 + $0x30] sm:$0xff]
        %v4109 = vld [vmem:[#allocation5 + $0x38] sm:$0xff]
        %v4110 = vld [vmem:[#allocation5 + $0x40] sm:$0xff]
        %v4111 = vld [vmem:[#allocation5 + $0x48] sm:$0xff]
        %v4112 = vld [vmem:[#allocation5 + $0x50] sm:$0xff]
        %v4113 = vld [vmem:[#allocation5 + $0x58] sm:$0xff]
        %v4114 = vld [vmem:[#allocation5 + $0x60] sm:$0xff]
        %v4115 = vld [vmem:[#allocation5 + $0x68] sm:$0xff]
        %v4116 = vld [vmem:[#allocation5 + $0x70] sm:$0xff]
        %v4117 = vld [vmem:[#allocation5 + $0x78] sm:$0xff]
        %v4118 = vld [vmem:[#allocation5 + $0x80] sm:$0xff]
        %v4119 = vld [vmem:[#allocation5 + $0x88] sm:$0xff]
        %v4120 = vld [vmem:[#allocation5 + $0x90] sm:$0xff]
        %v4121 = vld [vmem:[#allocation5 + $0x98] sm:$0xff]
        %v4122 = vld [vmem:[#allocation5 + $0xa0] sm:$0xff]
        %v4123 = vld [vmem:[#allocation5 + $0xa8] sm:$0xff]
        %v4124 = vld [vmem:[#allocation5 + $0xb0] sm:$0xff]
        %v4125 = vld [vmem:[#allocation5 + $0xb8] sm:$0xff]
        %v4126 = vld [vmem:[#allocation5 + $0xc0] sm:$0xff]
        %v4127 = vld [vmem:[#allocation5 + $0xc8] sm:$0xff]
        %v4128 = vld [vmem:[#allocation5 + $0xd0] sm:$0xff]
        %v4129 = vld [vmem:[#allocation5 + $0xd8] sm:$0xff]
        %v4130 = vld [vmem:[#allocation5 + $0xe0] sm:$0xff]
        %v4131 = vld [vmem:[#allocation5 + $0xe8] sm:$0xff]
        %v4132 = vld [vmem:[#allocation5 + $0xf0] sm:$0xff]
        %v4133 = vld [vmem:[#allocation5 + $0xf8] sm:$0xff]
        %v4138 = vlaneseq
        %v4139 = vshrl.u32 %v4138, 7
        %v4140 = vsub.s32 0, %v4139
        %v4141 = vrot.slane %v2555, %v4140
        %v4142 = vlaneseq
        %v4143 = vshrl.u32 %v4142, 7
        %v4144 = vsub.s32 1, %v4143
        %v4145 = vrot.slane %v2555, %v4144
        %v4146 = vlaneseq
        %v4147 = vshrl.u32 %v4146, 7
        %v4148 = vsub.s32 0, %v4147
        %v4149 = vrot.slane %v2557, %v4148
        %v4150 = vlaneseq
        %v4151 = vshrl.u32 %v4150, 7
        %v4152 = vsub.s32 1, %v4151
        %v4153 = vrot.slane %v2557, %v4152
        %v4154 = vlaneseq
        %v4155 = vshrl.u32 %v4154, 7
        %v4156 = vsub.s32 0, %v4155
        %v4157 = vrot.slane %v2559, %v4156
        %v4158 = vlaneseq
        %v4159 = vshrl.u32 %v4158, 7
        %v4160 = vsub.s32 1, %v4159
        %v4161 = vrot.slane %v2559, %v4160
        %v4162 = vlaneseq
        %v4163 = vshrl.u32 %v4162, 7
        %v4164 = vsub.s32 0, %v4163
        %v4165 = vrot.slane %v2561, %v4164
        %v4166 = vlaneseq
        %v4167 = vshrl.u32 %v4166, 7
        %v4168 = vsub.s32 1, %v4167
        %v4169 = vrot.slane %v2561, %v4168
        %v4178 = vmul.f32 %v4141, %v4102
        %v4179 = vmul.f32 %v4145, %v4103
        %v4180 = vmul.f32 %v4141, %v4104
        %v4181 = vmul.f32 %v4145, %v4105
        %v4182 = vmul.f32 %v4141, %v4106
        %v4183 = vmul.f32 %v4145, %v4107
        %v4184 = vmul.f32 %v4141, %v4108
        %v4185 = vmul.f32 %v4145, %v4109
        %v4186 = vmul.f32 %v4149, %v4110
        %v4187 = vmul.f32 %v4153, %v4111
        %v4188 = vmul.f32 %v4149, %v4112
        %v4189 = vmul.f32 %v4153, %v4113
        %v4190 = vmul.f32 %v4149, %v4114
        %v4191 = vmul.f32 %v4153, %v4115
        %v4192 = vmul.f32 %v4149, %v4116
        %v4193 = vmul.f32 %v4153, %v4117
        %v4194 = vmul.f32 %v4157, %v4118
        %v4195 = vmul.f32 %v4161, %v4119
        %v4196 = vmul.f32 %v4157, %v4120
        %v4197 = vmul.f32 %v4161, %v4121
        %v4198 = vmul.f32 %v4157, %v4122
        %v4199 = vmul.f32 %v4161, %v4123
        %v4200 = vmul.f32 %v4157, %v4124
        %v4201 = vmul.f32 %v4161, %v4125
        %v4202 = vmul.f32 %v4165, %v4126
        %v4203 = vmul.f32 %v4169, %v4127
        %v4204 = vmul.f32 %v4165, %v4128
        %v4205 = vmul.f32 %v4169, %v4129
        %v4206 = vmul.f32 %v4165, %v4130
        %v4207 = vmul.f32 %v4169, %v4131
        %v4208 = vmul.f32 %v4165, %v4132
        %v4209 = vmul.f32 %v4169, %v4133
        %v4210 = vadd.f32 %v4178, %v3925
        %v4211 = vadd.f32 %v4179, %v3927
        %v4212 = vadd.f32 %v4180, %v3929
        %v4213 = vadd.f32 %v4181, %v3931
        %v4214 = vadd.f32 %v4182, %v3935
        %v4215 = vadd.f32 %v4183, %v3937
        %v4216 = vadd.f32 %v4184, %v3939
        %v4217 = vadd.f32 %v4185, %v3941
        %v4218 = vadd.f32 %v4186, %v3978
        %v4219 = vadd.f32 %v4187, %v3980
        %v4220 = vadd.f32 %v4188, %v3982
        %v4221 = vadd.f32 %v4189, %v3984
        %v4222 = vadd.f32 %v4190, %v3988
        %v4223 = vadd.f32 %v4191, %v3990
        %v4224 = vadd.f32 %v4192, %v3992
        %v4225 = vadd.f32 %v4193, %v3994
        %v4226 = vadd.f32 %v4194, %v4031
        %v4227 = vadd.f32 %v4195, %v4033
        %v4228 = vadd.f32 %v4196, %v4035
        %v4229 = vadd.f32 %v4197, %v4037
        %v4230 = vadd.f32 %v4198, %v4041
        %v4231 = vadd.f32 %v4199, %v4043
        %v4232 = vadd.f32 %v4200, %v4045
        %v4233 = vadd.f32 %v4201, %v4047
        %v4234 = vadd.f32 %v4202, %v4084
        %v4235 = vadd.f32 %v4203, %v4086
        %v4236 = vadd.f32 %v4204, %v4088
        %v4237 = vadd.f32 %v4205, %v4090
        %v4238 = vadd.f32 %v4206, %v4094
        %v4239 = vadd.f32 %v4207, %v4096
        %v4240 = vadd.f32 %v4208, %v4098
        %v4241 = vadd.f32 %v4209, %v4100
        %4242 = vst [vmem:[#allocation5] sm:$0xff] %v4210
        %4243 = vst [vmem:[#allocation5 + $0x8] sm:$0xff] %v4211
        %4244 = vst [vmem:[#allocation5 + $0x10] sm:$0xff] %v4212
        %4245 = vst [vmem:[#allocation5 + $0x18] sm:$0xff] %v4213
        %4246 = vst [vmem:[#allocation5 + $0x20] sm:$0xff] %v4214
        %4247 = vst [vmem:[#allocation5 + $0x28] sm:$0xff] %v4215
        %4248 = vst [vmem:[#allocation5 + $0x30] sm:$0xff] %v4216
        %4249 = vst [vmem:[#allocation5 + $0x38] sm:$0xff] %v4217
        %4250 = vst [vmem:[#allocation5 + $0x40] sm:$0xff] %v4218
        %4251 = vst [vmem:[#allocation5 + $0x48] sm:$0xff] %v4219
        %4252 = vst [vmem:[#allocation5 + $0x50] sm:$0xff] %v4220
        %4253 = vst [vmem:[#allocation5 + $0x58] sm:$0xff] %v4221
        %4254 = vst [vmem:[#allocation5 + $0x60] sm:$0xff] %v4222
        %4255 = vst [vmem:[#allocation5 + $0x68] sm:$0xff] %v4223
        %4256 = vst [vmem:[#allocation5 + $0x70] sm:$0xff] %v4224
        %4257 = vst [vmem:[#allocation5 + $0x78] sm:$0xff] %v4225
        %4258 = vst [vmem:[#allocation5 + $0x80] sm:$0xff] %v4226
        %4259 = vst [vmem:[#allocation5 + $0x88] sm:$0xff] %v4227
        %4260 = vst [vmem:[#allocation5 + $0x90] sm:$0xff] %v4228
        %4261 = vst [vmem:[#allocation5 + $0x98] sm:$0xff] %v4229
        %4262 = vst [vmem:[#allocation5 + $0xa0] sm:$0xff] %v4230
        %4263 = vst [vmem:[#allocation5 + $0xa8] sm:$0xff] %v4231
        %4264 = vst [vmem:[#allocation5 + $0xb0] sm:$0xff] %v4232
        %4265 = vst [vmem:[#allocation5 + $0xb8] sm:$0xff] %v4233
        %4266 = vst [vmem:[#allocation5 + $0xc0] sm:$0xff] %v4234
        %4267 = vst [vmem:[#allocation5 + $0xc8] sm:$0xff] %v4235
        %4268 = vst [vmem:[#allocation5 + $0xd0] sm:$0xff] %v4236
        %4269 = vst [vmem:[#allocation5 + $0xd8] sm:$0xff] %v4237
        %4270 = vst [vmem:[#allocation5 + $0xe0] sm:$0xff] %v4238
        %4271 = vst [vmem:[#allocation5 + $0xe8] sm:$0xff] %v4239
        %4272 = vst [vmem:[#allocation5 + $0xf0] sm:$0xff] %v4240
        %4273 = vst [vmem:[#allocation5 + $0xf8] sm:$0xff] %v4241
        %4274 = vst.msk [vmem:[#allocation3] sm:$0x3] %vm3757, %v2546
        %4275 = vst.msk [vmem:[#allocation3 + $0x2] sm:$0x3] %vm3757, %v2547
        %4276 = vst.msk [vmem:[#allocation3 + $0x4] sm:$0x3] %vm3757, %v2548
        %4277 = vst.msk [vmem:[#allocation3 + $0x6] sm:$0x3] %vm3757, %v2549
        // Predicated region
        $region49: #{tpu_custom_call.1} parent=43 // pred_check
          %p4278 = pneg %p325
        $region50: #{tpu_custom_call.1} parent=43 // pred_check_branch
          %4280 = sbr.rel (%p4278) target = $region52
        $region51: #{tpu_custom_call.1} parent=43 // pred_region
          %v4281 = vld [vmem:[#allocation4] sm:$0x3]
          %v4282 = vld [vmem:[#allocation4 + $0x2] sm:$0x3]
          %v4283 = vld [vmem:[#allocation4 + $0x4] sm:$0x3]
          %v4284 = vld [vmem:[#allocation4 + $0x6] sm:$0x3]
          %v4285 = vrcp.pop %v4281
          %v4286 = vmul.f32 1.0, %v4285
          %v4287 = vrcp.pop %v4282
          %v4288 = vmul.f32 1.0, %v4287
          %v4289 = vrcp.pop %v4283
          %v4290 = vmul.f32 1.0, %v4289
          %v4291 = vrcp.pop %v4284
          %v4292 = vmul.f32 1.0, %v4291
          %v4293 = vld [vmem:[#allocation5] sm:$0xff]
          %v4294 = vld [vmem:[#allocation5 + $0x8] sm:$0xff]
          %v4295 = vld [vmem:[#allocation5 + $0x10] sm:$0xff]
          %v4296 = vld [vmem:[#allocation5 + $0x18] sm:$0xff]
          %v4297 = vld [vmem:[#allocation5 + $0x20] sm:$0xff]
          %v4298 = vld [vmem:[#allocation5 + $0x28] sm:$0xff]
          %v4299 = vld [vmem:[#allocation5 + $0x30] sm:$0xff]
          %v4300 = vld [vmem:[#allocation5 + $0x38] sm:$0xff]
          %v4301 = vld [vmem:[#allocation5 + $0x40] sm:$0xff]
          %v4302 = vld [vmem:[#allocation5 + $0x48] sm:$0xff]
          %v4303 = vld [vmem:[#allocation5 + $0x50] sm:$0xff]
          %v4304 = vld [vmem:[#allocation5 + $0x58] sm:$0xff]
          %v4305 = vld [vmem:[#allocation5 + $0x60] sm:$0xff]
          %v4306 = vld [vmem:[#allocation5 + $0x68] sm:$0xff]
          %v4307 = vld [vmem:[#allocation5 + $0x70] sm:$0xff]
          %v4308 = vld [vmem:[#allocation5 + $0x78] sm:$0xff]
          %v4309 = vld [vmem:[#allocation5 + $0x80] sm:$0xff]
          %v4310 = vld [vmem:[#allocation5 + $0x88] sm:$0xff]
          %v4311 = vld [vmem:[#allocation5 + $0x90] sm:$0xff]
          %v4312 = vld [vmem:[#allocation5 + $0x98] sm:$0xff]
          %v4313 = vld [vmem:[#allocation5 + $0xa0] sm:$0xff]
          %v4314 = vld [vmem:[#allocation5 + $0xa8] sm:$0xff]
          %v4315 = vld [vmem:[#allocation5 + $0xb0] sm:$0xff]
          %v4316 = vld [vmem:[#allocation5 + $0xb8] sm:$0xff]
          %v4317 = vld [vmem:[#allocation5 + $0xc0] sm:$0xff]
          %v4318 = vld [vmem:[#allocation5 + $0xc8] sm:$0xff]
          %v4319 = vld [vmem:[#allocation5 + $0xd0] sm:$0xff]
          %v4320 = vld [vmem:[#allocation5 + $0xd8] sm:$0xff]
          %v4321 = vld [vmem:[#allocation5 + $0xe0] sm:$0xff]
          %v4322 = vld [vmem:[#allocation5 + $0xe8] sm:$0xff]
          %v4323 = vld [vmem:[#allocation5 + $0xf0] sm:$0xff]
          %v4324 = vld [vmem:[#allocation5 + $0xf8] sm:$0xff]
          %v4329 = vlaneseq
          %v4330 = vshrl.u32 %v4329, 7
          %v4331 = vsub.s32 0, %v4330
          %v4332 = vrot.slane %v4286, %v4331
          %v4333 = vlaneseq
          %v4334 = vshrl.u32 %v4333, 7
          %v4335 = vsub.s32 1, %v4334
          %v4336 = vrot.slane %v4286, %v4335
          %v4337 = vlaneseq
          %v4338 = vshrl.u32 %v4337, 7
          %v4339 = vsub.s32 0, %v4338
          %v4340 = vrot.slane %v4288, %v4339
          %v4341 = vlaneseq
          %v4342 = vshrl.u32 %v4341, 7
          %v4343 = vsub.s32 1, %v4342
          %v4344 = vrot.slane %v4288, %v4343
          %v4345 = vlaneseq
          %v4346 = vshrl.u32 %v4345, 7
          %v4347 = vsub.s32 0, %v4346
          %v4348 = vrot.slane %v4290, %v4347
          %v4349 = vlaneseq
          %v4350 = vshrl.u32 %v4349, 7
          %v4351 = vsub.s32 1, %v4350
          %v4352 = vrot.slane %v4290, %v4351
          %v4353 = vlaneseq
          %v4354 = vshrl.u32 %v4353, 7
          %v4355 = vsub.s32 0, %v4354
          %v4356 = vrot.slane %v4292, %v4355
          %v4357 = vlaneseq
          %v4358 = vshrl.u32 %v4357, 7
          %v4359 = vsub.s32 1, %v4358
          %v4360 = vrot.slane %v4292, %v4359
          %v4369 = vmul.f32 %v4293, %v4332
          %v4370 = vmul.f32 %v4294, %v4336
          %v4371 = vmul.f32 %v4295, %v4332
          %v4372 = vmul.f32 %v4296, %v4336
          %v4373 = vmul.f32 %v4297, %v4332
          %v4374 = vmul.f32 %v4298, %v4336
          %v4375 = vmul.f32 %v4299, %v4332
          %v4376 = vmul.f32 %v4300, %v4336
          %v4377 = vmul.f32 %v4301, %v4340
          %v4378 = vmul.f32 %v4302, %v4344
          %v4379 = vmul.f32 %v4303, %v4340
          %v4380 = vmul.f32 %v4304, %v4344
          %v4381 = vmul.f32 %v4305, %v4340
          %v4382 = vmul.f32 %v4306, %v4344
          %v4383 = vmul.f32 %v4307, %v4340
          %v4384 = vmul.f32 %v4308, %v4344
          %v4385 = vmul.f32 %v4309, %v4348
          %v4386 = vmul.f32 %v4310, %v4352
          %v4387 = vmul.f32 %v4311, %v4348
          %v4388 = vmul.f32 %v4312, %v4352
          %v4389 = vmul.f32 %v4313, %v4348
          %v4390 = vmul.f32 %v4314, %v4352
          %v4391 = vmul.f32 %v4315, %v4348
          %v4392 = vmul.f32 %v4316, %v4352
          %v4393 = vmul.f32 %v4317, %v4356
          %v4394 = vmul.f32 %v4318, %v4360
          %v4395 = vmul.f32 %v4319, %v4356
          %v4396 = vmul.f32 %v4320, %v4360
          %v4397 = vmul.f32 %v4321, %v4356
          %v4398 = vmul.f32 %v4322, %v4360
          %v4399 = vmul.f32 %v4323, %v4356
          %v4400 = vmul.f32 %v4324, %v4360
          %v4401 = vld [vmem:[%s4] sm:$0xf]
          %v4402 = vld [vmem:[%s5] sm:$0xf]
          %4404 = vset.pattern.permute.xlu0 0
          %4405 = vperm.xlu0 %4404, %v4402
          %v4406 = vpop.permute.xlu0 %4405
          %4408 = vmatprep.subr.mxu0 %v4370
          %4409 = vmatpush1.msra.mxu0 %v4369
          %4410 = vmatprep.subr.mxu0 %v4372
          %4411 = vmatpush1.msra.mxu0 %v4371
          %4412 = vmatprep.subr.mxu0 %v4374
          %4413 = vmatpush1.msra.mxu0 %v4373
          %4414 = vmatprep.subr.mxu0 %v4376
          %4415 = vmatpush1.msra.mxu0 %v4375
          %4416 = vmatprep.subr.mxu0 %v4378
          %4417 = vmatpush1.msra.mxu0 %v4377
          %4418 = vmatprep.subr.mxu0 %v4380
          %4419 = vmatpush1.msra.mxu0 %v4379
          %4420 = vmatprep.subr.mxu0 %v4382
          %4421 = vmatpush1.msra.mxu0 %v4381
          %4422 = vmatprep.subr.mxu0 %v4384
          %4423 = vmatpush1.msra.mxu0 %v4383
          %4424 = vmatprep.subr.mxu0 %v4386
          %4425 = vmatpush1.msra.mxu0 %v4385
          %4426 = vmatprep.subr.mxu0 %v4388
          %4427 = vmatpush1.msra.mxu0 %v4387
          %4428 = vmatprep.subr.mxu0 %v4390
          %4429 = vmatpush1.msra.mxu0 %v4389
          %4430 = vmatprep.subr.mxu0 %v4392
          %4431 = vmatpush1.msra.mxu0 %v4391
          %4432 = vmatprep.subr.mxu0 %v4394
          %4433 = vmatpush1.msra.mxu0 %v4393
          %4434 = vmatprep.subr.mxu0 %v4396
          %4435 = vmatpush1.msra.mxu0 %v4395
          %4436 = vmatprep.subr.mxu0 %v4398
          %4437 = vmatpush1.msra.mxu0 %v4397
          %4438 = vmatprep.subr.mxu0 %v4400
          %4439 = vmatpush1.msra.mxu0 %v4399
          %4440 = vmatprep.subr.mxu0 0.0
          %4441 = vmatpush1.msra.mxu0 0.0
          %4442 = vmatprep.subr.mxu0 0.0
          %4443 = vmatpush1.msra.mxu0 0.0
          %4444 = vmatprep.subr.mxu0 0.0
          %4445 = vmatpush1.msra.mxu0 0.0
          %4446 = vmatprep.subr.mxu0 0.0
          %4447 = vmatpush1.msra.mxu0 0.0
          %4448 = vmatprep.subr.mxu0 0.0
          %4449 = vmatpush1.msra.mxu0 0.0
          %4450 = vmatprep.subr.mxu0 0.0
          %4451 = vmatpush1.msra.mxu0 0.0
          %4452 = vmatprep.subr.mxu0 0.0
          %4453 = vmatpush1.msra.mxu0 0.0
          %4454 = vmatprep.subr.mxu0 0.0
          %4455 = vmatpush1.msra.mxu0 0.0
          %4456 = vmatprep.subr.mxu0 0.0
          %4457 = vmatpush1.msra.mxu0 0.0
          %4458 = vmatprep.subr.mxu0 0.0
          %4459 = vmatpush1.msra.mxu0 0.0
          %4460 = vmatprep.subr.mxu0 0.0
          %4461 = vmatpush1.msra.mxu0 0.0
          %4462 = vmatprep.subr.mxu0 0.0
          %4463 = vmatpush1.msra.mxu0 0.0
          %4464 = vmatprep.subr.mxu0 0.0
          %4465 = vmatpush1.msra.mxu0 0.0
          %4466 = vmatprep.subr.mxu0 0.0
          %4467 = vmatpush1.msra.mxu0 0.0
          %4468 = vmatprep.subr.mxu0 0.0
          %4469 = vmatpush1.msra.mxu0 0.0
          %4470 = vmatprep.subr.mxu0 0.0
          %4471 = vmatpush1.msra.mxu0 0.0
          %4472 = vmatprep.mubr.f32.mxu0 0.0
          %4473 = vmatmul.mubr.f32.gmra.mrb[0].mxu0 %v4401
          %v4474 = vpop.f32.mrb[0].mxu0
          %v4475 = vadd.f32 %v4406, %v4474
          %v4476 = vpop.f32.mrb[0].mxu0
          %v4477 = vadd.f32 %v4406, %v4476
          %4478 = vdwg.mxu0
          %v4479 = vld [vmem:[%s311] sm:$0xff]
          %v4481 = vcombine.high %v4479, %v4479
          %v4483 = vadd.f32 %v4475, %v4479
          %v4484 = vadd.f32 %v4477, %v4481
          %v4487 = vcombine.low %v4483, %v4484
          %4489 = vst [vmem:[%s302] sm:$0xff] %v4487
        $region52: #{tpu_custom_call.1} parent=43 // pred_fallthru
          _
        %s4490 = sand.u32 %s189, 1
        %s4491 = scalar_lea.sflag [#allocation7], %s4490
        %s4492 = sand.u32 %s189, 1
        %s4493 = smul.addr %s4492, 8
        %s4494 = scalar_lea.vmem [#allocation6], %s4493
        // Predicated region
        $region53: #{tpu_custom_call.1} parent=43 // pred_check
          %p4495 = pneg %p199
        $region54: #{tpu_custom_call.1} parent=43 // pred_check_branch
          %4497 = sbr.rel (%p4495) target = $region56
        $region55: #{tpu_custom_call.1} parent=43 // pred_region
          %s4498 = smul.u32 2, %s26
          %s4500 = ssub.s32 128, 128
          %4501 = vsyncadd %s4491, %s4500
          %s4502 = smul.addr %s25, 2
          %s4503 = sadd.s32 %s4498, %s4502
          %s4504 = smul.addr %s4503, 64
          %s4505 = scalar_lea.hbm %s6, %s4504
          %s4507 = sshll.u32 %s4494, 4
          %s4508 = int_to_ptr.vmem [resolvable:$true] %s4507
          %4510 = dma.vmem_to_hbm [thread:$0]  %s4508, 128, %s4505, %s4491
        $region56: #{tpu_custom_call.1} parent=43 // pred_fallthru
          _
      $region44: #{tpu_custom_call.1} parent=5 // pred_fallthru
        _
      %p4511 = scmp.le.s32.totalorder 2, %s15
      // Predicated region
      $region57: #{tpu_custom_call.1} parent=5 // pred_check
        %p4512 = pneg %p4511
      $region58: #{tpu_custom_call.1} parent=5 // pred_check_branch
        %4514 = sbr.rel (%p4512) target = $region60
      $region59: #{tpu_custom_call.1} parent=5 // pred_region
        %s4515 = ssub.s32 %s15, 2
        // Predicated region
        $region61: #{tpu_custom_call.1} parent=59 // pred_check
          %p4516 = pneg %p205
        $region62: #{tpu_custom_call.1} parent=59 // pred_check_branch
          %4518 = sbr.rel (%p4516) target = $region64
        $region63: #{tpu_custom_call.1} parent=59 // pred_region
          %s4519 = sand.u32 %s190, 1
          %s4520 = scalar_lea.sflag [#allocation7], %s4519
          %s4521 = sand.u32 %s190, 1
          %s4522 = smul.addr %s4521, 8
          %s4523 = scalar_lea.vmem [#allocation6], %s4522
          %4524 = dma.done %s4520, 128
        $region64: #{tpu_custom_call.1} parent=59 // pred_fallthru
          _
      $region60: #{tpu_custom_call.1} parent=5 // pred_fallthru
        _
    $region6: #{tpu_custom_call.1} parent=1 // loop_footer
      %s19 = sadd.s32 1, %s15
    $region7: #{tpu_custom_call.1} parent=1 // loop_footer_branch
      %14 = sbr.rel target = $region3
    $region8: #{tpu_custom_call.1} parent=1 // loop_exit
      _
    %4525 = vsyncpa [#allocation7], 1
    %s4526 = scalar_lea.sflag [#allocation7], 1
    %4527 = vsyncpa %s4526, 1

</llo_original>
